<compile_context>
chip_gen: v7x
topology: tpu7x:2x2x1
jax: 0.10.0
libtpu: 0.0.40
codegen_flags: <defaults>
</compile_context>

<pallas_src>
from functools import partial

import jax
import jax.numpy as jnp
from jax.experimental import pallas as pl
from jax.experimental.pallas import tpu as pltpu

HIDDEN_SIZE = 50
NUM_LAYERS = 1        # kernel implements the single-layer case (num_layers=1)
OUTPUT_SIZE = 1
INPUT_SIZE = 1

_LANE = 128
# gate order on the fused lane axis: (i, f, o, g)  (PyTorch order is i, f, g, o)
# -> one sigmoid over the first 3*HP lanes, one tanh over the last HP lanes.
_GATE_ORDER = (0, 1, 3, 2)

# rows of the (8, 4*HP) constants slab
_ROW_ENC_WIH = 0
_ROW_ENC_B = 1
_ROW_DEC_B0 = 2      # decoder step-0 fused bias (x = 0)
_ROW_DEC_B_AUG = 3   # augmented decoder bias (fc folded in)
_ROW_FC_W = 4        # fc weight row in the first HP lanes
_ROW_FC_B = 5        # fc bias scalar at lane 0

# W_hh slab indices
_W_ENC = 0
_W_DEC0 = 1          # original decoder W_hh (step 0 only)
_W_DEC_AUG = 2       # augmented decoder W_hh (steps 1..T_dec-1)


def _round_up(x, m):
    return ((x + m - 1) // m) * m


# --------------------------------------------------------------------------------------
# Pallas kernel
# --------------------------------------------------------------------------------------
def seq2seq_kernel(src_ref,      # (B, T_src, 1)   raw source
                   whh_ref,      # (3, HP, 4*HP)   [enc_whh, dec_whh, dec_whh_aug]
                   consts_ref,   # (8, 4*HP)       small constants slab
                   out_ref):     # (B, T_dec)      lane-dense output
    B, T_dec = out_ref.shape
    HP = whh_ref.shape[1]
    G3 = 3 * HP

    # small loop-invariant constants (one 4-vreg load, sliced in registers)
    consts = consts_ref[...]
    enc_wih = consts[_ROW_ENC_WIH:_ROW_ENC_WIH + 1, :]       # (1, 4*HP)
    enc_b = consts[_ROW_ENC_B:_ROW_ENC_B + 1, :]             # (1, 4*HP)
    dec_b0 = consts[_ROW_DEC_B0:_ROW_DEC_B0 + 1, :]          # (1, 4*HP)
    dec_b_aug = consts[_ROW_DEC_B_AUG:_ROW_DEC_B_AUG + 1, :] # (1, 4*HP)
    fc_w = consts[_ROW_FC_W:_ROW_FC_W + 1, :HP]              # (1, HP)
    fc_b = consts[_ROW_FC_B:_ROW_FC_B + 1, 0:1]              # (1, 1)

    def cell(pre, h, c, widx):
        # pre: input contribution + fused bias;  h, c: (B, HP)
        gates = pre + jnp.dot(h, whh_ref[widx], preferred_element_type=jnp.float32)
        sig = jax.nn.sigmoid(gates[:, :G3])       # fused i|f|o sigmoid (one wide EUP pass)
        g = jnp.tanh(gates[:, G3:])               # g gate
        i = sig[:, 0:HP]
        f = sig[:, HP:2 * HP]
        o = sig[:, 2 * HP:G3]
        c_new = f * c + i * g
        h_new = o * jnp.tanh(c_new)
        return h_new, c_new

    # zero-initialized hidden/cell state (PyTorch default when no (h0, c0) is passed)
    h = jnp.zeros((B, HP), jnp.float32)
    c = jnp.zeros((B, HP), jnp.float32)

    # ---------------- encoder (static unroll, state stays in vregs) ----------------
    src = src_ref[...]                            # (B, T_src, 1), tiny
    T_src = src.shape[1]
    for t in range(T_src):
        # per-step VPU broadcast (input_size == 1 -> never touches the MXU)
        pre = src[:, t, :] * enc_wih + enc_b      # (B,1)*(1,4HP) outer product
        h, c = cell(pre, h, c, _W_ENC)

    # ---------------- decoder (autoregressive via augmented recurrence) ------------
    # step 0: decoder_input = zeros -> original W_hh / bias
    h, c = cell(dec_b0, h, c, _W_DEC0)
    hs = [h]
    # steps 1..T_dec-1: fc head + feedback folded into W_hh' / b'
    for _ in range(1, T_dec):
        h, c = cell(dec_b_aug, h, c, _W_DEC_AUG)
        hs.append(h)

    # batched fc head, off the serial chain: y_t = <h_t, fc_w> + fc_b
    h_stack = jnp.stack(hs, axis=1)                               # (B, T_dec, HP)
    y = jnp.sum(h_stack * fc_w[:, None, :], axis=-1) + fc_b       # (B, T_dec)
    out_ref[...] = y                                              # single lane-dense store


# --------------------------------------------------------------------------------------
# Parameter packing (done ONCE, reused across forward calls)
# --------------------------------------------------------------------------------------
def _pack_whh(w_hh, hp):
    """(4H, H) PyTorch layout -> (HP, 4*HP) fused [in, gate-block*HP + out], zero padded."""
    h = w_hh.shape[1]
    out = jnp.zeros((hp, 4 * hp), jnp.float32)
    for k, g in enumerate(_GATE_ORDER):
        blk = jnp.transpose(w_hh[g * h:(g + 1) * h, :], (1, 0)).astype(jnp.float32)  # (H, H)
        out = out.at[:h, k * hp:k * hp + h].set(blk)
    return out


def _pack_wih_row(w_ih, hp):
    """(4H, 1) -> (1, 4*HP) row (input_size == 1)."""
    h = w_ih.shape[0] // 4
    out = jnp.zeros((1, 4 * hp), jnp.float32)
    for k, g in enumerate(_GATE_ORDER):
        out = out.at[0, k * hp:k * hp + h].set(w_ih[g * h:(g + 1) * h, 0].astype(jnp.float32))
    return out


def _pack_bias(b_ih, b_hh, hp):
    """(4H,), (4H,) -> (1, 4*HP) fused bias."""
    h = b_ih.shape[0] // 4
    b = (b_ih + b_hh).astype(jnp.float32)
    out = jnp.zeros((1, 4 * hp), jnp.float32)
    for k, g in enumerate(_GATE_ORDER):
        out = out.at[0, k * hp:k * hp + h].set(b[g * h:(g + 1) * h])
    return out


def pack_params(p):
    """Pack PyTorch-layout parameters into the kernel's two constant buffers. Call once."""
    H = p["enc_w_hh"].shape[1]
    HP = _round_up(H, _LANE)
    G = 4 * HP

    enc_whh = _pack_whh(p["enc_w_hh"], HP)
    dec_whh = _pack_whh(p["dec_w_hh"], HP)
    enc_wih = _pack_wih_row(p["enc_w_ih"], HP)
    dec_wih = _pack_wih_row(p["dec_w_ih"], HP)
    enc_b = _pack_bias(p["enc_b_ih"], p["enc_b_hh"], HP)
    dec_b = _pack_bias(p["dec_b_ih"], p["dec_b_hh"], HP)

    fc_w_row = jnp.zeros((1, HP), jnp.float32).at[0, :H].set(p["fc_w"][0].astype(jnp.float32))
    fc_b = jnp.float32(p["fc_b"][0])

    # fold fc head + autoregressive feedback into an augmented decoder recurrence:
    #   gates_t = h_{t-1} @ (W_hh + fc_w^T (x) dec_wih) + (dec_b + fc_b * dec_wih)
    dec_whh_aug = dec_whh + fc_w_row.T * dec_wih      # (HP,1)*(1,4HP) rank-1 update
    dec_b_aug = dec_b + fc_b * dec_wih

    whh_all = jnp.stack([enc_whh, dec_whh, dec_whh_aug], axis=0)   # (3, HP, 4*HP)

    consts = jnp.zeros((8, G), jnp.float32)
    consts = consts.at[_ROW_ENC_WIH, :].set(enc_wih[0])
    consts = consts.at[_ROW_ENC_B, :].set(enc_b[0])
    consts = consts.at[_ROW_DEC_B0, :].set(dec_b[0])
    consts = consts.at[_ROW_DEC_B_AUG, :].set(dec_b_aug[0])
    consts = consts.at[_ROW_FC_W, :HP].set(fc_w_row[0])
    consts = consts.at[_ROW_FC_B, 0].set(fc_b)

    return {"whh_all": whh_all, "consts": consts}


# --------------------------------------------------------------------------------------
# Forward wrapper: single pallas_call, 3 inputs, no per-call repacking
# --------------------------------------------------------------------------------------
@partial(jax.jit, static_argnums=(1,))
def seq2seq_forward(source, target_len, packed):
    """source: (B, T_src, 1) float32 (PyTorch batch-first). Returns (B, target_len, 1)."""
    B = source.shape[0]
    out2d = pl.pallas_call(
        seq2seq_kernel,
        out_shape=jax.ShapeDtypeStruct((B, target_len), jnp.float32),
        in_specs=[pl.BlockSpec(memory_space=pltpu.MemorySpace.VMEM)] * 3,
        out_specs=pl.BlockSpec(memory_space=pltpu.MemorySpace.VMEM),
    )(source.astype(jnp.float32), packed["whh_all"], packed["consts"])
    return out2d[:, :, None]                                       # (B, target_len, 1)


# --------------------------------------------------------------------------------------
# Pure-JAX reference (PyTorch LSTM semantics) for correctness checking
# --------------------------------------------------------------------------------------
def _lstm_cell_ref(x, h, c, w_ih, w_hh, b_ih, b_hh):
    gates = x @ w_ih.T + h @ w_hh.T + b_ih + b_hh
    i, f, g, o = jnp.split(gates, 4, axis=-1)
    i, f, g, o = jax.nn.sigmoid(i), jax.nn.sigmoid(f), jnp.tanh(g), jax.nn.sigmoid(o)
    c = f * c + i * g
    h = o * jnp.tanh(c)
    return h, c


def seq2seq_ref(source, target_len, p):
    B, T_src, _ = source.shape
    H = p["enc_w_hh"].shape[1]
    h = jnp.zeros((B, H), jnp.float32)
    c = jnp.zeros((B, H), jnp.float32)
    for t in range(T_src):
        h, c = _lstm_cell_ref(source[:, t, :], h, c,
                              p["enc_w_ih"], p["enc_w_hh"], p["enc_b_ih"], p["enc_b_hh"])
    x = jnp.zeros((B, OUTPUT_SIZE), jnp.float32)
    outs = []
    for _ in range(target_len):
        h, c = _lstm_cell_ref(x, h, c,
                              p["dec_w_ih"], p["dec_w_hh"], p["dec_b_ih"], p["dec_b_hh"])
        x = h @ p["fc_w"].T + p["fc_b"]
        outs.append(x[:, None, :])
    return jnp.concatenate(outs, axis=1)


# --------------------------------------------------------------------------------------
def init_params(key, hidden_size):
    """Deterministic init mimicking PyTorch's uniform(-1/sqrt(H), 1/sqrt(H)) scheme."""
    H = hidden_size
    bound = 1.0 / jnp.sqrt(jnp.float32(H))
    names_shapes = [
        ("enc_w_ih", (4 * H, INPUT_SIZE)), ("enc_w_hh", (4 * H, H)),
        ("enc_b_ih", (4 * H,)), ("enc_b_hh", (4 * H,)),
        ("dec_w_ih", (4 * H, OUTPUT_SIZE)), ("dec_w_hh", (4 * H, H)),
        ("dec_b_ih", (4 * H,)), ("dec_b_hh", (4 * H,)),
        ("fc_w", (OUTPUT_SIZE, H)), ("fc_b", (OUTPUT_SIZE,)),
    ]
    keys = jax.random.split(key, len(names_shapes))
    return {name: jax.random.uniform(k, shape, jnp.float32, -bound, bound)
            for (name, shape), k in zip(names_shapes, keys)}


if __name__ == "__main__":
    key = jax.random.PRNGKey(0)
    pkey, xkey = jax.random.split(key)

    params = init_params(pkey, HIDDEN_SIZE)

    B, T_SRC, TARGET_LEN = 2, 8, 6
    source = jax.random.normal(xkey, (B, T_SRC, INPUT_SIZE), jnp.float32)

    packed = pack_params(params)                     # pack ONCE; reused by every forward call

    out = seq2seq_forward(source, TARGET_LEN, packed)
    out = jax.block_until_ready(out)

    ref = seq2seq_ref(source, TARGET_LEN, params)
    assert out.shape == (B, TARGET_LEN, OUTPUT_SIZE)
    max_diff = jnp.max(jnp.abs(out - ref))
    assert max_diff < 5e-4, f"max diff {max_diff}"

    print("KERNEL_OK")
</pallas_src>

<mosaic_0001>
module attributes {stable_mosaic.version = 11 : i64} {
  func.func @seq2seq_kernel(%arg0: memref<2x8x1xf32, #tpu.memory_space<vmem>>, %arg1: memref<3x128x512xf32, #tpu.memory_space<vmem>>, %arg2: memref<8x512xf32, #tpu.memory_space<vmem>>, %arg3: memref<2x6xf32, #tpu.memory_space<vmem>>) attributes {dimension_semantics = [], scalar_prefetch = 0 : i64, scratch_operands = 0 : i64, tpu.core_type = #tpu.core_type<tc>} {
    %c0 = arith.constant 0 : index
    %c0_0 = arith.constant 0 : index
    %0 = vector.load %arg2[%c0, %c0_0] : memref<8x512xf32, #tpu.memory_space<vmem>>, vector<8x512xf32>
    %1 = vector.extract_strided_slice %0 {offsets = [0, 0], sizes = [1, 512], strides = [1, 1]} : vector<8x512xf32> to vector<1x512xf32>
    %2 = vector.extract_strided_slice %0 {offsets = [1, 0], sizes = [1, 512], strides = [1, 1]} : vector<8x512xf32> to vector<1x512xf32>
    %3 = vector.extract_strided_slice %0 {offsets = [2, 0], sizes = [1, 512], strides = [1, 1]} : vector<8x512xf32> to vector<1x512xf32>
    %4 = vector.extract_strided_slice %0 {offsets = [3, 0], sizes = [1, 512], strides = [1, 1]} : vector<8x512xf32> to vector<1x512xf32>
    %5 = vector.extract_strided_slice %0 {offsets = [4, 0], sizes = [1, 128], strides = [1, 1]} : vector<8x512xf32> to vector<1x128xf32>
    %6 = vector.extract_strided_slice %0 {offsets = [5, 0], sizes = [1, 1], strides = [1, 1]} : vector<8x512xf32> to vector<1x1xf32>
    %cst = arith.constant 0.000000e+00 : f32
    %7 = vector.broadcast %cst : f32 to vector<2x128xf32>
    %cst_1 = arith.constant 0.000000e+00 : f32
    %8 = vector.broadcast %cst_1 : f32 to vector<2x128xf32>
    %c0_2 = arith.constant 0 : index
    %c0_3 = arith.constant 0 : index
    %c0_4 = arith.constant 0 : index
    %9 = vector.load %arg0[%c0_2, %c0_3, %c0_4] : memref<2x8x1xf32, #tpu.memory_space<vmem>>, vector<2x8x1xf32>
    %10 = vector.extract_strided_slice %9 {offsets = [0, 0, 0], sizes = [2, 1, 1], strides = [1, 1, 1]} : vector<2x8x1xf32> to vector<2x1x1xf32>
    %11 = vector.shape_cast %10 : vector<2x1x1xf32> to vector<2x1xf32>
    %12 = vector.broadcast %11 : vector<2x1xf32> to vector<2x512xf32>
    %13 = vector.broadcast %1 : vector<1x512xf32> to vector<2x512xf32>
    %14 = arith.mulf %12, %13 : vector<2x512xf32>
    %15 = vector.broadcast %2 : vector<1x512xf32> to vector<2x512xf32>
    %16 = arith.addf %14, %15 : vector<2x512xf32>
    %c0_5 = arith.constant 0 : index
    %c0_6 = arith.constant 0 : index
    %c0_7 = arith.constant 0 : index
    %17 = vector.load %arg1[%c0_5, %c0_6, %c0_7] : memref<3x128x512xf32, #tpu.memory_space<vmem>>, vector<1x128x512xf32>
    %18 = vector.shape_cast %17 : vector<1x128x512xf32> to vector<128x512xf32>
    %cst_8 = arith.constant dense<0.000000e+00> : vector<2x512xf32>
    %19 = tpu.matmul %7, %18, %cst_8 {dimension_numbers = #tpu.dot_dimension_numbers<[1], [0], [0], [1], [0, 0, 1, 1], [], []>} : vector<2x128xf32>, vector<128x512xf32>, vector<2x512xf32> -> vector<2x512xf32>
    %20 = arith.addf %16, %19 : vector<2x512xf32>
    %21 = vector.extract_strided_slice %20 {offsets = [0, 0], sizes = [2, 384], strides = [1, 1]} : vector<2x512xf32> to vector<2x384xf32>
    %22 = arith.negf %21 : vector<2x384xf32>
    %23 = math.exp %22 : vector<2x384xf32>
    %cst_9 = arith.constant 1.000000e+00 : f32
    %24 = vector.broadcast %cst_9 : f32 to vector<2x384xf32>
    %25 = arith.addf %24, %23 : vector<2x384xf32>
    %26 = arith.divf %24, %25 : vector<2x384xf32>
    %27 = vector.extract_strided_slice %20 {offsets = [0, 384], sizes = [2, 128], strides = [1, 1]} : vector<2x512xf32> to vector<2x128xf32>
    %28 = math.tanh %27 : vector<2x128xf32>
    %29 = vector.extract_strided_slice %26 {offsets = [0, 0], sizes = [2, 128], strides = [1, 1]} : vector<2x384xf32> to vector<2x128xf32>
    %30 = vector.extract_strided_slice %26 {offsets = [0, 128], sizes = [2, 128], strides = [1, 1]} : vector<2x384xf32> to vector<2x128xf32>
    %31 = vector.extract_strided_slice %26 {offsets = [0, 256], sizes = [2, 128], strides = [1, 1]} : vector<2x384xf32> to vector<2x128xf32>
    %32 = arith.mulf %30, %8 : vector<2x128xf32>
    %33 = arith.mulf %29, %28 : vector<2x128xf32>
    %34 = arith.addf %32, %33 : vector<2x128xf32>
    %35 = math.tanh %34 : vector<2x128xf32>
    %36 = arith.mulf %31, %35 : vector<2x128xf32>
    %37 = vector.extract_strided_slice %9 {offsets = [0, 1, 0], sizes = [2, 1, 1], strides = [1, 1, 1]} : vector<2x8x1xf32> to vector<2x1x1xf32>
    %38 = vector.shape_cast %37 : vector<2x1x1xf32> to vector<2x1xf32>
    %39 = vector.broadcast %38 : vector<2x1xf32> to vector<2x512xf32>
    %40 = vector.broadcast %1 : vector<1x512xf32> to vector<2x512xf32>
    %41 = arith.mulf %39, %40 : vector<2x512xf32>
    %42 = vector.broadcast %2 : vector<1x512xf32> to vector<2x512xf32>
    %43 = arith.addf %41, %42 : vector<2x512xf32>
    %c0_10 = arith.constant 0 : index
    %c0_11 = arith.constant 0 : index
    %c0_12 = arith.constant 0 : index
    %44 = vector.load %arg1[%c0_10, %c0_11, %c0_12] : memref<3x128x512xf32, #tpu.memory_space<vmem>>, vector<1x128x512xf32>
    %45 = vector.shape_cast %44 : vector<1x128x512xf32> to vector<128x512xf32>
    %cst_13 = arith.constant dense<0.000000e+00> : vector<2x512xf32>
    %46 = tpu.matmul %36, %45, %cst_13 {dimension_numbers = #tpu.dot_dimension_numbers<[1], [0], [0], [1], [0, 0, 1, 1], [], []>} : vector<2x128xf32>, vector<128x512xf32>, vector<2x512xf32> -> vector<2x512xf32>
    %47 = arith.addf %43, %46 : vector<2x512xf32>
    %48 = vector.extract_strided_slice %47 {offsets = [0, 0], sizes = [2, 384], strides = [1, 1]} : vector<2x512xf32> to vector<2x384xf32>
    %49 = arith.negf %48 : vector<2x384xf32>
    %50 = math.exp %49 : vector<2x384xf32>
    %cst_14 = arith.constant 1.000000e+00 : f32
    %51 = vector.broadcast %cst_14 : f32 to vector<2x384xf32>
    %52 = arith.addf %51, %50 : vector<2x384xf32>
    %53 = arith.divf %51, %52 : vector<2x384xf32>
    %54 = vector.extract_strided_slice %47 {offsets = [0, 384], sizes = [2, 128], strides = [1, 1]} : vector<2x512xf32> to vector<2x128xf32>
    %55 = math.tanh %54 : vector<2x128xf32>
    %56 = vector.extract_strided_slice %53 {offsets = [0, 0], sizes = [2, 128], strides = [1, 1]} : vector<2x384xf32> to vector<2x128xf32>
    %57 = vector.extract_strided_slice %53 {offsets = [0, 128], sizes = [2, 128], strides = [1, 1]} : vector<2x384xf32> to vector<2x128xf32>
    %58 = vector.extract_strided_slice %53 {offsets = [0, 256], sizes = [2, 128], strides = [1, 1]} : vector<2x384xf32> to vector<2x128xf32>
    %59 = arith.mulf %57, %34 : vector<2x128xf32>
    %60 = arith.mulf %56, %55 : vector<2x128xf32>
    %61 = arith.addf %59, %60 : vector<2x128xf32>
    %62 = math.tanh %61 : vector<2x128xf32>
    %63 = arith.mulf %58, %62 : vector<2x128xf32>
    %64 = vector.extract_strided_slice %9 {offsets = [0, 2, 0], sizes = [2, 1, 1], strides = [1, 1, 1]} : vector<2x8x1xf32> to vector<2x1x1xf32>
    %65 = vector.shape_cast %64 : vector<2x1x1xf32> to vector<2x1xf32>
    %66 = vector.broadcast %65 : vector<2x1xf32> to vector<2x512xf32>
    %67 = vector.broadcast %1 : vector<1x512xf32> to vector<2x512xf32>
    %68 = arith.mulf %66, %67 : vector<2x512xf32>
    %69 = vector.broadcast %2 : vector<1x512xf32> to vector<2x512xf32>
    %70 = arith.addf %68, %69 : vector<2x512xf32>
    %c0_15 = arith.constant 0 : index
    %c0_16 = arith.constant 0 : index
    %c0_17 = arith.constant 0 : index
    %71 = vector.load %arg1[%c0_15, %c0_16, %c0_17] : memref<3x128x512xf32, #tpu.memory_space<vmem>>, vector<1x128x512xf32>
    %72 = vector.shape_cast %71 : vector<1x128x512xf32> to vector<128x512xf32>
    %cst_18 = arith.constant dense<0.000000e+00> : vector<2x512xf32>
    %73 = tpu.matmul %63, %72, %cst_18 {dimension_numbers = #tpu.dot_dimension_numbers<[1], [0], [0], [1], [0, 0, 1, 1], [], []>} : vector<2x128xf32>, vector<128x512xf32>, vector<2x512xf32> -> vector<2x512xf32>
    %74 = arith.addf %70, %73 : vector<2x512xf32>
    %75 = vector.extract_strided_slice %74 {offsets = [0, 0], sizes = [2, 384], strides = [1, 1]} : vector<2x512xf32> to vector<2x384xf32>
    %76 = arith.negf %75 : vector<2x384xf32>
    %77 = math.exp %76 : vector<2x384xf32>
    %cst_19 = arith.constant 1.000000e+00 : f32
    %78 = vector.broadcast %cst_19 : f32 to vector<2x384xf32>
    %79 = arith.addf %78, %77 : vector<2x384xf32>
    %80 = arith.divf %78, %79 : vector<2x384xf32>
    %81 = vector.extract_strided_slice %74 {offsets = [0, 384], sizes = [2, 128], strides = [1, 1]} : vector<2x512xf32> to vector<2x128xf32>
    %82 = math.tanh %81 : vector<2x128xf32>
    %83 = vector.extract_strided_slice %80 {offsets = [0, 0], sizes = [2, 128], strides = [1, 1]} : vector<2x384xf32> to vector<2x128xf32>
    %84 = vector.extract_strided_slice %80 {offsets = [0, 128], sizes = [2, 128], strides = [1, 1]} : vector<2x384xf32> to vector<2x128xf32>
    %85 = vector.extract_strided_slice %80 {offsets = [0, 256], sizes = [2, 128], strides = [1, 1]} : vector<2x384xf32> to vector<2x128xf32>
    %86 = arith.mulf %84, %61 : vector<2x128xf32>
    %87 = arith.mulf %83, %82 : vector<2x128xf32>
    %88 = arith.addf %86, %87 : vector<2x128xf32>
    %89 = math.tanh %88 : vector<2x128xf32>
    %90 = arith.mulf %85, %89 : vector<2x128xf32>
    %91 = vector.extract_strided_slice %9 {offsets = [0, 3, 0], sizes = [2, 1, 1], strides = [1, 1, 1]} : vector<2x8x1xf32> to vector<2x1x1xf32>
    %92 = vector.shape_cast %91 : vector<2x1x1xf32> to vector<2x1xf32>
    %93 = vector.broadcast %92 : vector<2x1xf32> to vector<2x512xf32>
    %94 = vector.broadcast %1 : vector<1x512xf32> to vector<2x512xf32>
    %95 = arith.mulf %93, %94 : vector<2x512xf32>
    %96 = vector.broadcast %2 : vector<1x512xf32> to vector<2x512xf32>
    %97 = arith.addf %95, %96 : vector<2x512xf32>
    %c0_20 = arith.constant 0 : index
    %c0_21 = arith.constant 0 : index
    %c0_22 = arith.constant 0 : index
    %98 = vector.load %arg1[%c0_20, %c0_21, %c0_22] : memref<3x128x512xf32, #tpu.memory_space<vmem>>, vector<1x128x512xf32>
    %99 = vector.shape_cast %98 : vector<1x128x512xf32> to vector<128x512xf32>
    %cst_23 = arith.constant dense<0.000000e+00> : vector<2x512xf32>
    %100 = tpu.matmul %90, %99, %cst_23 {dimension_numbers = #tpu.dot_dimension_numbers<[1], [0], [0], [1], [0, 0, 1, 1], [], []>} : vector<2x128xf32>, vector<128x512xf32>, vector<2x512xf32> -> vector<2x512xf32>
    %101 = arith.addf %97, %100 : vector<2x512xf32>
    %102 = vector.extract_strided_slice %101 {offsets = [0, 0], sizes = [2, 384], strides = [1, 1]} : vector<2x512xf32> to vector<2x384xf32>
    %103 = arith.negf %102 : vector<2x384xf32>
    %104 = math.exp %103 : vector<2x384xf32>
    %cst_24 = arith.constant 1.000000e+00 : f32
    %105 = vector.broadcast %cst_24 : f32 to vector<2x384xf32>
    %106 = arith.addf %105, %104 : vector<2x384xf32>
    %107 = arith.divf %105, %106 : vector<2x384xf32>
    %108 = vector.extract_strided_slice %101 {offsets = [0, 384], sizes = [2, 128], strides = [1, 1]} : vector<2x512xf32> to vector<2x128xf32>
    %109 = math.tanh %108 : vector<2x128xf32>
    %110 = vector.extract_strided_slice %107 {offsets = [0, 0], sizes = [2, 128], strides = [1, 1]} : vector<2x384xf32> to vector<2x128xf32>
    %111 = vector.extract_strided_slice %107 {offsets = [0, 128], sizes = [2, 128], strides = [1, 1]} : vector<2x384xf32> to vector<2x128xf32>
    %112 = vector.extract_strided_slice %107 {offsets = [0, 256], sizes = [2, 128], strides = [1, 1]} : vector<2x384xf32> to vector<2x128xf32>
    %113 = arith.mulf %111, %88 : vector<2x128xf32>
    %114 = arith.mulf %110, %109 : vector<2x128xf32>
    %115 = arith.addf %113, %114 : vector<2x128xf32>
    %116 = math.tanh %115 : vector<2x128xf32>
    %117 = arith.mulf %112, %116 : vector<2x128xf32>
    %118 = vector.extract_strided_slice %9 {offsets = [0, 4, 0], sizes = [2, 1, 1], strides = [1, 1, 1]} : vector<2x8x1xf32> to vector<2x1x1xf32>
    %119 = vector.shape_cast %118 : vector<2x1x1xf32> to vector<2x1xf32>
    %120 = vector.broadcast %119 : vector<2x1xf32> to vector<2x512xf32>
    %121 = vector.broadcast %1 : vector<1x512xf32> to vector<2x512xf32>
    %122 = arith.mulf %120, %121 : vector<2x512xf32>
    %123 = vector.broadcast %2 : vector<1x512xf32> to vector<2x512xf32>
    %124 = arith.addf %122, %123 : vector<2x512xf32>
    %c0_25 = arith.constant 0 : index
    %c0_26 = arith.constant 0 : index
    %c0_27 = arith.constant 0 : index
    %125 = vector.load %arg1[%c0_25, %c0_26, %c0_27] : memref<3x128x512xf32, #tpu.memory_space<vmem>>, vector<1x128x512xf32>
    %126 = vector.shape_cast %125 : vector<1x128x512xf32> to vector<128x512xf32>
    %cst_28 = arith.constant dense<0.000000e+00> : vector<2x512xf32>
    %127 = tpu.matmul %117, %126, %cst_28 {dimension_numbers = #tpu.dot_dimension_numbers<[1], [0], [0], [1], [0, 0, 1, 1], [], []>} : vector<2x128xf32>, vector<128x512xf32>, vector<2x512xf32> -> vector<2x512xf32>
    %128 = arith.addf %124, %127 : vector<2x512xf32>
    %129 = vector.extract_strided_slice %128 {offsets = [0, 0], sizes = [2, 384], strides = [1, 1]} : vector<2x512xf32> to vector<2x384xf32>
    %130 = arith.negf %129 : vector<2x384xf32>
    %131 = math.exp %130 : vector<2x384xf32>
    %cst_29 = arith.constant 1.000000e+00 : f32
    %132 = vector.broadcast %cst_29 : f32 to vector<2x384xf32>
    %133 = arith.addf %132, %131 : vector<2x384xf32>
    %134 = arith.divf %132, %133 : vector<2x384xf32>
    %135 = vector.extract_strided_slice %128 {offsets = [0, 384], sizes = [2, 128], strides = [1, 1]} : vector<2x512xf32> to vector<2x128xf32>
    %136 = math.tanh %135 : vector<2x128xf32>
    %137 = vector.extract_strided_slice %134 {offsets = [0, 0], sizes = [2, 128], strides = [1, 1]} : vector<2x384xf32> to vector<2x128xf32>
    %138 = vector.extract_strided_slice %134 {offsets = [0, 128], sizes = [2, 128], strides = [1, 1]} : vector<2x384xf32> to vector<2x128xf32>
    %139 = vector.extract_strided_slice %134 {offsets = [0, 256], sizes = [2, 128], strides = [1, 1]} : vector<2x384xf32> to vector<2x128xf32>
    %140 = arith.mulf %138, %115 : vector<2x128xf32>
    %141 = arith.mulf %137, %136 : vector<2x128xf32>
    %142 = arith.addf %140, %141 : vector<2x128xf32>
    %143 = math.tanh %142 : vector<2x128xf32>
    %144 = arith.mulf %139, %143 : vector<2x128xf32>
    %145 = vector.extract_strided_slice %9 {offsets = [0, 5, 0], sizes = [2, 1, 1], strides = [1, 1, 1]} : vector<2x8x1xf32> to vector<2x1x1xf32>
    %146 = vector.shape_cast %145 : vector<2x1x1xf32> to vector<2x1xf32>
    %147 = vector.broadcast %146 : vector<2x1xf32> to vector<2x512xf32>
    %148 = vector.broadcast %1 : vector<1x512xf32> to vector<2x512xf32>
    %149 = arith.mulf %147, %148 : vector<2x512xf32>
    %150 = vector.broadcast %2 : vector<1x512xf32> to vector<2x512xf32>
    %151 = arith.addf %149, %150 : vector<2x512xf32>
    %c0_30 = arith.constant 0 : index
    %c0_31 = arith.constant 0 : index
    %c0_32 = arith.constant 0 : index
    %152 = vector.load %arg1[%c0_30, %c0_31, %c0_32] : memref<3x128x512xf32, #tpu.memory_space<vmem>>, vector<1x128x512xf32>
    %153 = vector.shape_cast %152 : vector<1x128x512xf32> to vector<128x512xf32>
    %cst_33 = arith.constant dense<0.000000e+00> : vector<2x512xf32>
    %154 = tpu.matmul %144, %153, %cst_33 {dimension_numbers = #tpu.dot_dimension_numbers<[1], [0], [0], [1], [0, 0, 1, 1], [], []>} : vector<2x128xf32>, vector<128x512xf32>, vector<2x512xf32> -> vector<2x512xf32>
    %155 = arith.addf %151, %154 : vector<2x512xf32>
    %156 = vector.extract_strided_slice %155 {offsets = [0, 0], sizes = [2, 384], strides = [1, 1]} : vector<2x512xf32> to vector<2x384xf32>
    %157 = arith.negf %156 : vector<2x384xf32>
    %158 = math.exp %157 : vector<2x384xf32>
    %cst_34 = arith.constant 1.000000e+00 : f32
    %159 = vector.broadcast %cst_34 : f32 to vector<2x384xf32>
    %160 = arith.addf %159, %158 : vector<2x384xf32>
    %161 = arith.divf %159, %160 : vector<2x384xf32>
    %162 = vector.extract_strided_slice %155 {offsets = [0, 384], sizes = [2, 128], strides = [1, 1]} : vector<2x512xf32> to vector<2x128xf32>
    %163 = math.tanh %162 : vector<2x128xf32>
    %164 = vector.extract_strided_slice %161 {offsets = [0, 0], sizes = [2, 128], strides = [1, 1]} : vector<2x384xf32> to vector<2x128xf32>
    %165 = vector.extract_strided_slice %161 {offsets = [0, 128], sizes = [2, 128], strides = [1, 1]} : vector<2x384xf32> to vector<2x128xf32>
    %166 = vector.extract_strided_slice %161 {offsets = [0, 256], sizes = [2, 128], strides = [1, 1]} : vector<2x384xf32> to vector<2x128xf32>
    %167 = arith.mulf %165, %142 : vector<2x128xf32>
    %168 = arith.mulf %164, %163 : vector<2x128xf32>
    %169 = arith.addf %167, %168 : vector<2x128xf32>
    %170 = math.tanh %169 : vector<2x128xf32>
    %171 = arith.mulf %166, %170 : vector<2x128xf32>
    %172 = vector.extract_strided_slice %9 {offsets = [0, 6, 0], sizes = [2, 1, 1], strides = [1, 1, 1]} : vector<2x8x1xf32> to vector<2x1x1xf32>
    %173 = vector.shape_cast %172 : vector<2x1x1xf32> to vector<2x1xf32>
    %174 = vector.broadcast %173 : vector<2x1xf32> to vector<2x512xf32>
    %175 = vector.broadcast %1 : vector<1x512xf32> to vector<2x512xf32>
    %176 = arith.mulf %174, %175 : vector<2x512xf32>
    %177 = vector.broadcast %2 : vector<1x512xf32> to vector<2x512xf32>
    %178 = arith.addf %176, %177 : vector<2x512xf32>
    %c0_35 = arith.constant 0 : index
    %c0_36 = arith.constant 0 : index
    %c0_37 = arith.constant 0 : index
    %179 = vector.load %arg1[%c0_35, %c0_36, %c0_37] : memref<3x128x512xf32, #tpu.memory_space<vmem>>, vector<1x128x512xf32>
    %180 = vector.shape_cast %179 : vector<1x128x512xf32> to vector<128x512xf32>
    %cst_38 = arith.constant dense<0.000000e+00> : vector<2x512xf32>
    %181 = tpu.matmul %171, %180, %cst_38 {dimension_numbers = #tpu.dot_dimension_numbers<[1], [0], [0], [1], [0, 0, 1, 1], [], []>} : vector<2x128xf32>, vector<128x512xf32>, vector<2x512xf32> -> vector<2x512xf32>
    %182 = arith.addf %178, %181 : vector<2x512xf32>
    %183 = vector.extract_strided_slice %182 {offsets = [0, 0], sizes = [2, 384], strides = [1, 1]} : vector<2x512xf32> to vector<2x384xf32>
    %184 = arith.negf %183 : vector<2x384xf32>
    %185 = math.exp %184 : vector<2x384xf32>
    %cst_39 = arith.constant 1.000000e+00 : f32
    %186 = vector.broadcast %cst_39 : f32 to vector<2x384xf32>
    %187 = arith.addf %186, %185 : vector<2x384xf32>
    %188 = arith.divf %186, %187 : vector<2x384xf32>
    %189 = vector.extract_strided_slice %182 {offsets = [0, 384], sizes = [2, 128], strides = [1, 1]} : vector<2x512xf32> to vector<2x128xf32>
    %190 = math.tanh %189 : vector<2x128xf32>
    %191 = vector.extract_strided_slice %188 {offsets = [0, 0], sizes = [2, 128], strides = [1, 1]} : vector<2x384xf32> to vector<2x128xf32>
    %192 = vector.extract_strided_slice %188 {offsets = [0, 128], sizes = [2, 128], strides = [1, 1]} : vector<2x384xf32> to vector<2x128xf32>
    %193 = vector.extract_strided_slice %188 {offsets = [0, 256], sizes = [2, 128], strides = [1, 1]} : vector<2x384xf32> to vector<2x128xf32>
    %194 = arith.mulf %192, %169 : vector<2x128xf32>
    %195 = arith.mulf %191, %190 : vector<2x128xf32>
    %196 = arith.addf %194, %195 : vector<2x128xf32>
    %197 = math.tanh %196 : vector<2x128xf32>
    %198 = arith.mulf %193, %197 : vector<2x128xf32>
    %199 = vector.extract_strided_slice %9 {offsets = [0, 7, 0], sizes = [2, 1, 1], strides = [1, 1, 1]} : vector<2x8x1xf32> to vector<2x1x1xf32>
    %200 = vector.shape_cast %199 : vector<2x1x1xf32> to vector<2x1xf32>
    %201 = vector.broadcast %200 : vector<2x1xf32> to vector<2x512xf32>
    %202 = vector.broadcast %1 : vector<1x512xf32> to vector<2x512xf32>
    %203 = arith.mulf %201, %202 : vector<2x512xf32>
    %204 = vector.broadcast %2 : vector<1x512xf32> to vector<2x512xf32>
    %205 = arith.addf %203, %204 : vector<2x512xf32>
    %c0_40 = arith.constant 0 : index
    %c0_41 = arith.constant 0 : index
    %c0_42 = arith.constant 0 : index
    %206 = vector.load %arg1[%c0_40, %c0_41, %c0_42] : memref<3x128x512xf32, #tpu.memory_space<vmem>>, vector<1x128x512xf32>
    %207 = vector.shape_cast %206 : vector<1x128x512xf32> to vector<128x512xf32>
    %cst_43 = arith.constant dense<0.000000e+00> : vector<2x512xf32>
    %208 = tpu.matmul %198, %207, %cst_43 {dimension_numbers = #tpu.dot_dimension_numbers<[1], [0], [0], [1], [0, 0, 1, 1], [], []>} : vector<2x128xf32>, vector<128x512xf32>, vector<2x512xf32> -> vector<2x512xf32>
    %209 = arith.addf %205, %208 : vector<2x512xf32>
    %210 = vector.extract_strided_slice %209 {offsets = [0, 0], sizes = [2, 384], strides = [1, 1]} : vector<2x512xf32> to vector<2x384xf32>
    %211 = arith.negf %210 : vector<2x384xf32>
    %212 = math.exp %211 : vector<2x384xf32>
    %cst_44 = arith.constant 1.000000e+00 : f32
    %213 = vector.broadcast %cst_44 : f32 to vector<2x384xf32>
    %214 = arith.addf %213, %212 : vector<2x384xf32>
    %215 = arith.divf %213, %214 : vector<2x384xf32>
    %216 = vector.extract_strided_slice %209 {offsets = [0, 384], sizes = [2, 128], strides = [1, 1]} : vector<2x512xf32> to vector<2x128xf32>
    %217 = math.tanh %216 : vector<2x128xf32>
    %218 = vector.extract_strided_slice %215 {offsets = [0, 0], sizes = [2, 128], strides = [1, 1]} : vector<2x384xf32> to vector<2x128xf32>
    %219 = vector.extract_strided_slice %215 {offsets = [0, 128], sizes = [2, 128], strides = [1, 1]} : vector<2x384xf32> to vector<2x128xf32>
    %220 = vector.extract_strided_slice %215 {offsets = [0, 256], sizes = [2, 128], strides = [1, 1]} : vector<2x384xf32> to vector<2x128xf32>
    %221 = arith.mulf %219, %196 : vector<2x128xf32>
    %222 = arith.mulf %218, %217 : vector<2x128xf32>
    %223 = arith.addf %221, %222 : vector<2x128xf32>
    %224 = math.tanh %223 : vector<2x128xf32>
    %225 = arith.mulf %220, %224 : vector<2x128xf32>
    %c1 = arith.constant 1 : index
    %c0_45 = arith.constant 0 : index
    %c0_46 = arith.constant 0 : index
    %226 = vector.load %arg1[%c1, %c0_45, %c0_46] : memref<3x128x512xf32, #tpu.memory_space<vmem>>, vector<1x128x512xf32>
    %227 = vector.shape_cast %226 : vector<1x128x512xf32> to vector<128x512xf32>
    %cst_47 = arith.constant dense<0.000000e+00> : vector<2x512xf32>
    %228 = tpu.matmul %225, %227, %cst_47 {dimension_numbers = #tpu.dot_dimension_numbers<[1], [0], [0], [1], [0, 0, 1, 1], [], []>} : vector<2x128xf32>, vector<128x512xf32>, vector<2x512xf32> -> vector<2x512xf32>
    %229 = vector.broadcast %3 : vector<1x512xf32> to vector<2x512xf32>
    %230 = arith.addf %229, %228 : vector<2x512xf32>
    %231 = vector.extract_strided_slice %230 {offsets = [0, 0], sizes = [2, 384], strides = [1, 1]} : vector<2x512xf32> to vector<2x384xf32>
    %232 = arith.negf %231 : vector<2x384xf32>
    %233 = math.exp %232 : vector<2x384xf32>
    %cst_48 = arith.constant 1.000000e+00 : f32
    %234 = vector.broadcast %cst_48 : f32 to vector<2x384xf32>
    %235 = arith.addf %234, %233 : vector<2x384xf32>
    %236 = arith.divf %234, %235 : vector<2x384xf32>
    %237 = vector.extract_strided_slice %230 {offsets = [0, 384], sizes = [2, 128], strides = [1, 1]} : vector<2x512xf32> to vector<2x128xf32>
    %238 = math.tanh %237 : vector<2x128xf32>
    %239 = vector.extract_strided_slice %236 {offsets = [0, 0], sizes = [2, 128], strides = [1, 1]} : vector<2x384xf32> to vector<2x128xf32>
    %240 = vector.extract_strided_slice %236 {offsets = [0, 128], sizes = [2, 128], strides = [1, 1]} : vector<2x384xf32> to vector<2x128xf32>
    %241 = vector.extract_strided_slice %236 {offsets = [0, 256], sizes = [2, 128], strides = [1, 1]} : vector<2x384xf32> to vector<2x128xf32>
    %242 = arith.mulf %240, %223 : vector<2x128xf32>
    %243 = arith.mulf %239, %238 : vector<2x128xf32>
    %244 = arith.addf %242, %243 : vector<2x128xf32>
    %245 = math.tanh %244 : vector<2x128xf32>
    %246 = arith.mulf %241, %245 : vector<2x128xf32>
    %c2 = arith.constant 2 : index
    %c0_49 = arith.constant 0 : index
    %c0_50 = arith.constant 0 : index
    %247 = vector.load %arg1[%c2, %c0_49, %c0_50] : memref<3x128x512xf32, #tpu.memory_space<vmem>>, vector<1x128x512xf32>
    %248 = vector.shape_cast %247 : vector<1x128x512xf32> to vector<128x512xf32>
    %cst_51 = arith.constant dense<0.000000e+00> : vector<2x512xf32>
    %249 = tpu.matmul %246, %248, %cst_51 {dimension_numbers = #tpu.dot_dimension_numbers<[1], [0], [0], [1], [0, 0, 1, 1], [], []>} : vector<2x128xf32>, vector<128x512xf32>, vector<2x512xf32> -> vector<2x512xf32>
    %250 = vector.broadcast %4 : vector<1x512xf32> to vector<2x512xf32>
    %251 = arith.addf %250, %249 : vector<2x512xf32>
    %252 = vector.extract_strided_slice %251 {offsets = [0, 0], sizes = [2, 384], strides = [1, 1]} : vector<2x512xf32> to vector<2x384xf32>
    %253 = arith.negf %252 : vector<2x384xf32>
    %254 = math.exp %253 : vector<2x384xf32>
    %cst_52 = arith.constant 1.000000e+00 : f32
    %255 = vector.broadcast %cst_52 : f32 to vector<2x384xf32>
    %256 = arith.addf %255, %254 : vector<2x384xf32>
    %257 = arith.divf %255, %256 : vector<2x384xf32>
    %258 = vector.extract_strided_slice %251 {offsets = [0, 384], sizes = [2, 128], strides = [1, 1]} : vector<2x512xf32> to vector<2x128xf32>
    %259 = math.tanh %258 : vector<2x128xf32>
    %260 = vector.extract_strided_slice %257 {offsets = [0, 0], sizes = [2, 128], strides = [1, 1]} : vector<2x384xf32> to vector<2x128xf32>
    %261 = vector.extract_strided_slice %257 {offsets = [0, 128], sizes = [2, 128], strides = [1, 1]} : vector<2x384xf32> to vector<2x128xf32>
    %262 = vector.extract_strided_slice %257 {offsets = [0, 256], sizes = [2, 128], strides = [1, 1]} : vector<2x384xf32> to vector<2x128xf32>
    %263 = arith.mulf %261, %244 : vector<2x128xf32>
    %264 = arith.mulf %260, %259 : vector<2x128xf32>
    %265 = arith.addf %263, %264 : vector<2x128xf32>
    %266 = math.tanh %265 : vector<2x128xf32>
    %267 = arith.mulf %262, %266 : vector<2x128xf32>
    %c2_53 = arith.constant 2 : index
    %c0_54 = arith.constant 0 : index
    %c0_55 = arith.constant 0 : index
    %268 = vector.load %arg1[%c2_53, %c0_54, %c0_55] : memref<3x128x512xf32, #tpu.memory_space<vmem>>, vector<1x128x512xf32>
    %269 = vector.shape_cast %268 : vector<1x128x512xf32> to vector<128x512xf32>
    %cst_56 = arith.constant dense<0.000000e+00> : vector<2x512xf32>
    %270 = tpu.matmul %267, %269, %cst_56 {dimension_numbers = #tpu.dot_dimension_numbers<[1], [0], [0], [1], [0, 0, 1, 1], [], []>} : vector<2x128xf32>, vector<128x512xf32>, vector<2x512xf32> -> vector<2x512xf32>
    %271 = vector.broadcast %4 : vector<1x512xf32> to vector<2x512xf32>
    %272 = arith.addf %271, %270 : vector<2x512xf32>
    %273 = vector.extract_strided_slice %272 {offsets = [0, 0], sizes = [2, 384], strides = [1, 1]} : vector<2x512xf32> to vector<2x384xf32>
    %274 = arith.negf %273 : vector<2x384xf32>
    %275 = math.exp %274 : vector<2x384xf32>
    %cst_57 = arith.constant 1.000000e+00 : f32
    %276 = vector.broadcast %cst_57 : f32 to vector<2x384xf32>
    %277 = arith.addf %276, %275 : vector<2x384xf32>
    %278 = arith.divf %276, %277 : vector<2x384xf32>
    %279 = vector.extract_strided_slice %272 {offsets = [0, 384], sizes = [2, 128], strides = [1, 1]} : vector<2x512xf32> to vector<2x128xf32>
    %280 = math.tanh %279 : vector<2x128xf32>
    %281 = vector.extract_strided_slice %278 {offsets = [0, 0], sizes = [2, 128], strides = [1, 1]} : vector<2x384xf32> to vector<2x128xf32>
    %282 = vector.extract_strided_slice %278 {offsets = [0, 128], sizes = [2, 128], strides = [1, 1]} : vector<2x384xf32> to vector<2x128xf32>
    %283 = vector.extract_strided_slice %278 {offsets = [0, 256], sizes = [2, 128], strides = [1, 1]} : vector<2x384xf32> to vector<2x128xf32>
    %284 = arith.mulf %282, %265 : vector<2x128xf32>
    %285 = arith.mulf %281, %280 : vector<2x128xf32>
    %286 = arith.addf %284, %285 : vector<2x128xf32>
    %287 = math.tanh %286 : vector<2x128xf32>
    %288 = arith.mulf %283, %287 : vector<2x128xf32>
    %c2_58 = arith.constant 2 : index
    %c0_59 = arith.constant 0 : index
    %c0_60 = arith.constant 0 : index
    %289 = vector.load %arg1[%c2_58, %c0_59, %c0_60] : memref<3x128x512xf32, #tpu.memory_space<vmem>>, vector<1x128x512xf32>
    %290 = vector.shape_cast %289 : vector<1x128x512xf32> to vector<128x512xf32>
    %cst_61 = arith.constant dense<0.000000e+00> : vector<2x512xf32>
    %291 = tpu.matmul %288, %290, %cst_61 {dimension_numbers = #tpu.dot_dimension_numbers<[1], [0], [0], [1], [0, 0, 1, 1], [], []>} : vector<2x128xf32>, vector<128x512xf32>, vector<2x512xf32> -> vector<2x512xf32>
    %292 = vector.broadcast %4 : vector<1x512xf32> to vector<2x512xf32>
    %293 = arith.addf %292, %291 : vector<2x512xf32>
    %294 = vector.extract_strided_slice %293 {offsets = [0, 0], sizes = [2, 384], strides = [1, 1]} : vector<2x512xf32> to vector<2x384xf32>
    %295 = arith.negf %294 : vector<2x384xf32>
    %296 = math.exp %295 : vector<2x384xf32>
    %cst_62 = arith.constant 1.000000e+00 : f32
    %297 = vector.broadcast %cst_62 : f32 to vector<2x384xf32>
    %298 = arith.addf %297, %296 : vector<2x384xf32>
    %299 = arith.divf %297, %298 : vector<2x384xf32>
    %300 = vector.extract_strided_slice %293 {offsets = [0, 384], sizes = [2, 128], strides = [1, 1]} : vector<2x512xf32> to vector<2x128xf32>
    %301 = math.tanh %300 : vector<2x128xf32>
    %302 = vector.extract_strided_slice %299 {offsets = [0, 0], sizes = [2, 128], strides = [1, 1]} : vector<2x384xf32> to vector<2x128xf32>
    %303 = vector.extract_strided_slice %299 {offsets = [0, 128], sizes = [2, 128], strides = [1, 1]} : vector<2x384xf32> to vector<2x128xf32>
    %304 = vector.extract_strided_slice %299 {offsets = [0, 256], sizes = [2, 128], strides = [1, 1]} : vector<2x384xf32> to vector<2x128xf32>
    %305 = arith.mulf %303, %286 : vector<2x128xf32>
    %306 = arith.mulf %302, %301 : vector<2x128xf32>
    %307 = arith.addf %305, %306 : vector<2x128xf32>
    %308 = math.tanh %307 : vector<2x128xf32>
    %309 = arith.mulf %304, %308 : vector<2x128xf32>
    %c2_63 = arith.constant 2 : index
    %c0_64 = arith.constant 0 : index
    %c0_65 = arith.constant 0 : index
    %310 = vector.load %arg1[%c2_63, %c0_64, %c0_65] : memref<3x128x512xf32, #tpu.memory_space<vmem>>, vector<1x128x512xf32>
    %311 = vector.shape_cast %310 : vector<1x128x512xf32> to vector<128x512xf32>
    %cst_66 = arith.constant dense<0.000000e+00> : vector<2x512xf32>
    %312 = tpu.matmul %309, %311, %cst_66 {dimension_numbers = #tpu.dot_dimension_numbers<[1], [0], [0], [1], [0, 0, 1, 1], [], []>} : vector<2x128xf32>, vector<128x512xf32>, vector<2x512xf32> -> vector<2x512xf32>
    %313 = vector.broadcast %4 : vector<1x512xf32> to vector<2x512xf32>
    %314 = arith.addf %313, %312 : vector<2x512xf32>
    %315 = vector.extract_strided_slice %314 {offsets = [0, 0], sizes = [2, 384], strides = [1, 1]} : vector<2x512xf32> to vector<2x384xf32>
    %316 = arith.negf %315 : vector<2x384xf32>
    %317 = math.exp %316 : vector<2x384xf32>
    %cst_67 = arith.constant 1.000000e+00 : f32
    %318 = vector.broadcast %cst_67 : f32 to vector<2x384xf32>
    %319 = arith.addf %318, %317 : vector<2x384xf32>
    %320 = arith.divf %318, %319 : vector<2x384xf32>
    %321 = vector.extract_strided_slice %314 {offsets = [0, 384], sizes = [2, 128], strides = [1, 1]} : vector<2x512xf32> to vector<2x128xf32>
    %322 = math.tanh %321 : vector<2x128xf32>
    %323 = vector.extract_strided_slice %320 {offsets = [0, 0], sizes = [2, 128], strides = [1, 1]} : vector<2x384xf32> to vector<2x128xf32>
    %324 = vector.extract_strided_slice %320 {offsets = [0, 128], sizes = [2, 128], strides = [1, 1]} : vector<2x384xf32> to vector<2x128xf32>
    %325 = vector.extract_strided_slice %320 {offsets = [0, 256], sizes = [2, 128], strides = [1, 1]} : vector<2x384xf32> to vector<2x128xf32>
    %326 = arith.mulf %324, %307 : vector<2x128xf32>
    %327 = arith.mulf %323, %322 : vector<2x128xf32>
    %328 = arith.addf %326, %327 : vector<2x128xf32>
    %329 = math.tanh %328 : vector<2x128xf32>
    %330 = arith.mulf %325, %329 : vector<2x128xf32>
    %c2_68 = arith.constant 2 : index
    %c0_69 = arith.constant 0 : index
    %c0_70 = arith.constant 0 : index
    %331 = vector.load %arg1[%c2_68, %c0_69, %c0_70] : memref<3x128x512xf32, #tpu.memory_space<vmem>>, vector<1x128x512xf32>
    %332 = vector.shape_cast %331 : vector<1x128x512xf32> to vector<128x512xf32>
    %cst_71 = arith.constant dense<0.000000e+00> : vector<2x512xf32>
    %333 = tpu.matmul %330, %332, %cst_71 {dimension_numbers = #tpu.dot_dimension_numbers<[1], [0], [0], [1], [0, 0, 1, 1], [], []>} : vector<2x128xf32>, vector<128x512xf32>, vector<2x512xf32> -> vector<2x512xf32>
    %334 = vector.broadcast %4 : vector<1x512xf32> to vector<2x512xf32>
    %335 = arith.addf %334, %333 : vector<2x512xf32>
    %336 = vector.extract_strided_slice %335 {offsets = [0, 0], sizes = [2, 384], strides = [1, 1]} : vector<2x512xf32> to vector<2x384xf32>
    %337 = arith.negf %336 : vector<2x384xf32>
    %338 = math.exp %337 : vector<2x384xf32>
    %cst_72 = arith.constant 1.000000e+00 : f32
    %339 = vector.broadcast %cst_72 : f32 to vector<2x384xf32>
    %340 = arith.addf %339, %338 : vector<2x384xf32>
    %341 = arith.divf %339, %340 : vector<2x384xf32>
    %342 = vector.extract_strided_slice %335 {offsets = [0, 384], sizes = [2, 128], strides = [1, 1]} : vector<2x512xf32> to vector<2x128xf32>
    %343 = math.tanh %342 : vector<2x128xf32>
    %344 = vector.extract_strided_slice %341 {offsets = [0, 0], sizes = [2, 128], strides = [1, 1]} : vector<2x384xf32> to vector<2x128xf32>
    %345 = vector.extract_strided_slice %341 {offsets = [0, 128], sizes = [2, 128], strides = [1, 1]} : vector<2x384xf32> to vector<2x128xf32>
    %346 = vector.extract_strided_slice %341 {offsets = [0, 256], sizes = [2, 128], strides = [1, 1]} : vector<2x384xf32> to vector<2x128xf32>
    %347 = arith.mulf %345, %328 : vector<2x128xf32>
    %348 = arith.mulf %344, %343 : vector<2x128xf32>
    %349 = arith.addf %347, %348 : vector<2x128xf32>
    %350 = math.tanh %349 : vector<2x128xf32>
    %351 = arith.mulf %346, %350 : vector<2x128xf32>
    %352 = vector.shape_cast %246 : vector<2x128xf32> to vector<2x1x128xf32>
    %353 = vector.shape_cast %267 : vector<2x128xf32> to vector<2x1x128xf32>
    %354 = vector.shape_cast %288 : vector<2x128xf32> to vector<2x1x128xf32>
    %355 = vector.shape_cast %309 : vector<2x128xf32> to vector<2x1x128xf32>
    %356 = vector.shape_cast %330 : vector<2x128xf32> to vector<2x1x128xf32>
    %357 = vector.shape_cast %351 : vector<2x128xf32> to vector<2x1x128xf32>
    %358 = tpu.concatenate %352, %353, %354, %355, %356, %357 in 1 : vector<2x1x128xf32>, vector<2x1x128xf32>, vector<2x1x128xf32>, vector<2x1x128xf32>, vector<2x1x128xf32>, vector<2x1x128xf32> -> vector<2x6x128xf32>
    %359 = vector.shape_cast %5 : vector<1x128xf32> to vector<1x1x128xf32>
    %360 = vector.broadcast %359 : vector<1x1x128xf32> to vector<2x6x128xf32>
    %361 = arith.mulf %358, %360 : vector<2x6x128xf32>
    %cst_73 = arith.constant dense<0.000000e+00> : vector<2x6xf32>
    %362 = vector.multi_reduction <add>, %361, %cst_73 [2] : vector<2x6x128xf32> to vector<2x6xf32>
    %363 = vector.broadcast %6 : vector<1x1xf32> to vector<2x6xf32>
    %364 = arith.addf %362, %363 : vector<2x6xf32>
    %c0_74 = arith.constant 0 : index
    %c0_75 = arith.constant 0 : index
    %365 = vector.load %arg3[%c0_74, %c0_75] : memref<2x6xf32, #tpu.memory_space<vmem>>, vector<2x6xf32>
    tpu.vector_store %arg3[%c0_74, %c0_75], %364 {strides = array<i32>} : memref<2x6xf32, #tpu.memory_space<vmem>>, vector<2x6xf32>,
    return
  }
}

</mosaic_0001>

<llo_original>
// kernel: seq2seq_forward.1
$region0: #{seq2seq_forward.1}
  #allocation0 [shape = 'u32[]', space=smem, size = 0x4, offset = 0x4, fixed_abs, tag = 'smem constant byte address 0x4 - core index']
  #allocation1 [shape = 'u32[144,128]{1,0:T(1,128)}', space=vmem, size = 0x12000, scoped, tag = 'internal scratch']
  %s0 = inlined_call_operand.vmem [shape: f32[2,8,1], index: 0, kind: input, shape index: {}]
  %s1 = inlined_call_operand.hbm [shape: f32[3,128,512], index: 1, kind: input, shape index: {}]
  %s2 = inlined_call_operand.hbm [shape: f32[8,512], index: 2, kind: input, shape index: {}]
  %s3 = inlined_call_operand.hbm [shape: f32[2,6], index: 3, kind: output, shape index: {}]
  %s4 = sld [smem:[#allocation0]]
  $region30: #{seq2seq_forward.1} parent=0
    _
  %s6 = ssub.s32 1, %s4
  %s7 = scalar_select 0, %s6, %s4
  $region1: #{seq2seq_forward.1} parent=0
    #allocation2 [shape = 'u8[786432]{0}', space=vmem, size = 0xc0000, scoped, tag = 'input window, operand 1, single buffered']
    #allocation3 [shape = 's32[1]{0}', space=sflag, size = 0x4, scoped, tag = 'scoped memory for seq2seq_forward.1']
    #allocation4 [shape = 's32[1]{0}', space=sflag, size = 0x4, scoped, tag = 'scoped memory for seq2seq_forward.1']
    #allocation5 [shape = 'u8[16384]{0}', space=vmem, size = 0x4000, scoped, tag = 'input window, operand 2, single buffered']
    #allocation6 [shape = 's32[1]{0}', space=sflag, size = 0x4, scoped, tag = 'scoped memory for seq2seq_forward.1']
    #allocation7 [shape = 'u8[1024]{0}', space=vmem, size = 0x400, scoped, tag = 'output window, operand 0, single buffered']
    %8 = vsyncpa [#allocation3], 0
    %9 = vsyncpa [#allocation6], 0
    %10 = vsyncpa [#allocation4], 0
    // Predicated region
    $region2: #{seq2seq_forward.1} parent=1 // pred_check
      _
    $region3: #{seq2seq_forward.1} parent=1 // pred_check_branch
      %12 = sbr.rel (0) target = $region5
    $region4: #{seq2seq_forward.1} parent=1 // pred_region
      _
    $region5: #{seq2seq_forward.1} parent=1 // pred_fallthru
      _
    // Predicated region
    $region6: #{seq2seq_forward.1} parent=1 // pred_check
      _
    $region7: #{seq2seq_forward.1} parent=1 // pred_check_branch
      %14 = sbr.rel (0) target = $region9
    $region8: #{seq2seq_forward.1} parent=1 // pred_region
      %s16 = ssub.s32 24576, 24576
      %17 = vsyncadd [#allocation3], %s16
      %s18 = sshll.u32 [#allocation2], 4
      %s19 = int_to_ptr.vmem [resolvable:$true] %s18
      %24 = dma.hbm_to_vmem [thread:$0]  %s1, 24576, %s19, [#allocation3], 512, 512, 32
    $region9: #{seq2seq_forward.1} parent=1 // pred_fallthru
      _
    // Predicated region
    $region10: #{seq2seq_forward.1} parent=1 // pred_check
      _
    $region11: #{seq2seq_forward.1} parent=1 // pred_check_branch
      %26 = sbr.rel (0) target = $region13
    $region12: #{seq2seq_forward.1} parent=1 // pred_region
      %s28 = ssub.s32 512, 512
      %29 = vsyncadd [#allocation6], %s28
      %s31 = sshll.u32 [#allocation5], 4
      %s32 = int_to_ptr.vmem [resolvable:$true] %s31
      %34 = dma.hbm_to_vmem [thread:$0]  %s2, 512, %s32, [#allocation6]
    $region13: #{seq2seq_forward.1} parent=1 // pred_fallthru
      _
    // Predicated region
    $region14: #{seq2seq_forward.1} parent=1 // pred_check
      _
    $region15: #{seq2seq_forward.1} parent=1 // pred_check_branch
      %36 = sbr.rel (0) target = $region17
    $region16: #{seq2seq_forward.1} parent=1 // pred_region
      %37 = dma.done [#allocation3], 24576
    $region17: #{seq2seq_forward.1} parent=1 // pred_fallthru
      _
    // Predicated region
    $region18: #{seq2seq_forward.1} parent=1 // pred_check
      _
    $region19: #{seq2seq_forward.1} parent=1 // pred_check_branch
      %39 = sbr.rel (0) target = $region21
    $region20: #{seq2seq_forward.1} parent=1 // pred_region
      %40 = dma.done [#allocation6], 512
    $region21: #{seq2seq_forward.1} parent=1 // pred_fallthru
      _
    %v41 = vld [vmem:[#allocation5] sm:$0xff]
    %v42 = vld [vmem:[#allocation5 + $0x8] sm:$0xff]
    %v43 = vld [vmem:[#allocation5 + $0x10] sm:$0xff]
    %v44 = vld [vmem:[#allocation5 + $0x18] sm:$0xff]
    %v45 = vld [vmem:[%s0] sm:$0xff]
    %v46 = vld [vmem:[%s0 + $0x8] sm:$0xff]
    %48 = vset.pattern.permute.xlu0 0
    %49 = vperm.xlu0 %48, %v45
    %v50 = vpop.permute.xlu0 %49
    %53 = vset.pattern.permute.xlu0 0
    %54 = vperm.xlu0 %53, %v46
    %v55 = vpop.permute.xlu0 %54
    %v57 = vlaneseq
    %v58 = vshrl.u32 %v57, 7
    %v59 = vsub.s32 0, %v58
    %v60 = vrot.slane %v41, %v59
    %v61 = vlaneseq
    %v62 = vshrl.u32 %v61, 7
    %v63 = vsub.s32 0, %v62
    %v64 = vrot.slane %v42, %v63
    %v65 = vlaneseq
    %v66 = vshrl.u32 %v65, 7
    %v67 = vsub.s32 0, %v66
    %v68 = vrot.slane %v43, %v67
    %v69 = vlaneseq
    %v70 = vshrl.u32 %v69, 7
    %v71 = vsub.s32 0, %v70
    %v72 = vrot.slane %v44, %v71
    %v73 = vmul.f32 %v50, %v60
    %v74 = vmul.f32 %v50, %v64
    %v75 = vmul.f32 %v50, %v68
    %v76 = vmul.f32 %v50, %v72
    %v77 = vmul.f32 %v55, %v60
    %v78 = vmul.f32 %v55, %v64
    %v79 = vmul.f32 %v55, %v68
    %v80 = vmul.f32 %v55, %v72
    %v81 = vlaneseq
    %v82 = vshrl.u32 %v81, 7
    %v83 = vsub.s32 1, %v82
    %v84 = vrot.slane %v41, %v83
    %v85 = vlaneseq
    %v86 = vshrl.u32 %v85, 7
    %v87 = vsub.s32 1, %v86
    %v88 = vrot.slane %v42, %v87
    %v89 = vlaneseq
    %v90 = vshrl.u32 %v89, 7
    %v91 = vsub.s32 1, %v90
    %v92 = vrot.slane %v43, %v91
    %v93 = vlaneseq
    %v94 = vshrl.u32 %v93, 7
    %v95 = vsub.s32 1, %v94
    %v96 = vrot.slane %v44, %v95
    %v97 = vadd.f32 %v73, %v84
    %v98 = vadd.f32 %v74, %v88
    %v99 = vadd.f32 %v75, %v92
    %v100 = vadd.f32 %v76, %v96
    %v101 = vadd.f32 %v77, %v84
    %v102 = vadd.f32 %v78, %v88
    %v103 = vadd.f32 %v79, %v92
    %v104 = vadd.f32 %v80, %v96
    %v105 = vld [vmem:[#allocation2] sm:$0xff]
    %v106 = vld [vmem:[#allocation2 + $0x8] sm:$0xff]
    %v107 = vld [vmem:[#allocation2 + $0x10] sm:$0xff]
    %v108 = vld [vmem:[#allocation2 + $0x18] sm:$0xff]
    %v109 = vld [vmem:[#allocation2 + $0x20] sm:$0xff]
    %v110 = vld [vmem:[#allocation2 + $0x28] sm:$0xff]
    %v111 = vld [vmem:[#allocation2 + $0x30] sm:$0xff]
    %v112 = vld [vmem:[#allocation2 + $0x38] sm:$0xff]
    %v113 = vld [vmem:[#allocation2 + $0x40] sm:$0xff]
    %v114 = vld [vmem:[#allocation2 + $0x48] sm:$0xff]
    %v115 = vld [vmem:[#allocation2 + $0x50] sm:$0xff]
    %v116 = vld [vmem:[#allocation2 + $0x58] sm:$0xff]
    %v117 = vld [vmem:[#allocation2 + $0x60] sm:$0xff]
    %v118 = vld [vmem:[#allocation2 + $0x68] sm:$0xff]
    %v119 = vld [vmem:[#allocation2 + $0x70] sm:$0xff]
    %v120 = vld [vmem:[#allocation2 + $0x78] sm:$0xff]
    %v121 = vld [vmem:[#allocation2 + $0x80] sm:$0xff]
    %v122 = vld [vmem:[#allocation2 + $0x88] sm:$0xff]
    %v123 = vld [vmem:[#allocation2 + $0x90] sm:$0xff]
    %v124 = vld [vmem:[#allocation2 + $0x98] sm:$0xff]
    %v125 = vld [vmem:[#allocation2 + $0xa0] sm:$0xff]
    %v126 = vld [vmem:[#allocation2 + $0xa8] sm:$0xff]
    %v127 = vld [vmem:[#allocation2 + $0xb0] sm:$0xff]
    %v128 = vld [vmem:[#allocation2 + $0xb8] sm:$0xff]
    %v129 = vld [vmem:[#allocation2 + $0xc0] sm:$0xff]
    %v130 = vld [vmem:[#allocation2 + $0xc8] sm:$0xff]
    %v131 = vld [vmem:[#allocation2 + $0xd0] sm:$0xff]
    %v132 = vld [vmem:[#allocation2 + $0xd8] sm:$0xff]
    %v133 = vld [vmem:[#allocation2 + $0xe0] sm:$0xff]
    %v134 = vld [vmem:[#allocation2 + $0xe8] sm:$0xff]
    %v135 = vld [vmem:[#allocation2 + $0xf0] sm:$0xff]
    %v136 = vld [vmem:[#allocation2 + $0xf8] sm:$0xff]
    %v137 = vld [vmem:[#allocation2 + $0x100] sm:$0xff]
    %v138 = vld [vmem:[#allocation2 + $0x108] sm:$0xff]
    %v139 = vld [vmem:[#allocation2 + $0x110] sm:$0xff]
    %v140 = vld [vmem:[#allocation2 + $0x118] sm:$0xff]
    %v141 = vld [vmem:[#allocation2 + $0x120] sm:$0xff]
    %v142 = vld [vmem:[#allocation2 + $0x128] sm:$0xff]
    %v143 = vld [vmem:[#allocation2 + $0x130] sm:$0xff]
    %v144 = vld [vmem:[#allocation2 + $0x138] sm:$0xff]
    %v145 = vld [vmem:[#allocation2 + $0x140] sm:$0xff]
    %v146 = vld [vmem:[#allocation2 + $0x148] sm:$0xff]
    %v147 = vld [vmem:[#allocation2 + $0x150] sm:$0xff]
    %v148 = vld [vmem:[#allocation2 + $0x158] sm:$0xff]
    %v149 = vld [vmem:[#allocation2 + $0x160] sm:$0xff]
    %v150 = vld [vmem:[#allocation2 + $0x168] sm:$0xff]
    %v151 = vld [vmem:[#allocation2 + $0x170] sm:$0xff]
    %v152 = vld [vmem:[#allocation2 + $0x178] sm:$0xff]
    %v153 = vld [vmem:[#allocation2 + $0x180] sm:$0xff]
    %v154 = vld [vmem:[#allocation2 + $0x188] sm:$0xff]
    %v155 = vld [vmem:[#allocation2 + $0x190] sm:$0xff]
    %v156 = vld [vmem:[#allocation2 + $0x198] sm:$0xff]
    %v157 = vld [vmem:[#allocation2 + $0x1a0] sm:$0xff]
    %v158 = vld [vmem:[#allocation2 + $0x1a8] sm:$0xff]
    %v159 = vld [vmem:[#allocation2 + $0x1b0] sm:$0xff]
    %v160 = vld [vmem:[#allocation2 + $0x1b8] sm:$0xff]
    %v161 = vld [vmem:[#allocation2 + $0x1c0] sm:$0xff]
    %v162 = vld [vmem:[#allocation2 + $0x1c8] sm:$0xff]
    %v163 = vld [vmem:[#allocation2 + $0x1d0] sm:$0xff]
    %v164 = vld [vmem:[#allocation2 + $0x1d8] sm:$0xff]
    %v165 = vld [vmem:[#allocation2 + $0x1e0] sm:$0xff]
    %v166 = vld [vmem:[#allocation2 + $0x1e8] sm:$0xff]
    %v167 = vld [vmem:[#allocation2 + $0x1f0] sm:$0xff]
    %v168 = vld [vmem:[#allocation2 + $0x1f8] sm:$0xff]
    %169 = vmatprep.subr.mxu0 %v106
    %170 = vmatpush1.msra.mxu0 %v105
    %171 = vmatprep.subr.mxu0 %v110
    %172 = vmatpush1.msra.mxu0 %v109
    %173 = vmatprep.subr.mxu0 %v114
    %174 = vmatpush1.msra.mxu0 %v113
    %175 = vmatprep.subr.mxu0 %v118
    %176 = vmatpush1.msra.mxu0 %v117
    %177 = vmatprep.subr.mxu0 %v122
    %178 = vmatpush1.msra.mxu0 %v121
    %179 = vmatprep.subr.mxu0 %v126
    %180 = vmatpush1.msra.mxu0 %v125
    %181 = vmatprep.subr.mxu0 %v130
    %182 = vmatpush1.msra.mxu0 %v129
    %183 = vmatprep.subr.mxu0 %v134
    %184 = vmatpush1.msra.mxu0 %v133
    %185 = vmatprep.subr.mxu0 %v138
    %186 = vmatpush1.msra.mxu0 %v137
    %187 = vmatprep.subr.mxu0 %v142
    %188 = vmatpush1.msra.mxu0 %v141
    %189 = vmatprep.subr.mxu0 %v146
    %190 = vmatpush1.msra.mxu0 %v145
    %191 = vmatprep.subr.mxu0 %v150
    %192 = vmatpush1.msra.mxu0 %v149
    %193 = vmatprep.subr.mxu0 %v154
    %194 = vmatpush1.msra.mxu0 %v153
    %195 = vmatprep.subr.mxu0 %v158
    %196 = vmatpush1.msra.mxu0 %v157
    %197 = vmatprep.subr.mxu0 %v162
    %198 = vmatpush1.msra.mxu0 %v161
    %199 = vmatprep.subr.mxu0 %v166
    %200 = vmatpush1.msra.mxu0 %v165
    %201 = vmatprep.subr.mxu0 0.0
    %202 = vmatpush1.msra.mxu0 0.0
    %203 = vmatprep.subr.mxu0 0.0
    %204 = vmatpush1.msra.mxu0 0.0
    %205 = vmatprep.subr.mxu0 0.0
    %206 = vmatpush1.msra.mxu0 0.0
    %207 = vmatprep.subr.mxu0 0.0
    %208 = vmatpush1.msra.mxu0 0.0
    %209 = vmatprep.subr.mxu0 0.0
    %210 = vmatpush1.msra.mxu0 0.0
    %211 = vmatprep.subr.mxu0 0.0
    %212 = vmatpush1.msra.mxu0 0.0
    %213 = vmatprep.subr.mxu0 0.0
    %214 = vmatpush1.msra.mxu0 0.0
    %215 = vmatprep.subr.mxu0 0.0
    %216 = vmatpush1.msra.mxu0 0.0
    %217 = vmatprep.subr.mxu0 0.0
    %218 = vmatpush1.msra.mxu0 0.0
    %219 = vmatprep.subr.mxu0 0.0
    %220 = vmatpush1.msra.mxu0 0.0
    %221 = vmatprep.subr.mxu0 0.0
    %222 = vmatpush1.msra.mxu0 0.0
    %223 = vmatprep.subr.mxu0 0.0
    %224 = vmatpush1.msra.mxu0 0.0
    %225 = vmatprep.subr.mxu0 0.0
    %226 = vmatpush1.msra.mxu0 0.0
    %227 = vmatprep.subr.mxu0 0.0
    %228 = vmatpush1.msra.mxu0 0.0
    %229 = vmatprep.subr.mxu0 0.0
    %230 = vmatpush1.msra.mxu0 0.0
    %231 = vmatprep.subr.mxu0 0.0
    %232 = vmatpush1.msra.mxu0 0.0
    %233 = vmatprep.mubr.f32.mxu0 0.0
    %234 = vmatmul.mubr.f32.gmra.mrb[0].mxu0 0.0
    %v235 = vpop.f32.mrb[0].mxu0
    %v236 = vadd.f32 0.0, %v235
    %v237 = vpop.f32.mrb[0].mxu0
    %v238 = vadd.f32 0.0, %v237
    %239 = vdwg.mxu0
    %240 = vmatprep.subr.mxu0 %v108
    %241 = vmatpush1.msra.mxu0 %v107
    %242 = vmatprep.subr.mxu0 %v112
    %243 = vmatpush1.msra.mxu0 %v111
    %244 = vmatprep.subr.mxu0 %v116
    %245 = vmatpush1.msra.mxu0 %v115
    %246 = vmatprep.subr.mxu0 %v120
    %247 = vmatpush1.msra.mxu0 %v119
    %248 = vmatprep.subr.mxu0 %v124
    %249 = vmatpush1.msra.mxu0 %v123
    %250 = vmatprep.subr.mxu0 %v128
    %251 = vmatpush1.msra.mxu0 %v127
    %252 = vmatprep.subr.mxu0 %v132
    %253 = vmatpush1.msra.mxu0 %v131
    %254 = vmatprep.subr.mxu0 %v136
    %255 = vmatpush1.msra.mxu0 %v135
    %256 = vmatprep.subr.mxu0 %v140
    %257 = vmatpush1.msra.mxu0 %v139
    %258 = vmatprep.subr.mxu0 %v144
    %259 = vmatpush1.msra.mxu0 %v143
    %260 = vmatprep.subr.mxu0 %v148
    %261 = vmatpush1.msra.mxu0 %v147
    %262 = vmatprep.subr.mxu0 %v152
    %263 = vmatpush1.msra.mxu0 %v151
    %264 = vmatprep.subr.mxu0 %v156
    %265 = vmatpush1.msra.mxu0 %v155
    %266 = vmatprep.subr.mxu0 %v160
    %267 = vmatpush1.msra.mxu0 %v159
    %268 = vmatprep.subr.mxu0 %v164
    %269 = vmatpush1.msra.mxu0 %v163
    %270 = vmatprep.subr.mxu0 %v168
    %271 = vmatpush1.msra.mxu0 %v167
    %272 = vmatprep.subr.mxu0 0.0
    %273 = vmatpush1.msra.mxu0 0.0
    %274 = vmatprep.subr.mxu0 0.0
    %275 = vmatpush1.msra.mxu0 0.0
    %276 = vmatprep.subr.mxu0 0.0
    %277 = vmatpush1.msra.mxu0 0.0
    %278 = vmatprep.subr.mxu0 0.0
    %279 = vmatpush1.msra.mxu0 0.0
    %280 = vmatprep.subr.mxu0 0.0
    %281 = vmatpush1.msra.mxu0 0.0
    %282 = vmatprep.subr.mxu0 0.0
    %283 = vmatpush1.msra.mxu0 0.0
    %284 = vmatprep.subr.mxu0 0.0
    %285 = vmatpush1.msra.mxu0 0.0
    %286 = vmatprep.subr.mxu0 0.0
    %287 = vmatpush1.msra.mxu0 0.0
    %288 = vmatprep.subr.mxu0 0.0
    %289 = vmatpush1.msra.mxu0 0.0
    %290 = vmatprep.subr.mxu0 0.0
    %291 = vmatpush1.msra.mxu0 0.0
    %292 = vmatprep.subr.mxu0 0.0
    %293 = vmatpush1.msra.mxu0 0.0
    %294 = vmatprep.subr.mxu0 0.0
    %295 = vmatpush1.msra.mxu0 0.0
    %296 = vmatprep.subr.mxu0 0.0
    %297 = vmatpush1.msra.mxu0 0.0
    %298 = vmatprep.subr.mxu0 0.0
    %299 = vmatpush1.msra.mxu0 0.0
    %300 = vmatprep.subr.mxu0 0.0
    %301 = vmatpush1.msra.mxu0 0.0
    %302 = vmatprep.subr.mxu0 0.0
    %303 = vmatpush1.msra.mxu0 0.0
    %304 = vmatprep.mubr.f32.mxu0 0.0
    %305 = vmatmul.mubr.f32.gmra.mrb[0].mxu0 0.0
    %v306 = vpop.f32.mrb[0].mxu0
    %v307 = vadd.f32 0.0, %v306
    %v308 = vpop.f32.mrb[0].mxu0
    %v309 = vadd.f32 0.0, %v308
    %310 = vdwg.mxu0
    %v315 = vrot.slane %v236, 1
    %v316 = vrot.slane %v238, 1
    %v317 = vrot.slane %v307, 1
    %v318 = vrot.slane %v309, 1
    %v327 = vadd.f32 %v97, %v236
    %v328 = vadd.f32 %v98, %v238
    %v329 = vadd.f32 %v99, %v307
    %v330 = vadd.f32 %v100, %v309
    %v331 = vadd.f32 %v101, %v315
    %v332 = vadd.f32 %v102, %v316
    %v333 = vadd.f32 %v103, %v317
    %v334 = vadd.f32 %v104, %v318
    %v335 = vxor.u32 %v327, 2147483648
    %v336 = vxor.u32 %v328, 2147483648
    %v337 = vxor.u32 %v329, 2147483648
    %v338 = vxor.u32 %v331, 2147483648
    %v339 = vxor.u32 %v332, 2147483648
    %v340 = vxor.u32 %v333, 2147483648
    %v341 = vmul.f32 %v335, 1.442695
    %v342 = vpow.pop %v341
    %v343 = vmul.f32 %v336, 1.442695
    %v344 = vpow.pop %v343
    %v345 = vmul.f32 %v337, 1.442695
    %v346 = vpow.pop %v345
    %v347 = vmul.f32 %v338, 1.442695
    %v348 = vpow.pop %v347
    %v349 = vmul.f32 %v339, 1.442695
    %v350 = vpow.pop %v349
    %v351 = vmul.f32 %v340, 1.442695
    %v352 = vpow.pop %v351
    %v353 = vadd.f32 %v342, 1.0
    %v354 = vadd.f32 %v344, 1.0
    %v355 = vadd.f32 %v346, 1.0
    %v356 = vadd.f32 %v348, 1.0
    %v357 = vadd.f32 %v350, 1.0
    %v358 = vadd.f32 %v352, 1.0
    %v359 = vrcp.pop %v353
    %v360 = vmul.f32 1.0, %v359
    %v361 = vrcp.pop %v354
    %v362 = vmul.f32 1.0, %v361
    %v363 = vrcp.pop %v355
    %v364 = vmul.f32 1.0, %v363
    %v365 = vrcp.pop %v356
    %v366 = vmul.f32 1.0, %v365
    %v367 = vrcp.pop %v357
    %v368 = vmul.f32 1.0, %v367
    %v369 = vrcp.pop %v358
    %v370 = vmul.f32 1.0, %v369
    %v371 = vtanh.pop %v330
    %v372 = vtanh.pop %v334
    %v373 = vmul.f32 %v362, 0.0
    %v374 = vmul.f32 %v368, 0.0
    %v375 = vmul.f32 %v360, %v371
    %v376 = vmul.f32 %v366, %v372
    %v377 = vadd.f32 %v373, %v375
    %v378 = vadd.f32 %v374, %v376
    %v379 = vtanh.pop %v377
    %v380 = vtanh.pop %v378
    %v381 = vmul.f32 %v364, %v379
    %v382 = vmul.f32 %v370, %v380
    %v385 = vrot.slane %v382, 7
    %vm386 = vcmask 1041409
    %v387 = vsel %vm386, %v385, %v381
    %389 = vmatprep.subr.mxu0 %v106
    %390 = vmatpush1.msra.mxu0 %v105
    %391 = vmatprep.subr.mxu0 %v110
    %392 = vmatpush1.msra.mxu0 %v109
    %393 = vmatprep.subr.mxu0 %v114
    %394 = vmatpush1.msra.mxu0 %v113
    %395 = vmatprep.subr.mxu0 %v118
    %396 = vmatpush1.msra.mxu0 %v117
    %397 = vmatprep.subr.mxu0 %v122
    %398 = vmatpush1.msra.mxu0 %v121
    %399 = vmatprep.subr.mxu0 %v126
    %400 = vmatpush1.msra.mxu0 %v125
    %401 = vmatprep.subr.mxu0 %v130
    %402 = vmatpush1.msra.mxu0 %v129
    %403 = vmatprep.subr.mxu0 %v134
    %404 = vmatpush1.msra.mxu0 %v133
    %405 = vmatprep.subr.mxu0 %v138
    %406 = vmatpush1.msra.mxu0 %v137
    %407 = vmatprep.subr.mxu0 %v142
    %408 = vmatpush1.msra.mxu0 %v141
    %409 = vmatprep.subr.mxu0 %v146
    %410 = vmatpush1.msra.mxu0 %v145
    %411 = vmatprep.subr.mxu0 %v150
    %412 = vmatpush1.msra.mxu0 %v149
    %413 = vmatprep.subr.mxu0 %v154
    %414 = vmatpush1.msra.mxu0 %v153
    %415 = vmatprep.subr.mxu0 %v158
    %416 = vmatpush1.msra.mxu0 %v157
    %417 = vmatprep.subr.mxu0 %v162
    %418 = vmatpush1.msra.mxu0 %v161
    %419 = vmatprep.subr.mxu0 %v166
    %420 = vmatpush1.msra.mxu0 %v165
    %421 = vmatprep.subr.mxu0 0.0
    %422 = vmatpush1.msra.mxu0 0.0
    %423 = vmatprep.subr.mxu0 0.0
    %424 = vmatpush1.msra.mxu0 0.0
    %425 = vmatprep.subr.mxu0 0.0
    %426 = vmatpush1.msra.mxu0 0.0
    %427 = vmatprep.subr.mxu0 0.0
    %428 = vmatpush1.msra.mxu0 0.0
    %429 = vmatprep.subr.mxu0 0.0
    %430 = vmatpush1.msra.mxu0 0.0
    %431 = vmatprep.subr.mxu0 0.0
    %432 = vmatpush1.msra.mxu0 0.0
    %433 = vmatprep.subr.mxu0 0.0
    %434 = vmatpush1.msra.mxu0 0.0
    %435 = vmatprep.subr.mxu0 0.0
    %436 = vmatpush1.msra.mxu0 0.0
    %437 = vmatprep.subr.mxu0 0.0
    %438 = vmatpush1.msra.mxu0 0.0
    %439 = vmatprep.subr.mxu0 0.0
    %440 = vmatpush1.msra.mxu0 0.0
    %441 = vmatprep.subr.mxu0 0.0
    %442 = vmatpush1.msra.mxu0 0.0
    %443 = vmatprep.subr.mxu0 0.0
    %444 = vmatpush1.msra.mxu0 0.0
    %445 = vmatprep.subr.mxu0 0.0
    %446 = vmatpush1.msra.mxu0 0.0
    %447 = vmatprep.subr.mxu0 0.0
    %448 = vmatpush1.msra.mxu0 0.0
    %449 = vmatprep.subr.mxu0 0.0
    %450 = vmatpush1.msra.mxu0 0.0
    %451 = vmatprep.subr.mxu0 0.0
    %452 = vmatpush1.msra.mxu0 0.0
    %453 = vmatprep.mubr.f32.mxu0 0.0
    %454 = vmatmul.mubr.f32.gmra.mrb[0].mxu0 %v387
    %v455 = vpop.f32.mrb[0].mxu0
    %v456 = vadd.f32 0.0, %v455
    %v457 = vpop.f32.mrb[0].mxu0
    %v458 = vadd.f32 0.0, %v457
    %459 = vdwg.mxu0
    %460 = vmatprep.subr.mxu0 %v108
    %461 = vmatpush1.msra.mxu0 %v107
    %462 = vmatprep.subr.mxu0 %v112
    %463 = vmatpush1.msra.mxu0 %v111
    %464 = vmatprep.subr.mxu0 %v116
    %465 = vmatpush1.msra.mxu0 %v115
    %466 = vmatprep.subr.mxu0 %v120
    %467 = vmatpush1.msra.mxu0 %v119
    %468 = vmatprep.subr.mxu0 %v124
    %469 = vmatpush1.msra.mxu0 %v123
    %470 = vmatprep.subr.mxu0 %v128
    %471 = vmatpush1.msra.mxu0 %v127
    %472 = vmatprep.subr.mxu0 %v132
    %473 = vmatpush1.msra.mxu0 %v131
    %474 = vmatprep.subr.mxu0 %v136
    %475 = vmatpush1.msra.mxu0 %v135
    %476 = vmatprep.subr.mxu0 %v140
    %477 = vmatpush1.msra.mxu0 %v139
    %478 = vmatprep.subr.mxu0 %v144
    %479 = vmatpush1.msra.mxu0 %v143
    %480 = vmatprep.subr.mxu0 %v148
    %481 = vmatpush1.msra.mxu0 %v147
    %482 = vmatprep.subr.mxu0 %v152
    %483 = vmatpush1.msra.mxu0 %v151
    %484 = vmatprep.subr.mxu0 %v156
    %485 = vmatpush1.msra.mxu0 %v155
    %486 = vmatprep.subr.mxu0 %v160
    %487 = vmatpush1.msra.mxu0 %v159
    %488 = vmatprep.subr.mxu0 %v164
    %489 = vmatpush1.msra.mxu0 %v163
    %490 = vmatprep.subr.mxu0 %v168
    %491 = vmatpush1.msra.mxu0 %v167
    %492 = vmatprep.subr.mxu0 0.0
    %493 = vmatpush1.msra.mxu0 0.0
    %494 = vmatprep.subr.mxu0 0.0
    %495 = vmatpush1.msra.mxu0 0.0
    %496 = vmatprep.subr.mxu0 0.0
    %497 = vmatpush1.msra.mxu0 0.0
    %498 = vmatprep.subr.mxu0 0.0
    %499 = vmatpush1.msra.mxu0 0.0
    %500 = vmatprep.subr.mxu0 0.0
    %501 = vmatpush1.msra.mxu0 0.0
    %502 = vmatprep.subr.mxu0 0.0
    %503 = vmatpush1.msra.mxu0 0.0
    %504 = vmatprep.subr.mxu0 0.0
    %505 = vmatpush1.msra.mxu0 0.0
    %506 = vmatprep.subr.mxu0 0.0
    %507 = vmatpush1.msra.mxu0 0.0
    %508 = vmatprep.subr.mxu0 0.0
    %509 = vmatpush1.msra.mxu0 0.0
    %510 = vmatprep.subr.mxu0 0.0
    %511 = vmatpush1.msra.mxu0 0.0
    %512 = vmatprep.subr.mxu0 0.0
    %513 = vmatpush1.msra.mxu0 0.0
    %514 = vmatprep.subr.mxu0 0.0
    %515 = vmatpush1.msra.mxu0 0.0
    %516 = vmatprep.subr.mxu0 0.0
    %517 = vmatpush1.msra.mxu0 0.0
    %518 = vmatprep.subr.mxu0 0.0
    %519 = vmatpush1.msra.mxu0 0.0
    %520 = vmatprep.subr.mxu0 0.0
    %521 = vmatpush1.msra.mxu0 0.0
    %522 = vmatprep.subr.mxu0 0.0
    %523 = vmatpush1.msra.mxu0 0.0
    %524 = vmatprep.mubr.f32.mxu0 0.0
    %525 = vmatmul.mubr.f32.gmra.mrb[0].mxu0 %v387
    %v526 = vpop.f32.mrb[0].mxu0
    %v527 = vadd.f32 0.0, %v526
    %v528 = vpop.f32.mrb[0].mxu0
    %v529 = vadd.f32 0.0, %v528
    %530 = vdwg.mxu0
    %v535 = vrot.slane %v456, 7
    %v536 = vrot.slane %v458, 7
    %v537 = vrot.slane %v527, 7
    %v538 = vrot.slane %v529, 7
    %v547 = vadd.f32 %v97, %v535
    %v548 = vadd.f32 %v98, %v536
    %v549 = vadd.f32 %v99, %v537
    %v550 = vadd.f32 %v100, %v538
    %v551 = vadd.f32 %v101, %v456
    %v552 = vadd.f32 %v102, %v458
    %v553 = vadd.f32 %v103, %v527
    %v554 = vadd.f32 %v104, %v529
    %v555 = vxor.u32 %v547, 2147483648
    %v556 = vxor.u32 %v548, 2147483648
    %v557 = vxor.u32 %v549, 2147483648
    %v558 = vxor.u32 %v551, 2147483648
    %v559 = vxor.u32 %v552, 2147483648
    %v560 = vxor.u32 %v553, 2147483648
    %v561 = vmul.f32 %v555, 1.442695
    %v562 = vpow.pop %v561
    %v563 = vmul.f32 %v556, 1.442695
    %v564 = vpow.pop %v563
    %v565 = vmul.f32 %v557, 1.442695
    %v566 = vpow.pop %v565
    %v567 = vmul.f32 %v558, 1.442695
    %v568 = vpow.pop %v567
    %v569 = vmul.f32 %v559, 1.442695
    %v570 = vpow.pop %v569
    %v571 = vmul.f32 %v560, 1.442695
    %v572 = vpow.pop %v571
    %v573 = vadd.f32 %v562, 1.0
    %v574 = vadd.f32 %v564, 1.0
    %v575 = vadd.f32 %v566, 1.0
    %v576 = vadd.f32 %v568, 1.0
    %v577 = vadd.f32 %v570, 1.0
    %v578 = vadd.f32 %v572, 1.0
    %v579 = vrcp.pop %v573
    %v580 = vmul.f32 1.0, %v579
    %v581 = vrcp.pop %v574
    %v582 = vmul.f32 1.0, %v581
    %v583 = vrcp.pop %v575
    %v584 = vmul.f32 1.0, %v583
    %v585 = vrcp.pop %v576
    %v586 = vmul.f32 1.0, %v585
    %v587 = vrcp.pop %v577
    %v588 = vmul.f32 1.0, %v587
    %v589 = vrcp.pop %v578
    %v590 = vmul.f32 1.0, %v589
    %v591 = vtanh.pop %v550
    %v592 = vtanh.pop %v554
    %v595 = vrot.slane %v377, 7
    %v596 = vrot.slane %v378, 7
    %v599 = vmul.f32 %v582, %v595
    %v600 = vmul.f32 %v588, %v596
    %v601 = vmul.f32 %v580, %v591
    %v602 = vmul.f32 %v586, %v592
    %v603 = vadd.f32 %v599, %v601
    %v604 = vadd.f32 %v600, %v602
    %v605 = vtanh.pop %v603
    %v606 = vtanh.pop %v604
    %v607 = vmul.f32 %v584, %v605
    %v608 = vmul.f32 %v590, %v606
    %v611 = vrot.slane %v607, 1
    %v612 = vsel %vm386, %v608, %v611
    %614 = vmatprep.subr.mxu0 %v106
    %615 = vmatpush1.msra.mxu0 %v105
    %616 = vmatprep.subr.mxu0 %v110
    %617 = vmatpush1.msra.mxu0 %v109
    %618 = vmatprep.subr.mxu0 %v114
    %619 = vmatpush1.msra.mxu0 %v113
    %620 = vmatprep.subr.mxu0 %v118
    %621 = vmatpush1.msra.mxu0 %v117
    %622 = vmatprep.subr.mxu0 %v122
    %623 = vmatpush1.msra.mxu0 %v121
    %624 = vmatprep.subr.mxu0 %v126
    %625 = vmatpush1.msra.mxu0 %v125
    %626 = vmatprep.subr.mxu0 %v130
    %627 = vmatpush1.msra.mxu0 %v129
    %628 = vmatprep.subr.mxu0 %v134
    %629 = vmatpush1.msra.mxu0 %v133
    %630 = vmatprep.subr.mxu0 %v138
    %631 = vmatpush1.msra.mxu0 %v137
    %632 = vmatprep.subr.mxu0 %v142
    %633 = vmatpush1.msra.mxu0 %v141
    %634 = vmatprep.subr.mxu0 %v146
    %635 = vmatpush1.msra.mxu0 %v145
    %636 = vmatprep.subr.mxu0 %v150
    %637 = vmatpush1.msra.mxu0 %v149
    %638 = vmatprep.subr.mxu0 %v154
    %639 = vmatpush1.msra.mxu0 %v153
    %640 = vmatprep.subr.mxu0 %v158
    %641 = vmatpush1.msra.mxu0 %v157
    %642 = vmatprep.subr.mxu0 %v162
    %643 = vmatpush1.msra.mxu0 %v161
    %644 = vmatprep.subr.mxu0 %v166
    %645 = vmatpush1.msra.mxu0 %v165
    %646 = vmatprep.subr.mxu0 0.0
    %647 = vmatpush1.msra.mxu0 0.0
    %648 = vmatprep.subr.mxu0 0.0
    %649 = vmatpush1.msra.mxu0 0.0
    %650 = vmatprep.subr.mxu0 0.0
    %651 = vmatpush1.msra.mxu0 0.0
    %652 = vmatprep.subr.mxu0 0.0
    %653 = vmatpush1.msra.mxu0 0.0
    %654 = vmatprep.subr.mxu0 0.0
    %655 = vmatpush1.msra.mxu0 0.0
    %656 = vmatprep.subr.mxu0 0.0
    %657 = vmatpush1.msra.mxu0 0.0
    %658 = vmatprep.subr.mxu0 0.0
    %659 = vmatpush1.msra.mxu0 0.0
    %660 = vmatprep.subr.mxu0 0.0
    %661 = vmatpush1.msra.mxu0 0.0
    %662 = vmatprep.subr.mxu0 0.0
    %663 = vmatpush1.msra.mxu0 0.0
    %664 = vmatprep.subr.mxu0 0.0
    %665 = vmatpush1.msra.mxu0 0.0
    %666 = vmatprep.subr.mxu0 0.0
    %667 = vmatpush1.msra.mxu0 0.0
    %668 = vmatprep.subr.mxu0 0.0
    %669 = vmatpush1.msra.mxu0 0.0
    %670 = vmatprep.subr.mxu0 0.0
    %671 = vmatpush1.msra.mxu0 0.0
    %672 = vmatprep.subr.mxu0 0.0
    %673 = vmatpush1.msra.mxu0 0.0
    %674 = vmatprep.subr.mxu0 0.0
    %675 = vmatpush1.msra.mxu0 0.0
    %676 = vmatprep.subr.mxu0 0.0
    %677 = vmatpush1.msra.mxu0 0.0
    %678 = vmatprep.mubr.f32.mxu0 0.0
    %679 = vmatmul.mubr.f32.gmra.mrb[0].mxu0 %v612
    %v680 = vpop.f32.mrb[0].mxu0
    %v681 = vadd.f32 0.0, %v680
    %v682 = vpop.f32.mrb[0].mxu0
    %v683 = vadd.f32 0.0, %v682
    %684 = vdwg.mxu0
    %685 = vmatprep.subr.mxu0 %v108
    %686 = vmatpush1.msra.mxu0 %v107
    %687 = vmatprep.subr.mxu0 %v112
    %688 = vmatpush1.msra.mxu0 %v111
    %689 = vmatprep.subr.mxu0 %v116
    %690 = vmatpush1.msra.mxu0 %v115
    %691 = vmatprep.subr.mxu0 %v120
    %692 = vmatpush1.msra.mxu0 %v119
    %693 = vmatprep.subr.mxu0 %v124
    %694 = vmatpush1.msra.mxu0 %v123
    %695 = vmatprep.subr.mxu0 %v128
    %696 = vmatpush1.msra.mxu0 %v127
    %697 = vmatprep.subr.mxu0 %v132
    %698 = vmatpush1.msra.mxu0 %v131
    %699 = vmatprep.subr.mxu0 %v136
    %700 = vmatpush1.msra.mxu0 %v135
    %701 = vmatprep.subr.mxu0 %v140
    %702 = vmatpush1.msra.mxu0 %v139
    %703 = vmatprep.subr.mxu0 %v144
    %704 = vmatpush1.msra.mxu0 %v143
    %705 = vmatprep.subr.mxu0 %v148
    %706 = vmatpush1.msra.mxu0 %v147
    %707 = vmatprep.subr.mxu0 %v152
    %708 = vmatpush1.msra.mxu0 %v151
    %709 = vmatprep.subr.mxu0 %v156
    %710 = vmatpush1.msra.mxu0 %v155
    %711 = vmatprep.subr.mxu0 %v160
    %712 = vmatpush1.msra.mxu0 %v159
    %713 = vmatprep.subr.mxu0 %v164
    %714 = vmatpush1.msra.mxu0 %v163
    %715 = vmatprep.subr.mxu0 %v168
    %716 = vmatpush1.msra.mxu0 %v167
    %717 = vmatprep.subr.mxu0 0.0
    %718 = vmatpush1.msra.mxu0 0.0
    %719 = vmatprep.subr.mxu0 0.0
    %720 = vmatpush1.msra.mxu0 0.0
    %721 = vmatprep.subr.mxu0 0.0
    %722 = vmatpush1.msra.mxu0 0.0
    %723 = vmatprep.subr.mxu0 0.0
    %724 = vmatpush1.msra.mxu0 0.0
    %725 = vmatprep.subr.mxu0 0.0
    %726 = vmatpush1.msra.mxu0 0.0
    %727 = vmatprep.subr.mxu0 0.0
    %728 = vmatpush1.msra.mxu0 0.0
    %729 = vmatprep.subr.mxu0 0.0
    %730 = vmatpush1.msra.mxu0 0.0
    %731 = vmatprep.subr.mxu0 0.0
    %732 = vmatpush1.msra.mxu0 0.0
    %733 = vmatprep.subr.mxu0 0.0
    %734 = vmatpush1.msra.mxu0 0.0
    %735 = vmatprep.subr.mxu0 0.0
    %736 = vmatpush1.msra.mxu0 0.0
    %737 = vmatprep.subr.mxu0 0.0
    %738 = vmatpush1.msra.mxu0 0.0
    %739 = vmatprep.subr.mxu0 0.0
    %740 = vmatpush1.msra.mxu0 0.0
    %741 = vmatprep.subr.mxu0 0.0
    %742 = vmatpush1.msra.mxu0 0.0
    %743 = vmatprep.subr.mxu0 0.0
    %744 = vmatpush1.msra.mxu0 0.0
    %745 = vmatprep.subr.mxu0 0.0
    %746 = vmatpush1.msra.mxu0 0.0
    %747 = vmatprep.subr.mxu0 0.0
    %748 = vmatpush1.msra.mxu0 0.0
    %749 = vmatprep.mubr.f32.mxu0 0.0
    %750 = vmatmul.mubr.f32.gmra.mrb[0].mxu0 %v612
    %v751 = vpop.f32.mrb[0].mxu0
    %v752 = vadd.f32 0.0, %v751
    %v753 = vpop.f32.mrb[0].mxu0
    %v754 = vadd.f32 0.0, %v753
    %755 = vdwg.mxu0
    %v760 = vrot.slane %v681, 6
    %v761 = vrot.slane %v683, 6
    %v762 = vrot.slane %v752, 6
    %v763 = vrot.slane %v754, 6
    %v764 = vrot.slane %v681, 7
    %v765 = vrot.slane %v683, 7
    %v766 = vrot.slane %v752, 7
    %v767 = vrot.slane %v754, 7
    %v776 = vadd.f32 %v97, %v760
    %v777 = vadd.f32 %v98, %v761
    %v778 = vadd.f32 %v99, %v762
    %v779 = vadd.f32 %v100, %v763
    %v780 = vadd.f32 %v101, %v764
    %v781 = vadd.f32 %v102, %v765
    %v782 = vadd.f32 %v103, %v766
    %v783 = vadd.f32 %v104, %v767
    %v784 = vxor.u32 %v776, 2147483648
    %v785 = vxor.u32 %v777, 2147483648
    %v786 = vxor.u32 %v778, 2147483648
    %v787 = vxor.u32 %v780, 2147483648
    %v788 = vxor.u32 %v781, 2147483648
    %v789 = vxor.u32 %v782, 2147483648
    %v790 = vmul.f32 %v784, 1.442695
    %v791 = vpow.pop %v790
    %v792 = vmul.f32 %v785, 1.442695
    %v793 = vpow.pop %v792
    %v794 = vmul.f32 %v786, 1.442695
    %v795 = vpow.pop %v794
    %v796 = vmul.f32 %v787, 1.442695
    %v797 = vpow.pop %v796
    %v798 = vmul.f32 %v788, 1.442695
    %v799 = vpow.pop %v798
    %v800 = vmul.f32 %v789, 1.442695
    %v801 = vpow.pop %v800
    %v802 = vadd.f32 %v791, 1.0
    %v803 = vadd.f32 %v793, 1.0
    %v804 = vadd.f32 %v795, 1.0
    %v805 = vadd.f32 %v797, 1.0
    %v806 = vadd.f32 %v799, 1.0
    %v807 = vadd.f32 %v801, 1.0
    %v808 = vrcp.pop %v802
    %v809 = vmul.f32 1.0, %v808
    %v810 = vrcp.pop %v803
    %v811 = vmul.f32 1.0, %v810
    %v812 = vrcp.pop %v804
    %v813 = vmul.f32 1.0, %v812
    %v814 = vrcp.pop %v805
    %v815 = vmul.f32 1.0, %v814
    %v816 = vrcp.pop %v806
    %v817 = vmul.f32 1.0, %v816
    %v818 = vrcp.pop %v807
    %v819 = vmul.f32 1.0, %v818
    %v820 = vtanh.pop %v779
    %v821 = vtanh.pop %v783
    %v824 = vrot.slane %v603, 7
    %v825 = vrot.slane %v604, 7
    %v828 = vmul.f32 %v811, %v824
    %v829 = vmul.f32 %v817, %v825
    %v830 = vmul.f32 %v809, %v820
    %v831 = vmul.f32 %v815, %v821
    %v832 = vadd.f32 %v828, %v830
    %v833 = vadd.f32 %v829, %v831
    %v834 = vtanh.pop %v832
    %v835 = vtanh.pop %v833
    %v836 = vmul.f32 %v813, %v834
    %v837 = vmul.f32 %v819, %v835
    %v840 = vrot.slane %v836, 2
    %v841 = vrot.slane %v837, 1
    %v842 = vsel %vm386, %v841, %v840
    %844 = vmatprep.subr.mxu0 %v106
    %845 = vmatpush1.msra.mxu0 %v105
    %846 = vmatprep.subr.mxu0 %v110
    %847 = vmatpush1.msra.mxu0 %v109
    %848 = vmatprep.subr.mxu0 %v114
    %849 = vmatpush1.msra.mxu0 %v113
    %850 = vmatprep.subr.mxu0 %v118
    %851 = vmatpush1.msra.mxu0 %v117
    %852 = vmatprep.subr.mxu0 %v122
    %853 = vmatpush1.msra.mxu0 %v121
    %854 = vmatprep.subr.mxu0 %v126
    %855 = vmatpush1.msra.mxu0 %v125
    %856 = vmatprep.subr.mxu0 %v130
    %857 = vmatpush1.msra.mxu0 %v129
    %858 = vmatprep.subr.mxu0 %v134
    %859 = vmatpush1.msra.mxu0 %v133
    %860 = vmatprep.subr.mxu0 %v138
    %861 = vmatpush1.msra.mxu0 %v137
    %862 = vmatprep.subr.mxu0 %v142
    %863 = vmatpush1.msra.mxu0 %v141
    %864 = vmatprep.subr.mxu0 %v146
    %865 = vmatpush1.msra.mxu0 %v145
    %866 = vmatprep.subr.mxu0 %v150
    %867 = vmatpush1.msra.mxu0 %v149
    %868 = vmatprep.subr.mxu0 %v154
    %869 = vmatpush1.msra.mxu0 %v153
    %870 = vmatprep.subr.mxu0 %v158
    %871 = vmatpush1.msra.mxu0 %v157
    %872 = vmatprep.subr.mxu0 %v162
    %873 = vmatpush1.msra.mxu0 %v161
    %874 = vmatprep.subr.mxu0 %v166
    %875 = vmatpush1.msra.mxu0 %v165
    %876 = vmatprep.subr.mxu0 0.0
    %877 = vmatpush1.msra.mxu0 0.0
    %878 = vmatprep.subr.mxu0 0.0
    %879 = vmatpush1.msra.mxu0 0.0
    %880 = vmatprep.subr.mxu0 0.0
    %881 = vmatpush1.msra.mxu0 0.0
    %882 = vmatprep.subr.mxu0 0.0
    %883 = vmatpush1.msra.mxu0 0.0
    %884 = vmatprep.subr.mxu0 0.0
    %885 = vmatpush1.msra.mxu0 0.0
    %886 = vmatprep.subr.mxu0 0.0
    %887 = vmatpush1.msra.mxu0 0.0
    %888 = vmatprep.subr.mxu0 0.0
    %889 = vmatpush1.msra.mxu0 0.0
    %890 = vmatprep.subr.mxu0 0.0
    %891 = vmatpush1.msra.mxu0 0.0
    %892 = vmatprep.subr.mxu0 0.0
    %893 = vmatpush1.msra.mxu0 0.0
    %894 = vmatprep.subr.mxu0 0.0
    %895 = vmatpush1.msra.mxu0 0.0
    %896 = vmatprep.subr.mxu0 0.0
    %897 = vmatpush1.msra.mxu0 0.0
    %898 = vmatprep.subr.mxu0 0.0
    %899 = vmatpush1.msra.mxu0 0.0
    %900 = vmatprep.subr.mxu0 0.0
    %901 = vmatpush1.msra.mxu0 0.0
    %902 = vmatprep.subr.mxu0 0.0
    %903 = vmatpush1.msra.mxu0 0.0
    %904 = vmatprep.subr.mxu0 0.0
    %905 = vmatpush1.msra.mxu0 0.0
    %906 = vmatprep.subr.mxu0 0.0
    %907 = vmatpush1.msra.mxu0 0.0
    %908 = vmatprep.mubr.f32.mxu0 0.0
    %909 = vmatmul.mubr.f32.gmra.mrb[0].mxu0 %v842
    %v910 = vpop.f32.mrb[0].mxu0
    %v911 = vadd.f32 0.0, %v910
    %v912 = vpop.f32.mrb[0].mxu0
    %v913 = vadd.f32 0.0, %v912
    %914 = vdwg.mxu0
    %915 = vmatprep.subr.mxu0 %v108
    %916 = vmatpush1.msra.mxu0 %v107
    %917 = vmatprep.subr.mxu0 %v112
    %918 = vmatpush1.msra.mxu0 %v111
    %919 = vmatprep.subr.mxu0 %v116
    %920 = vmatpush1.msra.mxu0 %v115
    %921 = vmatprep.subr.mxu0 %v120
    %922 = vmatpush1.msra.mxu0 %v119
    %923 = vmatprep.subr.mxu0 %v124
    %924 = vmatpush1.msra.mxu0 %v123
    %925 = vmatprep.subr.mxu0 %v128
    %926 = vmatpush1.msra.mxu0 %v127
    %927 = vmatprep.subr.mxu0 %v132
    %928 = vmatpush1.msra.mxu0 %v131
    %929 = vmatprep.subr.mxu0 %v136
    %930 = vmatpush1.msra.mxu0 %v135
    %931 = vmatprep.subr.mxu0 %v140
    %932 = vmatpush1.msra.mxu0 %v139
    %933 = vmatprep.subr.mxu0 %v144
    %934 = vmatpush1.msra.mxu0 %v143
    %935 = vmatprep.subr.mxu0 %v148
    %936 = vmatpush1.msra.mxu0 %v147
    %937 = vmatprep.subr.mxu0 %v152
    %938 = vmatpush1.msra.mxu0 %v151
    %939 = vmatprep.subr.mxu0 %v156
    %940 = vmatpush1.msra.mxu0 %v155
    %941 = vmatprep.subr.mxu0 %v160
    %942 = vmatpush1.msra.mxu0 %v159
    %943 = vmatprep.subr.mxu0 %v164
    %944 = vmatpush1.msra.mxu0 %v163
    %945 = vmatprep.subr.mxu0 %v168
    %946 = vmatpush1.msra.mxu0 %v167
    %947 = vmatprep.subr.mxu0 0.0
    %948 = vmatpush1.msra.mxu0 0.0
    %949 = vmatprep.subr.mxu0 0.0
    %950 = vmatpush1.msra.mxu0 0.0
    %951 = vmatprep.subr.mxu0 0.0
    %952 = vmatpush1.msra.mxu0 0.0
    %953 = vmatprep.subr.mxu0 0.0
    %954 = vmatpush1.msra.mxu0 0.0
    %955 = vmatprep.subr.mxu0 0.0
    %956 = vmatpush1.msra.mxu0 0.0
    %957 = vmatprep.subr.mxu0 0.0
    %958 = vmatpush1.msra.mxu0 0.0
    %959 = vmatprep.subr.mxu0 0.0
    %960 = vmatpush1.msra.mxu0 0.0
    %961 = vmatprep.subr.mxu0 0.0
    %962 = vmatpush1.msra.mxu0 0.0
    %963 = vmatprep.subr.mxu0 0.0
    %964 = vmatpush1.msra.mxu0 0.0
    %965 = vmatprep.subr.mxu0 0.0
    %966 = vmatpush1.msra.mxu0 0.0
    %967 = vmatprep.subr.mxu0 0.0
    %968 = vmatpush1.msra.mxu0 0.0
    %969 = vmatprep.subr.mxu0 0.0
    %970 = vmatpush1.msra.mxu0 0.0
    %971 = vmatprep.subr.mxu0 0.0
    %972 = vmatpush1.msra.mxu0 0.0
    %973 = vmatprep.subr.mxu0 0.0
    %974 = vmatpush1.msra.mxu0 0.0
    %975 = vmatprep.subr.mxu0 0.0
    %976 = vmatpush1.msra.mxu0 0.0
    %977 = vmatprep.subr.mxu0 0.0
    %978 = vmatpush1.msra.mxu0 0.0
    %979 = vmatprep.mubr.f32.mxu0 0.0
    %980 = vmatmul.mubr.f32.gmra.mrb[0].mxu0 %v842
    %v981 = vpop.f32.mrb[0].mxu0
    %v982 = vadd.f32 0.0, %v981
    %v983 = vpop.f32.mrb[0].mxu0
    %v984 = vadd.f32 0.0, %v983
    %985 = vdwg.mxu0
    %v990 = vrot.slane %v911, 5
    %v991 = vrot.slane %v913, 5
    %v992 = vrot.slane %v982, 5
    %v993 = vrot.slane %v984, 5
    %v994 = vrot.slane %v911, 6
    %v995 = vrot.slane %v913, 6
    %v996 = vrot.slane %v982, 6
    %v997 = vrot.slane %v984, 6
    %v1006 = vadd.f32 %v97, %v990
    %v1007 = vadd.f32 %v98, %v991
    %v1008 = vadd.f32 %v99, %v992
    %v1009 = vadd.f32 %v100, %v993
    %v1010 = vadd.f32 %v101, %v994
    %v1011 = vadd.f32 %v102, %v995
    %v1012 = vadd.f32 %v103, %v996
    %v1013 = vadd.f32 %v104, %v997
    %v1014 = vxor.u32 %v1006, 2147483648
    %v1015 = vxor.u32 %v1007, 2147483648
    %v1016 = vxor.u32 %v1008, 2147483648
    %v1017 = vxor.u32 %v1010, 2147483648
    %v1018 = vxor.u32 %v1011, 2147483648
    %v1019 = vxor.u32 %v1012, 2147483648
    %v1020 = vmul.f32 %v1014, 1.442695
    %v1021 = vpow.pop %v1020
    %v1022 = vmul.f32 %v1015, 1.442695
    %v1023 = vpow.pop %v1022
    %v1024 = vmul.f32 %v1016, 1.442695
    %v1025 = vpow.pop %v1024
    %v1026 = vmul.f32 %v1017, 1.442695
    %v1027 = vpow.pop %v1026
    %v1028 = vmul.f32 %v1018, 1.442695
    %v1029 = vpow.pop %v1028
    %v1030 = vmul.f32 %v1019, 1.442695
    %v1031 = vpow.pop %v1030
    %v1032 = vadd.f32 %v1021, 1.0
    %v1033 = vadd.f32 %v1023, 1.0
    %v1034 = vadd.f32 %v1025, 1.0
    %v1035 = vadd.f32 %v1027, 1.0
    %v1036 = vadd.f32 %v1029, 1.0
    %v1037 = vadd.f32 %v1031, 1.0
    %v1038 = vrcp.pop %v1032
    %v1039 = vmul.f32 1.0, %v1038
    %v1040 = vrcp.pop %v1033
    %v1041 = vmul.f32 1.0, %v1040
    %v1042 = vrcp.pop %v1034
    %v1043 = vmul.f32 1.0, %v1042
    %v1044 = vrcp.pop %v1035
    %v1045 = vmul.f32 1.0, %v1044
    %v1046 = vrcp.pop %v1036
    %v1047 = vmul.f32 1.0, %v1046
    %v1048 = vrcp.pop %v1037
    %v1049 = vmul.f32 1.0, %v1048
    %v1050 = vtanh.pop %v1009
    %v1051 = vtanh.pop %v1013
    %v1054 = vrot.slane %v832, 7
    %v1055 = vrot.slane %v833, 7
    %v1058 = vmul.f32 %v1041, %v1054
    %v1059 = vmul.f32 %v1047, %v1055
    %v1060 = vmul.f32 %v1039, %v1050
    %v1061 = vmul.f32 %v1045, %v1051
    %v1062 = vadd.f32 %v1058, %v1060
    %v1063 = vadd.f32 %v1059, %v1061
    %v1064 = vtanh.pop %v1062
    %v1065 = vtanh.pop %v1063
    %v1066 = vmul.f32 %v1043, %v1064
    %v1067 = vmul.f32 %v1049, %v1065
    %v1070 = vrot.slane %v1066, 3
    %v1071 = vrot.slane %v1067, 2
    %v1072 = vsel %vm386, %v1071, %v1070
    %1074 = vmatprep.subr.mxu0 %v106
    %1075 = vmatpush1.msra.mxu0 %v105
    %1076 = vmatprep.subr.mxu0 %v110
    %1077 = vmatpush1.msra.mxu0 %v109
    %1078 = vmatprep.subr.mxu0 %v114
    %1079 = vmatpush1.msra.mxu0 %v113
    %1080 = vmatprep.subr.mxu0 %v118
    %1081 = vmatpush1.msra.mxu0 %v117
    %1082 = vmatprep.subr.mxu0 %v122
    %1083 = vmatpush1.msra.mxu0 %v121
    %1084 = vmatprep.subr.mxu0 %v126
    %1085 = vmatpush1.msra.mxu0 %v125
    %1086 = vmatprep.subr.mxu0 %v130
    %1087 = vmatpush1.msra.mxu0 %v129
    %1088 = vmatprep.subr.mxu0 %v134
    %1089 = vmatpush1.msra.mxu0 %v133
    %1090 = vmatprep.subr.mxu0 %v138
    %1091 = vmatpush1.msra.mxu0 %v137
    %1092 = vmatprep.subr.mxu0 %v142
    %1093 = vmatpush1.msra.mxu0 %v141
    %1094 = vmatprep.subr.mxu0 %v146
    %1095 = vmatpush1.msra.mxu0 %v145
    %1096 = vmatprep.subr.mxu0 %v150
    %1097 = vmatpush1.msra.mxu0 %v149
    %1098 = vmatprep.subr.mxu0 %v154
    %1099 = vmatpush1.msra.mxu0 %v153
    %1100 = vmatprep.subr.mxu0 %v158
    %1101 = vmatpush1.msra.mxu0 %v157
    %1102 = vmatprep.subr.mxu0 %v162
    %1103 = vmatpush1.msra.mxu0 %v161
    %1104 = vmatprep.subr.mxu0 %v166
    %1105 = vmatpush1.msra.mxu0 %v165
    %1106 = vmatprep.subr.mxu0 0.0
    %1107 = vmatpush1.msra.mxu0 0.0
    %1108 = vmatprep.subr.mxu0 0.0
    %1109 = vmatpush1.msra.mxu0 0.0
    %1110 = vmatprep.subr.mxu0 0.0
    %1111 = vmatpush1.msra.mxu0 0.0
    %1112 = vmatprep.subr.mxu0 0.0
    %1113 = vmatpush1.msra.mxu0 0.0
    %1114 = vmatprep.subr.mxu0 0.0
    %1115 = vmatpush1.msra.mxu0 0.0
    %1116 = vmatprep.subr.mxu0 0.0
    %1117 = vmatpush1.msra.mxu0 0.0
    %1118 = vmatprep.subr.mxu0 0.0
    %1119 = vmatpush1.msra.mxu0 0.0
    %1120 = vmatprep.subr.mxu0 0.0
    %1121 = vmatpush1.msra.mxu0 0.0
    %1122 = vmatprep.subr.mxu0 0.0
    %1123 = vmatpush1.msra.mxu0 0.0
    %1124 = vmatprep.subr.mxu0 0.0
    %1125 = vmatpush1.msra.mxu0 0.0
    %1126 = vmatprep.subr.mxu0 0.0
    %1127 = vmatpush1.msra.mxu0 0.0
    %1128 = vmatprep.subr.mxu0 0.0
    %1129 = vmatpush1.msra.mxu0 0.0
    %1130 = vmatprep.subr.mxu0 0.0
    %1131 = vmatpush1.msra.mxu0 0.0
    %1132 = vmatprep.subr.mxu0 0.0
    %1133 = vmatpush1.msra.mxu0 0.0
    %1134 = vmatprep.subr.mxu0 0.0
    %1135 = vmatpush1.msra.mxu0 0.0
    %1136 = vmatprep.subr.mxu0 0.0
    %1137 = vmatpush1.msra.mxu0 0.0
    %1138 = vmatprep.mubr.f32.mxu0 0.0
    %1139 = vmatmul.mubr.f32.gmra.mrb[0].mxu0 %v1072
    %v1140 = vpop.f32.mrb[0].mxu0
    %v1141 = vadd.f32 0.0, %v1140
    %v1142 = vpop.f32.mrb[0].mxu0
    %v1143 = vadd.f32 0.0, %v1142
    %1144 = vdwg.mxu0
    %1145 = vmatprep.subr.mxu0 %v108
    %1146 = vmatpush1.msra.mxu0 %v107
    %1147 = vmatprep.subr.mxu0 %v112
    %1148 = vmatpush1.msra.mxu0 %v111
    %1149 = vmatprep.subr.mxu0 %v116
    %1150 = vmatpush1.msra.mxu0 %v115
    %1151 = vmatprep.subr.mxu0 %v120
    %1152 = vmatpush1.msra.mxu0 %v119
    %1153 = vmatprep.subr.mxu0 %v124
    %1154 = vmatpush1.msra.mxu0 %v123
    %1155 = vmatprep.subr.mxu0 %v128
    %1156 = vmatpush1.msra.mxu0 %v127
    %1157 = vmatprep.subr.mxu0 %v132
    %1158 = vmatpush1.msra.mxu0 %v131
    %1159 = vmatprep.subr.mxu0 %v136
    %1160 = vmatpush1.msra.mxu0 %v135
    %1161 = vmatprep.subr.mxu0 %v140
    %1162 = vmatpush1.msra.mxu0 %v139
    %1163 = vmatprep.subr.mxu0 %v144
    %1164 = vmatpush1.msra.mxu0 %v143
    %1165 = vmatprep.subr.mxu0 %v148
    %1166 = vmatpush1.msra.mxu0 %v147
    %1167 = vmatprep.subr.mxu0 %v152
    %1168 = vmatpush1.msra.mxu0 %v151
    %1169 = vmatprep.subr.mxu0 %v156
    %1170 = vmatpush1.msra.mxu0 %v155
    %1171 = vmatprep.subr.mxu0 %v160
    %1172 = vmatpush1.msra.mxu0 %v159
    %1173 = vmatprep.subr.mxu0 %v164
    %1174 = vmatpush1.msra.mxu0 %v163
    %1175 = vmatprep.subr.mxu0 %v168
    %1176 = vmatpush1.msra.mxu0 %v167
    %1177 = vmatprep.subr.mxu0 0.0
    %1178 = vmatpush1.msra.mxu0 0.0
    %1179 = vmatprep.subr.mxu0 0.0
    %1180 = vmatpush1.msra.mxu0 0.0
    %1181 = vmatprep.subr.mxu0 0.0
    %1182 = vmatpush1.msra.mxu0 0.0
    %1183 = vmatprep.subr.mxu0 0.0
    %1184 = vmatpush1.msra.mxu0 0.0
    %1185 = vmatprep.subr.mxu0 0.0
    %1186 = vmatpush1.msra.mxu0 0.0
    %1187 = vmatprep.subr.mxu0 0.0
    %1188 = vmatpush1.msra.mxu0 0.0
    %1189 = vmatprep.subr.mxu0 0.0
    %1190 = vmatpush1.msra.mxu0 0.0
    %1191 = vmatprep.subr.mxu0 0.0
    %1192 = vmatpush1.msra.mxu0 0.0
    %1193 = vmatprep.subr.mxu0 0.0
    %1194 = vmatpush1.msra.mxu0 0.0
    %1195 = vmatprep.subr.mxu0 0.0
    %1196 = vmatpush1.msra.mxu0 0.0
    %1197 = vmatprep.subr.mxu0 0.0
    %1198 = vmatpush1.msra.mxu0 0.0
    %1199 = vmatprep.subr.mxu0 0.0
    %1200 = vmatpush1.msra.mxu0 0.0
    %1201 = vmatprep.subr.mxu0 0.0
    %1202 = vmatpush1.msra.mxu0 0.0
    %1203 = vmatprep.subr.mxu0 0.0
    %1204 = vmatpush1.msra.mxu0 0.0
    %1205 = vmatprep.subr.mxu0 0.0
    %1206 = vmatpush1.msra.mxu0 0.0
    %1207 = vmatprep.subr.mxu0 0.0
    %1208 = vmatpush1.msra.mxu0 0.0
    %1209 = vmatprep.mubr.f32.mxu0 0.0
    %1210 = vmatmul.mubr.f32.gmra.mrb[0].mxu0 %v1072
    %v1211 = vpop.f32.mrb[0].mxu0
    %v1212 = vadd.f32 0.0, %v1211
    %v1213 = vpop.f32.mrb[0].mxu0
    %v1214 = vadd.f32 0.0, %v1213
    %1215 = vdwg.mxu0
    %v1220 = vrot.slane %v1141, 4
    %v1221 = vrot.slane %v1143, 4
    %v1222 = vrot.slane %v1212, 4
    %v1223 = vrot.slane %v1214, 4
    %v1224 = vrot.slane %v1141, 5
    %v1225 = vrot.slane %v1143, 5
    %v1226 = vrot.slane %v1212, 5
    %v1227 = vrot.slane %v1214, 5
    %v1236 = vadd.f32 %v97, %v1220
    %v1237 = vadd.f32 %v98, %v1221
    %v1238 = vadd.f32 %v99, %v1222
    %v1239 = vadd.f32 %v100, %v1223
    %v1240 = vadd.f32 %v101, %v1224
    %v1241 = vadd.f32 %v102, %v1225
    %v1242 = vadd.f32 %v103, %v1226
    %v1243 = vadd.f32 %v104, %v1227
    %v1244 = vxor.u32 %v1236, 2147483648
    %v1245 = vxor.u32 %v1237, 2147483648
    %v1246 = vxor.u32 %v1238, 2147483648
    %v1247 = vxor.u32 %v1240, 2147483648
    %v1248 = vxor.u32 %v1241, 2147483648
    %v1249 = vxor.u32 %v1242, 2147483648
    %v1250 = vmul.f32 %v1244, 1.442695
    %v1251 = vpow.pop %v1250
    %v1252 = vmul.f32 %v1245, 1.442695
    %v1253 = vpow.pop %v1252
    %v1254 = vmul.f32 %v1246, 1.442695
    %v1255 = vpow.pop %v1254
    %v1256 = vmul.f32 %v1247, 1.442695
    %v1257 = vpow.pop %v1256
    %v1258 = vmul.f32 %v1248, 1.442695
    %v1259 = vpow.pop %v1258
    %v1260 = vmul.f32 %v1249, 1.442695
    %v1261 = vpow.pop %v1260
    %v1262 = vadd.f32 %v1251, 1.0
    %v1263 = vadd.f32 %v1253, 1.0
    %v1264 = vadd.f32 %v1255, 1.0
    %v1265 = vadd.f32 %v1257, 1.0
    %v1266 = vadd.f32 %v1259, 1.0
    %v1267 = vadd.f32 %v1261, 1.0
    %v1268 = vrcp.pop %v1262
    %v1269 = vmul.f32 1.0, %v1268
    %v1270 = vrcp.pop %v1263
    %v1271 = vmul.f32 1.0, %v1270
    %v1272 = vrcp.pop %v1264
    %v1273 = vmul.f32 1.0, %v1272
    %v1274 = vrcp.pop %v1265
    %v1275 = vmul.f32 1.0, %v1274
    %v1276 = vrcp.pop %v1266
    %v1277 = vmul.f32 1.0, %v1276
    %v1278 = vrcp.pop %v1267
    %v1279 = vmul.f32 1.0, %v1278
    %v1280 = vtanh.pop %v1239
    %v1281 = vtanh.pop %v1243
    %v1284 = vrot.slane %v1062, 7
    %v1285 = vrot.slane %v1063, 7
    %v1288 = vmul.f32 %v1271, %v1284
    %v1289 = vmul.f32 %v1277, %v1285
    %v1290 = vmul.f32 %v1269, %v1280
    %v1291 = vmul.f32 %v1275, %v1281
    %v1292 = vadd.f32 %v1288, %v1290
    %v1293 = vadd.f32 %v1289, %v1291
    %v1294 = vtanh.pop %v1292
    %v1295 = vtanh.pop %v1293
    %v1296 = vmul.f32 %v1273, %v1294
    %v1297 = vmul.f32 %v1279, %v1295
    %v1300 = vrot.slane %v1296, 4
    %v1301 = vrot.slane %v1297, 3
    %v1302 = vsel %vm386, %v1301, %v1300
    %1304 = vmatprep.subr.mxu0 %v106
    %1305 = vmatpush1.msra.mxu0 %v105
    %1306 = vmatprep.subr.mxu0 %v110
    %1307 = vmatpush1.msra.mxu0 %v109
    %1308 = vmatprep.subr.mxu0 %v114
    %1309 = vmatpush1.msra.mxu0 %v113
    %1310 = vmatprep.subr.mxu0 %v118
    %1311 = vmatpush1.msra.mxu0 %v117
    %1312 = vmatprep.subr.mxu0 %v122
    %1313 = vmatpush1.msra.mxu0 %v121
    %1314 = vmatprep.subr.mxu0 %v126
    %1315 = vmatpush1.msra.mxu0 %v125
    %1316 = vmatprep.subr.mxu0 %v130
    %1317 = vmatpush1.msra.mxu0 %v129
    %1318 = vmatprep.subr.mxu0 %v134
    %1319 = vmatpush1.msra.mxu0 %v133
    %1320 = vmatprep.subr.mxu0 %v138
    %1321 = vmatpush1.msra.mxu0 %v137
    %1322 = vmatprep.subr.mxu0 %v142
    %1323 = vmatpush1.msra.mxu0 %v141
    %1324 = vmatprep.subr.mxu0 %v146
    %1325 = vmatpush1.msra.mxu0 %v145
    %1326 = vmatprep.subr.mxu0 %v150
    %1327 = vmatpush1.msra.mxu0 %v149
    %1328 = vmatprep.subr.mxu0 %v154
    %1329 = vmatpush1.msra.mxu0 %v153
    %1330 = vmatprep.subr.mxu0 %v158
    %1331 = vmatpush1.msra.mxu0 %v157
    %1332 = vmatprep.subr.mxu0 %v162
    %1333 = vmatpush1.msra.mxu0 %v161
    %1334 = vmatprep.subr.mxu0 %v166
    %1335 = vmatpush1.msra.mxu0 %v165
    %1336 = vmatprep.subr.mxu0 0.0
    %1337 = vmatpush1.msra.mxu0 0.0
    %1338 = vmatprep.subr.mxu0 0.0
    %1339 = vmatpush1.msra.mxu0 0.0
    %1340 = vmatprep.subr.mxu0 0.0
    %1341 = vmatpush1.msra.mxu0 0.0
    %1342 = vmatprep.subr.mxu0 0.0
    %1343 = vmatpush1.msra.mxu0 0.0
    %1344 = vmatprep.subr.mxu0 0.0
    %1345 = vmatpush1.msra.mxu0 0.0
    %1346 = vmatprep.subr.mxu0 0.0
    %1347 = vmatpush1.msra.mxu0 0.0
    %1348 = vmatprep.subr.mxu0 0.0
    %1349 = vmatpush1.msra.mxu0 0.0
    %1350 = vmatprep.subr.mxu0 0.0
    %1351 = vmatpush1.msra.mxu0 0.0
    %1352 = vmatprep.subr.mxu0 0.0
    %1353 = vmatpush1.msra.mxu0 0.0
    %1354 = vmatprep.subr.mxu0 0.0
    %1355 = vmatpush1.msra.mxu0 0.0
    %1356 = vmatprep.subr.mxu0 0.0
    %1357 = vmatpush1.msra.mxu0 0.0
    %1358 = vmatprep.subr.mxu0 0.0
    %1359 = vmatpush1.msra.mxu0 0.0
    %1360 = vmatprep.subr.mxu0 0.0
    %1361 = vmatpush1.msra.mxu0 0.0
    %1362 = vmatprep.subr.mxu0 0.0
    %1363 = vmatpush1.msra.mxu0 0.0
    %1364 = vmatprep.subr.mxu0 0.0
    %1365 = vmatpush1.msra.mxu0 0.0
    %1366 = vmatprep.subr.mxu0 0.0
    %1367 = vmatpush1.msra.mxu0 0.0
    %1368 = vmatprep.mubr.f32.mxu0 0.0
    %1369 = vmatmul.mubr.f32.gmra.mrb[0].mxu0 %v1302
    %v1370 = vpop.f32.mrb[0].mxu0
    %v1371 = vadd.f32 0.0, %v1370
    %v1372 = vpop.f32.mrb[0].mxu0
    %v1373 = vadd.f32 0.0, %v1372
    %1374 = vdwg.mxu0
    %1375 = vmatprep.subr.mxu0 %v108
    %1376 = vmatpush1.msra.mxu0 %v107
    %1377 = vmatprep.subr.mxu0 %v112
    %1378 = vmatpush1.msra.mxu0 %v111
    %1379 = vmatprep.subr.mxu0 %v116
    %1380 = vmatpush1.msra.mxu0 %v115
    %1381 = vmatprep.subr.mxu0 %v120
    %1382 = vmatpush1.msra.mxu0 %v119
    %1383 = vmatprep.subr.mxu0 %v124
    %1384 = vmatpush1.msra.mxu0 %v123
    %1385 = vmatprep.subr.mxu0 %v128
    %1386 = vmatpush1.msra.mxu0 %v127
    %1387 = vmatprep.subr.mxu0 %v132
    %1388 = vmatpush1.msra.mxu0 %v131
    %1389 = vmatprep.subr.mxu0 %v136
    %1390 = vmatpush1.msra.mxu0 %v135
    %1391 = vmatprep.subr.mxu0 %v140
    %1392 = vmatpush1.msra.mxu0 %v139
    %1393 = vmatprep.subr.mxu0 %v144
    %1394 = vmatpush1.msra.mxu0 %v143
    %1395 = vmatprep.subr.mxu0 %v148
    %1396 = vmatpush1.msra.mxu0 %v147
    %1397 = vmatprep.subr.mxu0 %v152
    %1398 = vmatpush1.msra.mxu0 %v151
    %1399 = vmatprep.subr.mxu0 %v156
    %1400 = vmatpush1.msra.mxu0 %v155
    %1401 = vmatprep.subr.mxu0 %v160
    %1402 = vmatpush1.msra.mxu0 %v159
    %1403 = vmatprep.subr.mxu0 %v164
    %1404 = vmatpush1.msra.mxu0 %v163
    %1405 = vmatprep.subr.mxu0 %v168
    %1406 = vmatpush1.msra.mxu0 %v167
    %1407 = vmatprep.subr.mxu0 0.0
    %1408 = vmatpush1.msra.mxu0 0.0
    %1409 = vmatprep.subr.mxu0 0.0
    %1410 = vmatpush1.msra.mxu0 0.0
    %1411 = vmatprep.subr.mxu0 0.0
    %1412 = vmatpush1.msra.mxu0 0.0
    %1413 = vmatprep.subr.mxu0 0.0
    %1414 = vmatpush1.msra.mxu0 0.0
    %1415 = vmatprep.subr.mxu0 0.0
    %1416 = vmatpush1.msra.mxu0 0.0
    %1417 = vmatprep.subr.mxu0 0.0
    %1418 = vmatpush1.msra.mxu0 0.0
    %1419 = vmatprep.subr.mxu0 0.0
    %1420 = vmatpush1.msra.mxu0 0.0
    %1421 = vmatprep.subr.mxu0 0.0
    %1422 = vmatpush1.msra.mxu0 0.0
    %1423 = vmatprep.subr.mxu0 0.0
    %1424 = vmatpush1.msra.mxu0 0.0
    %1425 = vmatprep.subr.mxu0 0.0
    %1426 = vmatpush1.msra.mxu0 0.0
    %1427 = vmatprep.subr.mxu0 0.0
    %1428 = vmatpush1.msra.mxu0 0.0
    %1429 = vmatprep.subr.mxu0 0.0
    %1430 = vmatpush1.msra.mxu0 0.0
    %1431 = vmatprep.subr.mxu0 0.0
    %1432 = vmatpush1.msra.mxu0 0.0
    %1433 = vmatprep.subr.mxu0 0.0
    %1434 = vmatpush1.msra.mxu0 0.0
    %1435 = vmatprep.subr.mxu0 0.0
    %1436 = vmatpush1.msra.mxu0 0.0
    %1437 = vmatprep.subr.mxu0 0.0
    %1438 = vmatpush1.msra.mxu0 0.0
    %1439 = vmatprep.mubr.f32.mxu0 0.0
    %1440 = vmatmul.mubr.f32.gmra.mrb[0].mxu0 %v1302
    %v1441 = vpop.f32.mrb[0].mxu0
    %v1442 = vadd.f32 0.0, %v1441
    %v1443 = vpop.f32.mrb[0].mxu0
    %v1444 = vadd.f32 0.0, %v1443
    %1445 = vdwg.mxu0
    %v1450 = vrot.slane %v1371, 3
    %v1451 = vrot.slane %v1373, 3
    %v1452 = vrot.slane %v1442, 3
    %v1453 = vrot.slane %v1444, 3
    %v1454 = vrot.slane %v1371, 4
    %v1455 = vrot.slane %v1373, 4
    %v1456 = vrot.slane %v1442, 4
    %v1457 = vrot.slane %v1444, 4
    %v1466 = vadd.f32 %v97, %v1450
    %v1467 = vadd.f32 %v98, %v1451
    %v1468 = vadd.f32 %v99, %v1452
    %v1469 = vadd.f32 %v100, %v1453
    %v1470 = vadd.f32 %v101, %v1454
    %v1471 = vadd.f32 %v102, %v1455
    %v1472 = vadd.f32 %v103, %v1456
    %v1473 = vadd.f32 %v104, %v1457
    %v1474 = vxor.u32 %v1466, 2147483648
    %v1475 = vxor.u32 %v1467, 2147483648
    %v1476 = vxor.u32 %v1468, 2147483648
    %v1477 = vxor.u32 %v1470, 2147483648
    %v1478 = vxor.u32 %v1471, 2147483648
    %v1479 = vxor.u32 %v1472, 2147483648
    %v1480 = vmul.f32 %v1474, 1.442695
    %v1481 = vpow.pop %v1480
    %v1482 = vmul.f32 %v1475, 1.442695
    %v1483 = vpow.pop %v1482
    %v1484 = vmul.f32 %v1476, 1.442695
    %v1485 = vpow.pop %v1484
    %v1486 = vmul.f32 %v1477, 1.442695
    %v1487 = vpow.pop %v1486
    %v1488 = vmul.f32 %v1478, 1.442695
    %v1489 = vpow.pop %v1488
    %v1490 = vmul.f32 %v1479, 1.442695
    %v1491 = vpow.pop %v1490
    %v1492 = vadd.f32 %v1481, 1.0
    %v1493 = vadd.f32 %v1483, 1.0
    %v1494 = vadd.f32 %v1485, 1.0
    %v1495 = vadd.f32 %v1487, 1.0
    %v1496 = vadd.f32 %v1489, 1.0
    %v1497 = vadd.f32 %v1491, 1.0
    %v1498 = vrcp.pop %v1492
    %v1499 = vmul.f32 1.0, %v1498
    %v1500 = vrcp.pop %v1493
    %v1501 = vmul.f32 1.0, %v1500
    %v1502 = vrcp.pop %v1494
    %v1503 = vmul.f32 1.0, %v1502
    %v1504 = vrcp.pop %v1495
    %v1505 = vmul.f32 1.0, %v1504
    %v1506 = vrcp.pop %v1496
    %v1507 = vmul.f32 1.0, %v1506
    %v1508 = vrcp.pop %v1497
    %v1509 = vmul.f32 1.0, %v1508
    %v1510 = vtanh.pop %v1469
    %v1511 = vtanh.pop %v1473
    %v1514 = vrot.slane %v1292, 7
    %v1515 = vrot.slane %v1293, 7
    %v1518 = vmul.f32 %v1501, %v1514
    %v1519 = vmul.f32 %v1507, %v1515
    %v1520 = vmul.f32 %v1499, %v1510
    %v1521 = vmul.f32 %v1505, %v1511
    %v1522 = vadd.f32 %v1518, %v1520
    %v1523 = vadd.f32 %v1519, %v1521
    %v1524 = vtanh.pop %v1522
    %v1525 = vtanh.pop %v1523
    %v1526 = vmul.f32 %v1503, %v1524
    %v1527 = vmul.f32 %v1509, %v1525
    %v1530 = vrot.slane %v1526, 5
    %v1531 = vrot.slane %v1527, 4
    %v1532 = vsel %vm386, %v1531, %v1530
    %1534 = vmatprep.subr.mxu0 %v106
    %1535 = vmatpush1.msra.mxu0 %v105
    %1536 = vmatprep.subr.mxu0 %v110
    %1537 = vmatpush1.msra.mxu0 %v109
    %1538 = vmatprep.subr.mxu0 %v114
    %1539 = vmatpush1.msra.mxu0 %v113
    %1540 = vmatprep.subr.mxu0 %v118
    %1541 = vmatpush1.msra.mxu0 %v117
    %1542 = vmatprep.subr.mxu0 %v122
    %1543 = vmatpush1.msra.mxu0 %v121
    %1544 = vmatprep.subr.mxu0 %v126
    %1545 = vmatpush1.msra.mxu0 %v125
    %1546 = vmatprep.subr.mxu0 %v130
    %1547 = vmatpush1.msra.mxu0 %v129
    %1548 = vmatprep.subr.mxu0 %v134
    %1549 = vmatpush1.msra.mxu0 %v133
    %1550 = vmatprep.subr.mxu0 %v138
    %1551 = vmatpush1.msra.mxu0 %v137
    %1552 = vmatprep.subr.mxu0 %v142
    %1553 = vmatpush1.msra.mxu0 %v141
    %1554 = vmatprep.subr.mxu0 %v146
    %1555 = vmatpush1.msra.mxu0 %v145
    %1556 = vmatprep.subr.mxu0 %v150
    %1557 = vmatpush1.msra.mxu0 %v149
    %1558 = vmatprep.subr.mxu0 %v154
    %1559 = vmatpush1.msra.mxu0 %v153
    %1560 = vmatprep.subr.mxu0 %v158
    %1561 = vmatpush1.msra.mxu0 %v157
    %1562 = vmatprep.subr.mxu0 %v162
    %1563 = vmatpush1.msra.mxu0 %v161
    %1564 = vmatprep.subr.mxu0 %v166
    %1565 = vmatpush1.msra.mxu0 %v165
    %1566 = vmatprep.subr.mxu0 0.0
    %1567 = vmatpush1.msra.mxu0 0.0
    %1568 = vmatprep.subr.mxu0 0.0
    %1569 = vmatpush1.msra.mxu0 0.0
    %1570 = vmatprep.subr.mxu0 0.0
    %1571 = vmatpush1.msra.mxu0 0.0
    %1572 = vmatprep.subr.mxu0 0.0
    %1573 = vmatpush1.msra.mxu0 0.0
    %1574 = vmatprep.subr.mxu0 0.0
    %1575 = vmatpush1.msra.mxu0 0.0
    %1576 = vmatprep.subr.mxu0 0.0
    %1577 = vmatpush1.msra.mxu0 0.0
    %1578 = vmatprep.subr.mxu0 0.0
    %1579 = vmatpush1.msra.mxu0 0.0
    %1580 = vmatprep.subr.mxu0 0.0
    %1581 = vmatpush1.msra.mxu0 0.0
    %1582 = vmatprep.subr.mxu0 0.0
    %1583 = vmatpush1.msra.mxu0 0.0
    %1584 = vmatprep.subr.mxu0 0.0
    %1585 = vmatpush1.msra.mxu0 0.0
    %1586 = vmatprep.subr.mxu0 0.0
    %1587 = vmatpush1.msra.mxu0 0.0
    %1588 = vmatprep.subr.mxu0 0.0
    %1589 = vmatpush1.msra.mxu0 0.0
    %1590 = vmatprep.subr.mxu0 0.0
    %1591 = vmatpush1.msra.mxu0 0.0
    %1592 = vmatprep.subr.mxu0 0.0
    %1593 = vmatpush1.msra.mxu0 0.0
    %1594 = vmatprep.subr.mxu0 0.0
    %1595 = vmatpush1.msra.mxu0 0.0
    %1596 = vmatprep.subr.mxu0 0.0
    %1597 = vmatpush1.msra.mxu0 0.0
    %1598 = vmatprep.mubr.f32.mxu0 0.0
    %1599 = vmatmul.mubr.f32.gmra.mrb[0].mxu0 %v1532
    %v1600 = vpop.f32.mrb[0].mxu0
    %v1601 = vadd.f32 0.0, %v1600
    %v1602 = vpop.f32.mrb[0].mxu0
    %v1603 = vadd.f32 0.0, %v1602
    %1604 = vdwg.mxu0
    %1605 = vmatprep.subr.mxu0 %v108
    %1606 = vmatpush1.msra.mxu0 %v107
    %1607 = vmatprep.subr.mxu0 %v112
    %1608 = vmatpush1.msra.mxu0 %v111
    %1609 = vmatprep.subr.mxu0 %v116
    %1610 = vmatpush1.msra.mxu0 %v115
    %1611 = vmatprep.subr.mxu0 %v120
    %1612 = vmatpush1.msra.mxu0 %v119
    %1613 = vmatprep.subr.mxu0 %v124
    %1614 = vmatpush1.msra.mxu0 %v123
    %1615 = vmatprep.subr.mxu0 %v128
    %1616 = vmatpush1.msra.mxu0 %v127
    %1617 = vmatprep.subr.mxu0 %v132
    %1618 = vmatpush1.msra.mxu0 %v131
    %1619 = vmatprep.subr.mxu0 %v136
    %1620 = vmatpush1.msra.mxu0 %v135
    %1621 = vmatprep.subr.mxu0 %v140
    %1622 = vmatpush1.msra.mxu0 %v139
    %1623 = vmatprep.subr.mxu0 %v144
    %1624 = vmatpush1.msra.mxu0 %v143
    %1625 = vmatprep.subr.mxu0 %v148
    %1626 = vmatpush1.msra.mxu0 %v147
    %1627 = vmatprep.subr.mxu0 %v152
    %1628 = vmatpush1.msra.mxu0 %v151
    %1629 = vmatprep.subr.mxu0 %v156
    %1630 = vmatpush1.msra.mxu0 %v155
    %1631 = vmatprep.subr.mxu0 %v160
    %1632 = vmatpush1.msra.mxu0 %v159
    %1633 = vmatprep.subr.mxu0 %v164
    %1634 = vmatpush1.msra.mxu0 %v163
    %1635 = vmatprep.subr.mxu0 %v168
    %1636 = vmatpush1.msra.mxu0 %v167
    %1637 = vmatprep.subr.mxu0 0.0
    %1638 = vmatpush1.msra.mxu0 0.0
    %1639 = vmatprep.subr.mxu0 0.0
    %1640 = vmatpush1.msra.mxu0 0.0
    %1641 = vmatprep.subr.mxu0 0.0
    %1642 = vmatpush1.msra.mxu0 0.0
    %1643 = vmatprep.subr.mxu0 0.0
    %1644 = vmatpush1.msra.mxu0 0.0
    %1645 = vmatprep.subr.mxu0 0.0
    %1646 = vmatpush1.msra.mxu0 0.0
    %1647 = vmatprep.subr.mxu0 0.0
    %1648 = vmatpush1.msra.mxu0 0.0
    %1649 = vmatprep.subr.mxu0 0.0
    %1650 = vmatpush1.msra.mxu0 0.0
    %1651 = vmatprep.subr.mxu0 0.0
    %1652 = vmatpush1.msra.mxu0 0.0
    %1653 = vmatprep.subr.mxu0 0.0
    %1654 = vmatpush1.msra.mxu0 0.0
    %1655 = vmatprep.subr.mxu0 0.0
    %1656 = vmatpush1.msra.mxu0 0.0
    %1657 = vmatprep.subr.mxu0 0.0
    %1658 = vmatpush1.msra.mxu0 0.0
    %1659 = vmatprep.subr.mxu0 0.0
    %1660 = vmatpush1.msra.mxu0 0.0
    %1661 = vmatprep.subr.mxu0 0.0
    %1662 = vmatpush1.msra.mxu0 0.0
    %1663 = vmatprep.subr.mxu0 0.0
    %1664 = vmatpush1.msra.mxu0 0.0
    %1665 = vmatprep.subr.mxu0 0.0
    %1666 = vmatpush1.msra.mxu0 0.0
    %1667 = vmatprep.subr.mxu0 0.0
    %1668 = vmatpush1.msra.mxu0 0.0
    %1669 = vmatprep.mubr.f32.mxu0 0.0
    %1670 = vmatmul.mubr.f32.gmra.mrb[0].mxu0 %v1532
    %v1671 = vpop.f32.mrb[0].mxu0
    %v1672 = vadd.f32 0.0, %v1671
    %v1673 = vpop.f32.mrb[0].mxu0
    %v1674 = vadd.f32 0.0, %v1673
    %1675 = vdwg.mxu0
    %v1680 = vrot.slane %v1601, 2
    %v1681 = vrot.slane %v1603, 2
    %v1682 = vrot.slane %v1672, 2
    %v1683 = vrot.slane %v1674, 2
    %v1684 = vrot.slane %v1601, 3
    %v1685 = vrot.slane %v1603, 3
    %v1686 = vrot.slane %v1672, 3
    %v1687 = vrot.slane %v1674, 3
    %v1696 = vadd.f32 %v97, %v1680
    %v1697 = vadd.f32 %v98, %v1681
    %v1698 = vadd.f32 %v99, %v1682
    %v1699 = vadd.f32 %v100, %v1683
    %v1700 = vadd.f32 %v101, %v1684
    %v1701 = vadd.f32 %v102, %v1685
    %v1702 = vadd.f32 %v103, %v1686
    %v1703 = vadd.f32 %v104, %v1687
    %v1704 = vxor.u32 %v1696, 2147483648
    %v1705 = vxor.u32 %v1697, 2147483648
    %v1706 = vxor.u32 %v1698, 2147483648
    %v1707 = vxor.u32 %v1700, 2147483648
    %v1708 = vxor.u32 %v1701, 2147483648
    %v1709 = vxor.u32 %v1702, 2147483648
    %v1710 = vmul.f32 %v1704, 1.442695
    %v1711 = vpow.pop %v1710
    %v1712 = vmul.f32 %v1705, 1.442695
    %v1713 = vpow.pop %v1712
    %v1714 = vmul.f32 %v1706, 1.442695
    %v1715 = vpow.pop %v1714
    %v1716 = vmul.f32 %v1707, 1.442695
    %v1717 = vpow.pop %v1716
    %v1718 = vmul.f32 %v1708, 1.442695
    %v1719 = vpow.pop %v1718
    %v1720 = vmul.f32 %v1709, 1.442695
    %v1721 = vpow.pop %v1720
    %v1722 = vadd.f32 %v1711, 1.0
    %v1723 = vadd.f32 %v1713, 1.0
    %v1724 = vadd.f32 %v1715, 1.0
    %v1725 = vadd.f32 %v1717, 1.0
    %v1726 = vadd.f32 %v1719, 1.0
    %v1727 = vadd.f32 %v1721, 1.0
    %v1728 = vrcp.pop %v1722
    %v1729 = vmul.f32 1.0, %v1728
    %v1730 = vrcp.pop %v1723
    %v1731 = vmul.f32 1.0, %v1730
    %v1732 = vrcp.pop %v1724
    %v1733 = vmul.f32 1.0, %v1732
    %v1734 = vrcp.pop %v1725
    %v1735 = vmul.f32 1.0, %v1734
    %v1736 = vrcp.pop %v1726
    %v1737 = vmul.f32 1.0, %v1736
    %v1738 = vrcp.pop %v1727
    %v1739 = vmul.f32 1.0, %v1738
    %v1740 = vtanh.pop %v1699
    %v1741 = vtanh.pop %v1703
    %v1744 = vrot.slane %v1522, 7
    %v1745 = vrot.slane %v1523, 7
    %v1748 = vmul.f32 %v1731, %v1744
    %v1749 = vmul.f32 %v1737, %v1745
    %v1750 = vmul.f32 %v1729, %v1740
    %v1751 = vmul.f32 %v1735, %v1741
    %v1752 = vadd.f32 %v1748, %v1750
    %v1753 = vadd.f32 %v1749, %v1751
    %v1754 = vtanh.pop %v1752
    %v1755 = vtanh.pop %v1753
    %v1756 = vmul.f32 %v1733, %v1754
    %v1757 = vmul.f32 %v1739, %v1755
    %v1760 = vrot.slane %v1756, 6
    %v1761 = vrot.slane %v1757, 5
    %v1762 = vsel %vm386, %v1761, %v1760
    %1764 = vmatprep.subr.mxu0 %v106
    %1765 = vmatpush1.msra.mxu0 %v105
    %1766 = vmatprep.subr.mxu0 %v110
    %1767 = vmatpush1.msra.mxu0 %v109
    %1768 = vmatprep.subr.mxu0 %v114
    %1769 = vmatpush1.msra.mxu0 %v113
    %1770 = vmatprep.subr.mxu0 %v118
    %1771 = vmatpush1.msra.mxu0 %v117
    %1772 = vmatprep.subr.mxu0 %v122
    %1773 = vmatpush1.msra.mxu0 %v121
    %1774 = vmatprep.subr.mxu0 %v126
    %1775 = vmatpush1.msra.mxu0 %v125
    %1776 = vmatprep.subr.mxu0 %v130
    %1777 = vmatpush1.msra.mxu0 %v129
    %1778 = vmatprep.subr.mxu0 %v134
    %1779 = vmatpush1.msra.mxu0 %v133
    %1780 = vmatprep.subr.mxu0 %v138
    %1781 = vmatpush1.msra.mxu0 %v137
    %1782 = vmatprep.subr.mxu0 %v142
    %1783 = vmatpush1.msra.mxu0 %v141
    %1784 = vmatprep.subr.mxu0 %v146
    %1785 = vmatpush1.msra.mxu0 %v145
    %1786 = vmatprep.subr.mxu0 %v150
    %1787 = vmatpush1.msra.mxu0 %v149
    %1788 = vmatprep.subr.mxu0 %v154
    %1789 = vmatpush1.msra.mxu0 %v153
    %1790 = vmatprep.subr.mxu0 %v158
    %1791 = vmatpush1.msra.mxu0 %v157
    %1792 = vmatprep.subr.mxu0 %v162
    %1793 = vmatpush1.msra.mxu0 %v161
    %1794 = vmatprep.subr.mxu0 %v166
    %1795 = vmatpush1.msra.mxu0 %v165
    %1796 = vmatprep.subr.mxu0 0.0
    %1797 = vmatpush1.msra.mxu0 0.0
    %1798 = vmatprep.subr.mxu0 0.0
    %1799 = vmatpush1.msra.mxu0 0.0
    %1800 = vmatprep.subr.mxu0 0.0
    %1801 = vmatpush1.msra.mxu0 0.0
    %1802 = vmatprep.subr.mxu0 0.0
    %1803 = vmatpush1.msra.mxu0 0.0
    %1804 = vmatprep.subr.mxu0 0.0
    %1805 = vmatpush1.msra.mxu0 0.0
    %1806 = vmatprep.subr.mxu0 0.0
    %1807 = vmatpush1.msra.mxu0 0.0
    %1808 = vmatprep.subr.mxu0 0.0
    %1809 = vmatpush1.msra.mxu0 0.0
    %1810 = vmatprep.subr.mxu0 0.0
    %1811 = vmatpush1.msra.mxu0 0.0
    %1812 = vmatprep.subr.mxu0 0.0
    %1813 = vmatpush1.msra.mxu0 0.0
    %1814 = vmatprep.subr.mxu0 0.0
    %1815 = vmatpush1.msra.mxu0 0.0
    %1816 = vmatprep.subr.mxu0 0.0
    %1817 = vmatpush1.msra.mxu0 0.0
    %1818 = vmatprep.subr.mxu0 0.0
    %1819 = vmatpush1.msra.mxu0 0.0
    %1820 = vmatprep.subr.mxu0 0.0
    %1821 = vmatpush1.msra.mxu0 0.0
    %1822 = vmatprep.subr.mxu0 0.0
    %1823 = vmatpush1.msra.mxu0 0.0
    %1824 = vmatprep.subr.mxu0 0.0
    %1825 = vmatpush1.msra.mxu0 0.0
    %1826 = vmatprep.subr.mxu0 0.0
    %1827 = vmatpush1.msra.mxu0 0.0
    %1828 = vmatprep.mubr.f32.mxu0 0.0
    %1829 = vmatmul.mubr.f32.gmra.mrb[0].mxu0 %v1762
    %v1830 = vpop.f32.mrb[0].mxu0
    %v1831 = vadd.f32 0.0, %v1830
    %v1832 = vpop.f32.mrb[0].mxu0
    %v1833 = vadd.f32 0.0, %v1832
    %1834 = vdwg.mxu0
    %1835 = vmatprep.subr.mxu0 %v108
    %1836 = vmatpush1.msra.mxu0 %v107
    %1837 = vmatprep.subr.mxu0 %v112
    %1838 = vmatpush1.msra.mxu0 %v111
    %1839 = vmatprep.subr.mxu0 %v116
    %1840 = vmatpush1.msra.mxu0 %v115
    %1841 = vmatprep.subr.mxu0 %v120
    %1842 = vmatpush1.msra.mxu0 %v119
    %1843 = vmatprep.subr.mxu0 %v124
    %1844 = vmatpush1.msra.mxu0 %v123
    %1845 = vmatprep.subr.mxu0 %v128
    %1846 = vmatpush1.msra.mxu0 %v127
    %1847 = vmatprep.subr.mxu0 %v132
    %1848 = vmatpush1.msra.mxu0 %v131
    %1849 = vmatprep.subr.mxu0 %v136
    %1850 = vmatpush1.msra.mxu0 %v135
    %1851 = vmatprep.subr.mxu0 %v140
    %1852 = vmatpush1.msra.mxu0 %v139
    %1853 = vmatprep.subr.mxu0 %v144
    %1854 = vmatpush1.msra.mxu0 %v143
    %1855 = vmatprep.subr.mxu0 %v148
    %1856 = vmatpush1.msra.mxu0 %v147
    %1857 = vmatprep.subr.mxu0 %v152
    %1858 = vmatpush1.msra.mxu0 %v151
    %1859 = vmatprep.subr.mxu0 %v156
    %1860 = vmatpush1.msra.mxu0 %v155
    %1861 = vmatprep.subr.mxu0 %v160
    %1862 = vmatpush1.msra.mxu0 %v159
    %1863 = vmatprep.subr.mxu0 %v164
    %1864 = vmatpush1.msra.mxu0 %v163
    %1865 = vmatprep.subr.mxu0 %v168
    %1866 = vmatpush1.msra.mxu0 %v167
    %1867 = vmatprep.subr.mxu0 0.0
    %1868 = vmatpush1.msra.mxu0 0.0
    %1869 = vmatprep.subr.mxu0 0.0
    %1870 = vmatpush1.msra.mxu0 0.0
    %1871 = vmatprep.subr.mxu0 0.0
    %1872 = vmatpush1.msra.mxu0 0.0
    %1873 = vmatprep.subr.mxu0 0.0
    %1874 = vmatpush1.msra.mxu0 0.0
    %1875 = vmatprep.subr.mxu0 0.0
    %1876 = vmatpush1.msra.mxu0 0.0
    %1877 = vmatprep.subr.mxu0 0.0
    %1878 = vmatpush1.msra.mxu0 0.0
    %1879 = vmatprep.subr.mxu0 0.0
    %1880 = vmatpush1.msra.mxu0 0.0
    %1881 = vmatprep.subr.mxu0 0.0
    %1882 = vmatpush1.msra.mxu0 0.0
    %1883 = vmatprep.subr.mxu0 0.0
    %1884 = vmatpush1.msra.mxu0 0.0
    %1885 = vmatprep.subr.mxu0 0.0
    %1886 = vmatpush1.msra.mxu0 0.0
    %1887 = vmatprep.subr.mxu0 0.0
    %1888 = vmatpush1.msra.mxu0 0.0
    %1889 = vmatprep.subr.mxu0 0.0
    %1890 = vmatpush1.msra.mxu0 0.0
    %1891 = vmatprep.subr.mxu0 0.0
    %1892 = vmatpush1.msra.mxu0 0.0
    %1893 = vmatprep.subr.mxu0 0.0
    %1894 = vmatpush1.msra.mxu0 0.0
    %1895 = vmatprep.subr.mxu0 0.0
    %1896 = vmatpush1.msra.mxu0 0.0
    %1897 = vmatprep.subr.mxu0 0.0
    %1898 = vmatpush1.msra.mxu0 0.0
    %1899 = vmatprep.mubr.f32.mxu0 0.0
    %1900 = vmatmul.mubr.f32.gmra.mrb[0].mxu0 %v1762
    %v1901 = vpop.f32.mrb[0].mxu0
    %v1902 = vadd.f32 0.0, %v1901
    %v1903 = vpop.f32.mrb[0].mxu0
    %v1904 = vadd.f32 0.0, %v1903
    %1905 = vdwg.mxu0
    %v1910 = vrot.slane %v1831, 1
    %v1911 = vrot.slane %v1833, 1
    %v1912 = vrot.slane %v1902, 1
    %v1913 = vrot.slane %v1904, 1
    %v1914 = vrot.slane %v1831, 2
    %v1915 = vrot.slane %v1833, 2
    %v1916 = vrot.slane %v1902, 2
    %v1917 = vrot.slane %v1904, 2
    %v1926 = vadd.f32 %v97, %v1910
    %v1927 = vadd.f32 %v98, %v1911
    %v1928 = vadd.f32 %v99, %v1912
    %v1929 = vadd.f32 %v100, %v1913
    %v1930 = vadd.f32 %v101, %v1914
    %v1931 = vadd.f32 %v102, %v1915
    %v1932 = vadd.f32 %v103, %v1916
    %v1933 = vadd.f32 %v104, %v1917
    %v1934 = vxor.u32 %v1926, 2147483648
    %v1935 = vxor.u32 %v1927, 2147483648
    %v1936 = vxor.u32 %v1928, 2147483648
    %v1937 = vxor.u32 %v1930, 2147483648
    %v1938 = vxor.u32 %v1931, 2147483648
    %v1939 = vxor.u32 %v1932, 2147483648
    %v1940 = vmul.f32 %v1934, 1.442695
    %v1941 = vpow.pop %v1940
    %v1942 = vmul.f32 %v1935, 1.442695
    %v1943 = vpow.pop %v1942
    %v1944 = vmul.f32 %v1936, 1.442695
    %v1945 = vpow.pop %v1944
    %v1946 = vmul.f32 %v1937, 1.442695
    %v1947 = vpow.pop %v1946
    %v1948 = vmul.f32 %v1938, 1.442695
    %v1949 = vpow.pop %v1948
    %v1950 = vmul.f32 %v1939, 1.442695
    %v1951 = vpow.pop %v1950
    %v1952 = vadd.f32 %v1941, 1.0
    %v1953 = vadd.f32 %v1943, 1.0
    %v1954 = vadd.f32 %v1945, 1.0
    %v1955 = vadd.f32 %v1947, 1.0
    %v1956 = vadd.f32 %v1949, 1.0
    %v1957 = vadd.f32 %v1951, 1.0
    %v1958 = vrcp.pop %v1952
    %v1959 = vmul.f32 1.0, %v1958
    %v1960 = vrcp.pop %v1953
    %v1961 = vmul.f32 1.0, %v1960
    %v1962 = vrcp.pop %v1954
    %v1963 = vmul.f32 1.0, %v1962
    %v1964 = vrcp.pop %v1955
    %v1965 = vmul.f32 1.0, %v1964
    %v1966 = vrcp.pop %v1956
    %v1967 = vmul.f32 1.0, %v1966
    %v1968 = vrcp.pop %v1957
    %v1969 = vmul.f32 1.0, %v1968
    %v1970 = vtanh.pop %v1929
    %v1971 = vtanh.pop %v1933
    %v1974 = vrot.slane %v1752, 7
    %v1975 = vrot.slane %v1753, 7
    %v1978 = vmul.f32 %v1961, %v1974
    %v1979 = vmul.f32 %v1967, %v1975
    %v1980 = vmul.f32 %v1959, %v1970
    %v1981 = vmul.f32 %v1965, %v1971
    %v1982 = vadd.f32 %v1978, %v1980
    %v1983 = vadd.f32 %v1979, %v1981
    %v1984 = vtanh.pop %v1982
    %v1985 = vtanh.pop %v1983
    %v1986 = vmul.f32 %v1963, %v1984
    %v1987 = vmul.f32 %v1969, %v1985
    %s1988 = scalar_lea.vmem [#allocation2], 512
    %v1989 = vld [vmem:[%s1988] sm:$0xff]
    %v1990 = vld [vmem:[%s1988 + $0x8] sm:$0xff]
    %v1991 = vld [vmem:[%s1988 + $0x10] sm:$0xff]
    %v1992 = vld [vmem:[%s1988 + $0x18] sm:$0xff]
    %v1993 = vld [vmem:[%s1988 + $0x20] sm:$0xff]
    %v1994 = vld [vmem:[%s1988 + $0x28] sm:$0xff]
    %v1995 = vld [vmem:[%s1988 + $0x30] sm:$0xff]
    %v1996 = vld [vmem:[%s1988 + $0x38] sm:$0xff]
    %v1997 = vld [vmem:[%s1988 + $0x40] sm:$0xff]
    %v1998 = vld [vmem:[%s1988 + $0x48] sm:$0xff]
    %v1999 = vld [vmem:[%s1988 + $0x50] sm:$0xff]
    %v2000 = vld [vmem:[%s1988 + $0x58] sm:$0xff]
    %v2001 = vld [vmem:[%s1988 + $0x60] sm:$0xff]
    %v2002 = vld [vmem:[%s1988 + $0x68] sm:$0xff]
    %v2003 = vld [vmem:[%s1988 + $0x70] sm:$0xff]
    %v2004 = vld [vmem:[%s1988 + $0x78] sm:$0xff]
    %v2005 = vld [vmem:[%s1988 + $0x80] sm:$0xff]
    %v2006 = vld [vmem:[%s1988 + $0x88] sm:$0xff]
    %v2007 = vld [vmem:[%s1988 + $0x90] sm:$0xff]
    %v2008 = vld [vmem:[%s1988 + $0x98] sm:$0xff]
    %v2009 = vld [vmem:[%s1988 + $0xa0] sm:$0xff]
    %v2010 = vld [vmem:[%s1988 + $0xa8] sm:$0xff]
    %v2011 = vld [vmem:[%s1988 + $0xb0] sm:$0xff]
    %v2012 = vld [vmem:[%s1988 + $0xb8] sm:$0xff]
    %v2013 = vld [vmem:[%s1988 + $0xc0] sm:$0xff]
    %v2014 = vld [vmem:[%s1988 + $0xc8] sm:$0xff]
    %v2015 = vld [vmem:[%s1988 + $0xd0] sm:$0xff]
    %v2016 = vld [vmem:[%s1988 + $0xd8] sm:$0xff]
    %v2017 = vld [vmem:[%s1988 + $0xe0] sm:$0xff]
    %v2018 = vld [vmem:[%s1988 + $0xe8] sm:$0xff]
    %v2019 = vld [vmem:[%s1988 + $0xf0] sm:$0xff]
    %v2020 = vld [vmem:[%s1988 + $0xf8] sm:$0xff]
    %v2021 = vld [vmem:[%s1988 + $0x100] sm:$0xff]
    %v2022 = vld [vmem:[%s1988 + $0x108] sm:$0xff]
    %v2023 = vld [vmem:[%s1988 + $0x110] sm:$0xff]
    %v2024 = vld [vmem:[%s1988 + $0x118] sm:$0xff]
    %v2025 = vld [vmem:[%s1988 + $0x120] sm:$0xff]
    %v2026 = vld [vmem:[%s1988 + $0x128] sm:$0xff]
    %v2027 = vld [vmem:[%s1988 + $0x130] sm:$0xff]
    %v2028 = vld [vmem:[%s1988 + $0x138] sm:$0xff]
    %v2029 = vld [vmem:[%s1988 + $0x140] sm:$0xff]
    %v2030 = vld [vmem:[%s1988 + $0x148] sm:$0xff]
    %v2031 = vld [vmem:[%s1988 + $0x150] sm:$0xff]
    %v2032 = vld [vmem:[%s1988 + $0x158] sm:$0xff]
    %v2033 = vld [vmem:[%s1988 + $0x160] sm:$0xff]
    %v2034 = vld [vmem:[%s1988 + $0x168] sm:$0xff]
    %v2035 = vld [vmem:[%s1988 + $0x170] sm:$0xff]
    %v2036 = vld [vmem:[%s1988 + $0x178] sm:$0xff]
    %v2037 = vld [vmem:[%s1988 + $0x180] sm:$0xff]
    %v2038 = vld [vmem:[%s1988 + $0x188] sm:$0xff]
    %v2039 = vld [vmem:[%s1988 + $0x190] sm:$0xff]
    %v2040 = vld [vmem:[%s1988 + $0x198] sm:$0xff]
    %v2041 = vld [vmem:[%s1988 + $0x1a0] sm:$0xff]
    %v2042 = vld [vmem:[%s1988 + $0x1a8] sm:$0xff]
    %v2043 = vld [vmem:[%s1988 + $0x1b0] sm:$0xff]
    %v2044 = vld [vmem:[%s1988 + $0x1b8] sm:$0xff]
    %v2045 = vld [vmem:[%s1988 + $0x1c0] sm:$0xff]
    %v2046 = vld [vmem:[%s1988 + $0x1c8] sm:$0xff]
    %v2047 = vld [vmem:[%s1988 + $0x1d0] sm:$0xff]
    %v2048 = vld [vmem:[%s1988 + $0x1d8] sm:$0xff]
    %v2049 = vld [vmem:[%s1988 + $0x1e0] sm:$0xff]
    %v2050 = vld [vmem:[%s1988 + $0x1e8] sm:$0xff]
    %v2051 = vld [vmem:[%s1988 + $0x1f0] sm:$0xff]
    %v2052 = vld [vmem:[%s1988 + $0x1f8] sm:$0xff]
    %v2055 = vrot.slane %v1986, 7
    %v2056 = vrot.slane %v1987, 6
    %v2057 = vsel %vm386, %v2056, %v2055
    %2059 = vmatprep.subr.mxu0 %v1990
    %2060 = vmatpush1.msra.mxu0 %v1989
    %2061 = vmatprep.subr.mxu0 %v1994
    %2062 = vmatpush1.msra.mxu0 %v1993
    %2063 = vmatprep.subr.mxu0 %v1998
    %2064 = vmatpush1.msra.mxu0 %v1997
    %2065 = vmatprep.subr.mxu0 %v2002
    %2066 = vmatpush1.msra.mxu0 %v2001
    %2067 = vmatprep.subr.mxu0 %v2006
    %2068 = vmatpush1.msra.mxu0 %v2005
    %2069 = vmatprep.subr.mxu0 %v2010
    %2070 = vmatpush1.msra.mxu0 %v2009
    %2071 = vmatprep.subr.mxu0 %v2014
    %2072 = vmatpush1.msra.mxu0 %v2013
    %2073 = vmatprep.subr.mxu0 %v2018
    %2074 = vmatpush1.msra.mxu0 %v2017
    %2075 = vmatprep.subr.mxu0 %v2022
    %2076 = vmatpush1.msra.mxu0 %v2021
    %2077 = vmatprep.subr.mxu0 %v2026
    %2078 = vmatpush1.msra.mxu0 %v2025
    %2079 = vmatprep.subr.mxu0 %v2030
    %2080 = vmatpush1.msra.mxu0 %v2029
    %2081 = vmatprep.subr.mxu0 %v2034
    %2082 = vmatpush1.msra.mxu0 %v2033
    %2083 = vmatprep.subr.mxu0 %v2038
    %2084 = vmatpush1.msra.mxu0 %v2037
    %2085 = vmatprep.subr.mxu0 %v2042
    %2086 = vmatpush1.msra.mxu0 %v2041
    %2087 = vmatprep.subr.mxu0 %v2046
    %2088 = vmatpush1.msra.mxu0 %v2045
    %2089 = vmatprep.subr.mxu0 %v2050
    %2090 = vmatpush1.msra.mxu0 %v2049
    %2091 = vmatprep.subr.mxu0 0.0
    %2092 = vmatpush1.msra.mxu0 0.0
    %2093 = vmatprep.subr.mxu0 0.0
    %2094 = vmatpush1.msra.mxu0 0.0
    %2095 = vmatprep.subr.mxu0 0.0
    %2096 = vmatpush1.msra.mxu0 0.0
    %2097 = vmatprep.subr.mxu0 0.0
    %2098 = vmatpush1.msra.mxu0 0.0
    %2099 = vmatprep.subr.mxu0 0.0
    %2100 = vmatpush1.msra.mxu0 0.0
    %2101 = vmatprep.subr.mxu0 0.0
    %2102 = vmatpush1.msra.mxu0 0.0
    %2103 = vmatprep.subr.mxu0 0.0
    %2104 = vmatpush1.msra.mxu0 0.0
    %2105 = vmatprep.subr.mxu0 0.0
    %2106 = vmatpush1.msra.mxu0 0.0
    %2107 = vmatprep.subr.mxu0 0.0
    %2108 = vmatpush1.msra.mxu0 0.0
    %2109 = vmatprep.subr.mxu0 0.0
    %2110 = vmatpush1.msra.mxu0 0.0
    %2111 = vmatprep.subr.mxu0 0.0
    %2112 = vmatpush1.msra.mxu0 0.0
    %2113 = vmatprep.subr.mxu0 0.0
    %2114 = vmatpush1.msra.mxu0 0.0
    %2115 = vmatprep.subr.mxu0 0.0
    %2116 = vmatpush1.msra.mxu0 0.0
    %2117 = vmatprep.subr.mxu0 0.0
    %2118 = vmatpush1.msra.mxu0 0.0
    %2119 = vmatprep.subr.mxu0 0.0
    %2120 = vmatpush1.msra.mxu0 0.0
    %2121 = vmatprep.subr.mxu0 0.0
    %2122 = vmatpush1.msra.mxu0 0.0
    %2123 = vmatprep.mubr.f32.mxu0 0.0
    %2124 = vmatmul.mubr.f32.gmra.mrb[0].mxu0 %v2057
    %v2125 = vpop.f32.mrb[0].mxu0
    %v2126 = vadd.f32 0.0, %v2125
    %v2127 = vpop.f32.mrb[0].mxu0
    %v2128 = vadd.f32 0.0, %v2127
    %2129 = vdwg.mxu0
    %2130 = vmatprep.subr.mxu0 %v1992
    %2131 = vmatpush1.msra.mxu0 %v1991
    %2132 = vmatprep.subr.mxu0 %v1996
    %2133 = vmatpush1.msra.mxu0 %v1995
    %2134 = vmatprep.subr.mxu0 %v2000
    %2135 = vmatpush1.msra.mxu0 %v1999
    %2136 = vmatprep.subr.mxu0 %v2004
    %2137 = vmatpush1.msra.mxu0 %v2003
    %2138 = vmatprep.subr.mxu0 %v2008
    %2139 = vmatpush1.msra.mxu0 %v2007
    %2140 = vmatprep.subr.mxu0 %v2012
    %2141 = vmatpush1.msra.mxu0 %v2011
    %2142 = vmatprep.subr.mxu0 %v2016
    %2143 = vmatpush1.msra.mxu0 %v2015
    %2144 = vmatprep.subr.mxu0 %v2020
    %2145 = vmatpush1.msra.mxu0 %v2019
    %2146 = vmatprep.subr.mxu0 %v2024
    %2147 = vmatpush1.msra.mxu0 %v2023
    %2148 = vmatprep.subr.mxu0 %v2028
    %2149 = vmatpush1.msra.mxu0 %v2027
    %2150 = vmatprep.subr.mxu0 %v2032
    %2151 = vmatpush1.msra.mxu0 %v2031
    %2152 = vmatprep.subr.mxu0 %v2036
    %2153 = vmatpush1.msra.mxu0 %v2035
    %2154 = vmatprep.subr.mxu0 %v2040
    %2155 = vmatpush1.msra.mxu0 %v2039
    %2156 = vmatprep.subr.mxu0 %v2044
    %2157 = vmatpush1.msra.mxu0 %v2043
    %2158 = vmatprep.subr.mxu0 %v2048
    %2159 = vmatpush1.msra.mxu0 %v2047
    %2160 = vmatprep.subr.mxu0 %v2052
    %2161 = vmatpush1.msra.mxu0 %v2051
    %2162 = vmatprep.subr.mxu0 0.0
    %2163 = vmatpush1.msra.mxu0 0.0
    %2164 = vmatprep.subr.mxu0 0.0
    %2165 = vmatpush1.msra.mxu0 0.0
    %2166 = vmatprep.subr.mxu0 0.0
    %2167 = vmatpush1.msra.mxu0 0.0
    %2168 = vmatprep.subr.mxu0 0.0
    %2169 = vmatpush1.msra.mxu0 0.0
    %2170 = vmatprep.subr.mxu0 0.0
    %2171 = vmatpush1.msra.mxu0 0.0
    %2172 = vmatprep.subr.mxu0 0.0
    %2173 = vmatpush1.msra.mxu0 0.0
    %2174 = vmatprep.subr.mxu0 0.0
    %2175 = vmatpush1.msra.mxu0 0.0
    %2176 = vmatprep.subr.mxu0 0.0
    %2177 = vmatpush1.msra.mxu0 0.0
    %2178 = vmatprep.subr.mxu0 0.0
    %2179 = vmatpush1.msra.mxu0 0.0
    %2180 = vmatprep.subr.mxu0 0.0
    %2181 = vmatpush1.msra.mxu0 0.0
    %2182 = vmatprep.subr.mxu0 0.0
    %2183 = vmatpush1.msra.mxu0 0.0
    %2184 = vmatprep.subr.mxu0 0.0
    %2185 = vmatpush1.msra.mxu0 0.0
    %2186 = vmatprep.subr.mxu0 0.0
    %2187 = vmatpush1.msra.mxu0 0.0
    %2188 = vmatprep.subr.mxu0 0.0
    %2189 = vmatpush1.msra.mxu0 0.0
    %2190 = vmatprep.subr.mxu0 0.0
    %2191 = vmatpush1.msra.mxu0 0.0
    %2192 = vmatprep.subr.mxu0 0.0
    %2193 = vmatpush1.msra.mxu0 0.0
    %2194 = vmatprep.mubr.f32.mxu0 0.0
    %2195 = vmatmul.mubr.f32.gmra.mrb[0].mxu0 %v2057
    %v2196 = vpop.f32.mrb[0].mxu0
    %v2197 = vadd.f32 0.0, %v2196
    %v2198 = vpop.f32.mrb[0].mxu0
    %v2199 = vadd.f32 0.0, %v2198
    %2200 = vdwg.mxu0
    %v2201 = vlaneseq
    %v2202 = vshrl.u32 %v2201, 7
    %v2203 = vsub.s32 2, %v2202
    %v2204 = vrot.slane %v41, %v2203
    %v2205 = vlaneseq
    %v2206 = vshrl.u32 %v2205, 7
    %v2207 = vsub.s32 2, %v2206
    %v2208 = vrot.slane %v42, %v2207
    %v2209 = vlaneseq
    %v2210 = vshrl.u32 %v2209, 7
    %v2211 = vsub.s32 2, %v2210
    %v2212 = vrot.slane %v43, %v2211
    %v2213 = vlaneseq
    %v2214 = vshrl.u32 %v2213, 7
    %v2215 = vsub.s32 2, %v2214
    %v2216 = vrot.slane %v44, %v2215
    %v2217 = vadd.f32 %v2204, %v2126
    %v2218 = vadd.f32 %v2208, %v2128
    %v2219 = vadd.f32 %v2212, %v2197
    %v2220 = vadd.f32 %v2216, %v2199
    %v2221 = vxor.u32 %v2217, 2147483648
    %v2222 = vxor.u32 %v2218, 2147483648
    %v2223 = vxor.u32 %v2219, 2147483648
    %v2224 = vmul.f32 %v2221, 1.442695
    %v2225 = vpow.pop %v2224
    %v2226 = vmul.f32 %v2222, 1.442695
    %v2227 = vpow.pop %v2226
    %v2228 = vmul.f32 %v2223, 1.442695
    %v2229 = vpow.pop %v2228
    %v2230 = vadd.f32 %v2225, 1.0
    %v2231 = vadd.f32 %v2227, 1.0
    %v2232 = vadd.f32 %v2229, 1.0
    %v2233 = vrcp.pop %v2230
    %v2234 = vmul.f32 1.0, %v2233
    %v2235 = vrcp.pop %v2231
    %v2236 = vmul.f32 1.0, %v2235
    %v2237 = vrcp.pop %v2232
    %v2238 = vmul.f32 1.0, %v2237
    %v2239 = vtanh.pop %v2220
    %v2242 = vrot.slane %v1982, 7
    %v2243 = vrot.slane %v1983, 6
    %v2244 = vsel %vm386, %v2243, %v2242
    %v2246 = vmul.f32 %v2236, %v2244
    %v2247 = vmul.f32 %v2234, %v2239
    %v2248 = vadd.f32 %v2246, %v2247
    %v2249 = vtanh.pop %v2248
    %v2250 = vmul.f32 %v2238, %v2249
    %s2251 = scalar_lea.vmem [#allocation2], 1024
    %v2252 = vld [vmem:[%s2251] sm:$0xff]
    %v2253 = vld [vmem:[%s2251 + $0x8] sm:$0xff]
    %v2254 = vld [vmem:[%s2251 + $0x10] sm:$0xff]
    %v2255 = vld [vmem:[%s2251 + $0x18] sm:$0xff]
    %v2256 = vld [vmem:[%s2251 + $0x20] sm:$0xff]
    %v2257 = vld [vmem:[%s2251 + $0x28] sm:$0xff]
    %v2258 = vld [vmem:[%s2251 + $0x30] sm:$0xff]
    %v2259 = vld [vmem:[%s2251 + $0x38] sm:$0xff]
    %v2260 = vld [vmem:[%s2251 + $0x40] sm:$0xff]
    %v2261 = vld [vmem:[%s2251 + $0x48] sm:$0xff]
    %v2262 = vld [vmem:[%s2251 + $0x50] sm:$0xff]
    %v2263 = vld [vmem:[%s2251 + $0x58] sm:$0xff]
    %v2264 = vld [vmem:[%s2251 + $0x60] sm:$0xff]
    %v2265 = vld [vmem:[%s2251 + $0x68] sm:$0xff]
    %v2266 = vld [vmem:[%s2251 + $0x70] sm:$0xff]
    %v2267 = vld [vmem:[%s2251 + $0x78] sm:$0xff]
    %v2268 = vld [vmem:[%s2251 + $0x80] sm:$0xff]
    %v2269 = vld [vmem:[%s2251 + $0x88] sm:$0xff]
    %v2270 = vld [vmem:[%s2251 + $0x90] sm:$0xff]
    %v2271 = vld [vmem:[%s2251 + $0x98] sm:$0xff]
    %v2272 = vld [vmem:[%s2251 + $0xa0] sm:$0xff]
    %v2273 = vld [vmem:[%s2251 + $0xa8] sm:$0xff]
    %v2274 = vld [vmem:[%s2251 + $0xb0] sm:$0xff]
    %v2275 = vld [vmem:[%s2251 + $0xb8] sm:$0xff]
    %v2276 = vld [vmem:[%s2251 + $0xc0] sm:$0xff]
    %v2277 = vld [vmem:[%s2251 + $0xc8] sm:$0xff]
    %v2278 = vld [vmem:[%s2251 + $0xd0] sm:$0xff]
    %v2279 = vld [vmem:[%s2251 + $0xd8] sm:$0xff]
    %v2280 = vld [vmem:[%s2251 + $0xe0] sm:$0xff]
    %v2281 = vld [vmem:[%s2251 + $0xe8] sm:$0xff]
    %v2282 = vld [vmem:[%s2251 + $0xf0] sm:$0xff]
    %v2283 = vld [vmem:[%s2251 + $0xf8] sm:$0xff]
    %v2284 = vld [vmem:[%s2251 + $0x100] sm:$0xff]
    %v2285 = vld [vmem:[%s2251 + $0x108] sm:$0xff]
    %v2286 = vld [vmem:[%s2251 + $0x110] sm:$0xff]
    %v2287 = vld [vmem:[%s2251 + $0x118] sm:$0xff]
    %v2288 = vld [vmem:[%s2251 + $0x120] sm:$0xff]
    %v2289 = vld [vmem:[%s2251 + $0x128] sm:$0xff]
    %v2290 = vld [vmem:[%s2251 + $0x130] sm:$0xff]
    %v2291 = vld [vmem:[%s2251 + $0x138] sm:$0xff]
    %v2292 = vld [vmem:[%s2251 + $0x140] sm:$0xff]
    %v2293 = vld [vmem:[%s2251 + $0x148] sm:$0xff]
    %v2294 = vld [vmem:[%s2251 + $0x150] sm:$0xff]
    %v2295 = vld [vmem:[%s2251 + $0x158] sm:$0xff]
    %v2296 = vld [vmem:[%s2251 + $0x160] sm:$0xff]
    %v2297 = vld [vmem:[%s2251 + $0x168] sm:$0xff]
    %v2298 = vld [vmem:[%s2251 + $0x170] sm:$0xff]
    %v2299 = vld [vmem:[%s2251 + $0x178] sm:$0xff]
    %v2300 = vld [vmem:[%s2251 + $0x180] sm:$0xff]
    %v2301 = vld [vmem:[%s2251 + $0x188] sm:$0xff]
    %v2302 = vld [vmem:[%s2251 + $0x190] sm:$0xff]
    %v2303 = vld [vmem:[%s2251 + $0x198] sm:$0xff]
    %v2304 = vld [vmem:[%s2251 + $0x1a0] sm:$0xff]
    %v2305 = vld [vmem:[%s2251 + $0x1a8] sm:$0xff]
    %v2306 = vld [vmem:[%s2251 + $0x1b0] sm:$0xff]
    %v2307 = vld [vmem:[%s2251 + $0x1b8] sm:$0xff]
    %v2308 = vld [vmem:[%s2251 + $0x1c0] sm:$0xff]
    %v2309 = vld [vmem:[%s2251 + $0x1c8] sm:$0xff]
    %v2310 = vld [vmem:[%s2251 + $0x1d0] sm:$0xff]
    %v2311 = vld [vmem:[%s2251 + $0x1d8] sm:$0xff]
    %v2312 = vld [vmem:[%s2251 + $0x1e0] sm:$0xff]
    %v2313 = vld [vmem:[%s2251 + $0x1e8] sm:$0xff]
    %v2314 = vld [vmem:[%s2251 + $0x1f0] sm:$0xff]
    %v2315 = vld [vmem:[%s2251 + $0x1f8] sm:$0xff]
    %2316 = vmatprep.subr.mxu0 %v2253
    %2317 = vmatpush1.msra.mxu0 %v2252
    %2318 = vmatprep.subr.mxu0 %v2257
    %2319 = vmatpush1.msra.mxu0 %v2256
    %2320 = vmatprep.subr.mxu0 %v2261
    %2321 = vmatpush1.msra.mxu0 %v2260
    %2322 = vmatprep.subr.mxu0 %v2265
    %2323 = vmatpush1.msra.mxu0 %v2264
    %2324 = vmatprep.subr.mxu0 %v2269
    %2325 = vmatpush1.msra.mxu0 %v2268
    %2326 = vmatprep.subr.mxu0 %v2273
    %2327 = vmatpush1.msra.mxu0 %v2272
    %2328 = vmatprep.subr.mxu0 %v2277
    %2329 = vmatpush1.msra.mxu0 %v2276
    %2330 = vmatprep.subr.mxu0 %v2281
    %2331 = vmatpush1.msra.mxu0 %v2280
    %2332 = vmatprep.subr.mxu0 %v2285
    %2333 = vmatpush1.msra.mxu0 %v2284
    %2334 = vmatprep.subr.mxu0 %v2289
    %2335 = vmatpush1.msra.mxu0 %v2288
    %2336 = vmatprep.subr.mxu0 %v2293
    %2337 = vmatpush1.msra.mxu0 %v2292
    %2338 = vmatprep.subr.mxu0 %v2297
    %2339 = vmatpush1.msra.mxu0 %v2296
    %2340 = vmatprep.subr.mxu0 %v2301
    %2341 = vmatpush1.msra.mxu0 %v2300
    %2342 = vmatprep.subr.mxu0 %v2305
    %2343 = vmatpush1.msra.mxu0 %v2304
    %2344 = vmatprep.subr.mxu0 %v2309
    %2345 = vmatpush1.msra.mxu0 %v2308
    %2346 = vmatprep.subr.mxu0 %v2313
    %2347 = vmatpush1.msra.mxu0 %v2312
    %2348 = vmatprep.subr.mxu0 0.0
    %2349 = vmatpush1.msra.mxu0 0.0
    %2350 = vmatprep.subr.mxu0 0.0
    %2351 = vmatpush1.msra.mxu0 0.0
    %2352 = vmatprep.subr.mxu0 0.0
    %2353 = vmatpush1.msra.mxu0 0.0
    %2354 = vmatprep.subr.mxu0 0.0
    %2355 = vmatpush1.msra.mxu0 0.0
    %2356 = vmatprep.subr.mxu0 0.0
    %2357 = vmatpush1.msra.mxu0 0.0
    %2358 = vmatprep.subr.mxu0 0.0
    %2359 = vmatpush1.msra.mxu0 0.0
    %2360 = vmatprep.subr.mxu0 0.0
    %2361 = vmatpush1.msra.mxu0 0.0
    %2362 = vmatprep.subr.mxu0 0.0
    %2363 = vmatpush1.msra.mxu0 0.0
    %2364 = vmatprep.subr.mxu0 0.0
    %2365 = vmatpush1.msra.mxu0 0.0
    %2366 = vmatprep.subr.mxu0 0.0
    %2367 = vmatpush1.msra.mxu0 0.0
    %2368 = vmatprep.subr.mxu0 0.0
    %2369 = vmatpush1.msra.mxu0 0.0
    %2370 = vmatprep.subr.mxu0 0.0
    %2371 = vmatpush1.msra.mxu0 0.0
    %2372 = vmatprep.subr.mxu0 0.0
    %2373 = vmatpush1.msra.mxu0 0.0
    %2374 = vmatprep.subr.mxu0 0.0
    %2375 = vmatpush1.msra.mxu0 0.0
    %2376 = vmatprep.subr.mxu0 0.0
    %2377 = vmatpush1.msra.mxu0 0.0
    %2378 = vmatprep.subr.mxu0 0.0
    %2379 = vmatpush1.msra.mxu0 0.0
    %2380 = vmatprep.mubr.f32.mxu0 0.0
    %2381 = vmatmul.mubr.f32.gmra.mrb[0].mxu0 %v2250
    %v2382 = vpop.f32.mrb[0].mxu0
    %v2383 = vadd.f32 0.0, %v2382
    %v2384 = vpop.f32.mrb[0].mxu0
    %v2385 = vadd.f32 0.0, %v2384
    %2386 = vdwg.mxu0
    %2387 = vmatprep.subr.mxu0 %v2255
    %2388 = vmatpush1.msra.mxu0 %v2254
    %2389 = vmatprep.subr.mxu0 %v2259
    %2390 = vmatpush1.msra.mxu0 %v2258
    %2391 = vmatprep.subr.mxu0 %v2263
    %2392 = vmatpush1.msra.mxu0 %v2262
    %2393 = vmatprep.subr.mxu0 %v2267
    %2394 = vmatpush1.msra.mxu0 %v2266
    %2395 = vmatprep.subr.mxu0 %v2271
    %2396 = vmatpush1.msra.mxu0 %v2270
    %2397 = vmatprep.subr.mxu0 %v2275
    %2398 = vmatpush1.msra.mxu0 %v2274
    %2399 = vmatprep.subr.mxu0 %v2279
    %2400 = vmatpush1.msra.mxu0 %v2278
    %2401 = vmatprep.subr.mxu0 %v2283
    %2402 = vmatpush1.msra.mxu0 %v2282
    %2403 = vmatprep.subr.mxu0 %v2287
    %2404 = vmatpush1.msra.mxu0 %v2286
    %2405 = vmatprep.subr.mxu0 %v2291
    %2406 = vmatpush1.msra.mxu0 %v2290
    %2407 = vmatprep.subr.mxu0 %v2295
    %2408 = vmatpush1.msra.mxu0 %v2294
    %2409 = vmatprep.subr.mxu0 %v2299
    %2410 = vmatpush1.msra.mxu0 %v2298
    %2411 = vmatprep.subr.mxu0 %v2303
    %2412 = vmatpush1.msra.mxu0 %v2302
    %2413 = vmatprep.subr.mxu0 %v2307
    %2414 = vmatpush1.msra.mxu0 %v2306
    %2415 = vmatprep.subr.mxu0 %v2311
    %2416 = vmatpush1.msra.mxu0 %v2310
    %2417 = vmatprep.subr.mxu0 %v2315
    %2418 = vmatpush1.msra.mxu0 %v2314
    %2419 = vmatprep.subr.mxu0 0.0
    %2420 = vmatpush1.msra.mxu0 0.0
    %2421 = vmatprep.subr.mxu0 0.0
    %2422 = vmatpush1.msra.mxu0 0.0
    %2423 = vmatprep.subr.mxu0 0.0
    %2424 = vmatpush1.msra.mxu0 0.0
    %2425 = vmatprep.subr.mxu0 0.0
    %2426 = vmatpush1.msra.mxu0 0.0
    %2427 = vmatprep.subr.mxu0 0.0
    %2428 = vmatpush1.msra.mxu0 0.0
    %2429 = vmatprep.subr.mxu0 0.0
    %2430 = vmatpush1.msra.mxu0 0.0
    %2431 = vmatprep.subr.mxu0 0.0
    %2432 = vmatpush1.msra.mxu0 0.0
    %2433 = vmatprep.subr.mxu0 0.0
    %2434 = vmatpush1.msra.mxu0 0.0
    %2435 = vmatprep.subr.mxu0 0.0
    %2436 = vmatpush1.msra.mxu0 0.0
    %2437 = vmatprep.subr.mxu0 0.0
    %2438 = vmatpush1.msra.mxu0 0.0
    %2439 = vmatprep.subr.mxu0 0.0
    %2440 = vmatpush1.msra.mxu0 0.0
    %2441 = vmatprep.subr.mxu0 0.0
    %2442 = vmatpush1.msra.mxu0 0.0
    %2443 = vmatprep.subr.mxu0 0.0
    %2444 = vmatpush1.msra.mxu0 0.0
    %2445 = vmatprep.subr.mxu0 0.0
    %2446 = vmatpush1.msra.mxu0 0.0
    %2447 = vmatprep.subr.mxu0 0.0
    %2448 = vmatpush1.msra.mxu0 0.0
    %2449 = vmatprep.subr.mxu0 0.0
    %2450 = vmatpush1.msra.mxu0 0.0
    %2451 = vmatprep.mubr.f32.mxu0 0.0
    %2452 = vmatmul.mubr.f32.gmra.mrb[0].mxu0 %v2250
    %v2453 = vpop.f32.mrb[0].mxu0
    %v2454 = vadd.f32 0.0, %v2453
    %v2455 = vpop.f32.mrb[0].mxu0
    %v2456 = vadd.f32 0.0, %v2455
    %2457 = vdwg.mxu0
    %v2458 = vlaneseq
    %v2459 = vshrl.u32 %v2458, 7
    %v2460 = vsub.s32 3, %v2459
    %v2461 = vrot.slane %v41, %v2460
    %v2462 = vlaneseq
    %v2463 = vshrl.u32 %v2462, 7
    %v2464 = vsub.s32 3, %v2463
    %v2465 = vrot.slane %v42, %v2464
    %v2466 = vlaneseq
    %v2467 = vshrl.u32 %v2466, 7
    %v2468 = vsub.s32 3, %v2467
    %v2469 = vrot.slane %v43, %v2468
    %v2470 = vlaneseq
    %v2471 = vshrl.u32 %v2470, 7
    %v2472 = vsub.s32 3, %v2471
    %v2473 = vrot.slane %v44, %v2472
    %v2474 = vadd.f32 %v2461, %v2383
    %v2475 = vadd.f32 %v2465, %v2385
    %v2476 = vadd.f32 %v2469, %v2454
    %v2477 = vadd.f32 %v2473, %v2456
    %v2478 = vxor.u32 %v2474, 2147483648
    %v2479 = vxor.u32 %v2475, 2147483648
    %v2480 = vxor.u32 %v2476, 2147483648
    %v2481 = vmul.f32 %v2478, 1.442695
    %v2482 = vpow.pop %v2481
    %v2483 = vmul.f32 %v2479, 1.442695
    %v2484 = vpow.pop %v2483
    %v2485 = vmul.f32 %v2480, 1.442695
    %v2486 = vpow.pop %v2485
    %v2487 = vadd.f32 %v2482, 1.0
    %v2488 = vadd.f32 %v2484, 1.0
    %v2489 = vadd.f32 %v2486, 1.0
    %v2490 = vrcp.pop %v2487
    %v2491 = vmul.f32 1.0, %v2490
    %v2492 = vrcp.pop %v2488
    %v2493 = vmul.f32 1.0, %v2492
    %v2494 = vrcp.pop %v2489
    %v2495 = vmul.f32 1.0, %v2494
    %v2496 = vtanh.pop %v2477
    %v2497 = vmul.f32 %v2493, %v2248
    %v2498 = vmul.f32 %v2491, %v2496
    %v2499 = vadd.f32 %v2497, %v2498
    %v2500 = vtanh.pop %v2499
    %v2501 = vmul.f32 %v2495, %v2500
    %2502 = vmatprep.subr.mxu0 %v2253
    %2503 = vmatpush1.msra.mxu0 %v2252
    %2504 = vmatprep.subr.mxu0 %v2257
    %2505 = vmatpush1.msra.mxu0 %v2256
    %2506 = vmatprep.subr.mxu0 %v2261
    %2507 = vmatpush1.msra.mxu0 %v2260
    %2508 = vmatprep.subr.mxu0 %v2265
    %2509 = vmatpush1.msra.mxu0 %v2264
    %2510 = vmatprep.subr.mxu0 %v2269
    %2511 = vmatpush1.msra.mxu0 %v2268
    %2512 = vmatprep.subr.mxu0 %v2273
    %2513 = vmatpush1.msra.mxu0 %v2272
    %2514 = vmatprep.subr.mxu0 %v2277
    %2515 = vmatpush1.msra.mxu0 %v2276
    %2516 = vmatprep.subr.mxu0 %v2281
    %2517 = vmatpush1.msra.mxu0 %v2280
    %2518 = vmatprep.subr.mxu0 %v2285
    %2519 = vmatpush1.msra.mxu0 %v2284
    %2520 = vmatprep.subr.mxu0 %v2289
    %2521 = vmatpush1.msra.mxu0 %v2288
    %2522 = vmatprep.subr.mxu0 %v2293
    %2523 = vmatpush1.msra.mxu0 %v2292
    %2524 = vmatprep.subr.mxu0 %v2297
    %2525 = vmatpush1.msra.mxu0 %v2296
    %2526 = vmatprep.subr.mxu0 %v2301
    %2527 = vmatpush1.msra.mxu0 %v2300
    %2528 = vmatprep.subr.mxu0 %v2305
    %2529 = vmatpush1.msra.mxu0 %v2304
    %2530 = vmatprep.subr.mxu0 %v2309
    %2531 = vmatpush1.msra.mxu0 %v2308
    %2532 = vmatprep.subr.mxu0 %v2313
    %2533 = vmatpush1.msra.mxu0 %v2312
    %2534 = vmatprep.subr.mxu0 0.0
    %2535 = vmatpush1.msra.mxu0 0.0
    %2536 = vmatprep.subr.mxu0 0.0
    %2537 = vmatpush1.msra.mxu0 0.0
    %2538 = vmatprep.subr.mxu0 0.0
    %2539 = vmatpush1.msra.mxu0 0.0
    %2540 = vmatprep.subr.mxu0 0.0
    %2541 = vmatpush1.msra.mxu0 0.0
    %2542 = vmatprep.subr.mxu0 0.0
    %2543 = vmatpush1.msra.mxu0 0.0
    %2544 = vmatprep.subr.mxu0 0.0
    %2545 = vmatpush1.msra.mxu0 0.0
    %2546 = vmatprep.subr.mxu0 0.0
    %2547 = vmatpush1.msra.mxu0 0.0
    %2548 = vmatprep.subr.mxu0 0.0
    %2549 = vmatpush1.msra.mxu0 0.0
    %2550 = vmatprep.subr.mxu0 0.0
    %2551 = vmatpush1.msra.mxu0 0.0
    %2552 = vmatprep.subr.mxu0 0.0
    %2553 = vmatpush1.msra.mxu0 0.0
    %2554 = vmatprep.subr.mxu0 0.0
    %2555 = vmatpush1.msra.mxu0 0.0
    %2556 = vmatprep.subr.mxu0 0.0
    %2557 = vmatpush1.msra.mxu0 0.0
    %2558 = vmatprep.subr.mxu0 0.0
    %2559 = vmatpush1.msra.mxu0 0.0
    %2560 = vmatprep.subr.mxu0 0.0
    %2561 = vmatpush1.msra.mxu0 0.0
    %2562 = vmatprep.subr.mxu0 0.0
    %2563 = vmatpush1.msra.mxu0 0.0
    %2564 = vmatprep.subr.mxu0 0.0
    %2565 = vmatpush1.msra.mxu0 0.0
    %2566 = vmatprep.mubr.f32.mxu0 0.0
    %2567 = vmatmul.mubr.f32.gmra.mrb[0].mxu0 %v2501
    %v2568 = vpop.f32.mrb[0].mxu0
    %v2569 = vadd.f32 0.0, %v2568
    %v2570 = vpop.f32.mrb[0].mxu0
    %v2571 = vadd.f32 0.0, %v2570
    %2572 = vdwg.mxu0
    %2573 = vmatprep.subr.mxu0 %v2255
    %2574 = vmatpush1.msra.mxu0 %v2254
    %2575 = vmatprep.subr.mxu0 %v2259
    %2576 = vmatpush1.msra.mxu0 %v2258
    %2577 = vmatprep.subr.mxu0 %v2263
    %2578 = vmatpush1.msra.mxu0 %v2262
    %2579 = vmatprep.subr.mxu0 %v2267
    %2580 = vmatpush1.msra.mxu0 %v2266
    %2581 = vmatprep.subr.mxu0 %v2271
    %2582 = vmatpush1.msra.mxu0 %v2270
    %2583 = vmatprep.subr.mxu0 %v2275
    %2584 = vmatpush1.msra.mxu0 %v2274
    %2585 = vmatprep.subr.mxu0 %v2279
    %2586 = vmatpush1.msra.mxu0 %v2278
    %2587 = vmatprep.subr.mxu0 %v2283
    %2588 = vmatpush1.msra.mxu0 %v2282
    %2589 = vmatprep.subr.mxu0 %v2287
    %2590 = vmatpush1.msra.mxu0 %v2286
    %2591 = vmatprep.subr.mxu0 %v2291
    %2592 = vmatpush1.msra.mxu0 %v2290
    %2593 = vmatprep.subr.mxu0 %v2295
    %2594 = vmatpush1.msra.mxu0 %v2294
    %2595 = vmatprep.subr.mxu0 %v2299
    %2596 = vmatpush1.msra.mxu0 %v2298
    %2597 = vmatprep.subr.mxu0 %v2303
    %2598 = vmatpush1.msra.mxu0 %v2302
    %2599 = vmatprep.subr.mxu0 %v2307
    %2600 = vmatpush1.msra.mxu0 %v2306
    %2601 = vmatprep.subr.mxu0 %v2311
    %2602 = vmatpush1.msra.mxu0 %v2310
    %2603 = vmatprep.subr.mxu0 %v2315
    %2604 = vmatpush1.msra.mxu0 %v2314
    %2605 = vmatprep.subr.mxu0 0.0
    %2606 = vmatpush1.msra.mxu0 0.0
    %2607 = vmatprep.subr.mxu0 0.0
    %2608 = vmatpush1.msra.mxu0 0.0
    %2609 = vmatprep.subr.mxu0 0.0
    %2610 = vmatpush1.msra.mxu0 0.0
    %2611 = vmatprep.subr.mxu0 0.0
    %2612 = vmatpush1.msra.mxu0 0.0
    %2613 = vmatprep.subr.mxu0 0.0
    %2614 = vmatpush1.msra.mxu0 0.0
    %2615 = vmatprep.subr.mxu0 0.0
    %2616 = vmatpush1.msra.mxu0 0.0
    %2617 = vmatprep.subr.mxu0 0.0
    %2618 = vmatpush1.msra.mxu0 0.0
    %2619 = vmatprep.subr.mxu0 0.0
    %2620 = vmatpush1.msra.mxu0 0.0
    %2621 = vmatprep.subr.mxu0 0.0
    %2622 = vmatpush1.msra.mxu0 0.0
    %2623 = vmatprep.subr.mxu0 0.0
    %2624 = vmatpush1.msra.mxu0 0.0
    %2625 = vmatprep.subr.mxu0 0.0
    %2626 = vmatpush1.msra.mxu0 0.0
    %2627 = vmatprep.subr.mxu0 0.0
    %2628 = vmatpush1.msra.mxu0 0.0
    %2629 = vmatprep.subr.mxu0 0.0
    %2630 = vmatpush1.msra.mxu0 0.0
    %2631 = vmatprep.subr.mxu0 0.0
    %2632 = vmatpush1.msra.mxu0 0.0
    %2633 = vmatprep.subr.mxu0 0.0
    %2634 = vmatpush1.msra.mxu0 0.0
    %2635 = vmatprep.subr.mxu0 0.0
    %2636 = vmatpush1.msra.mxu0 0.0
    %2637 = vmatprep.mubr.f32.mxu0 0.0
    %2638 = vmatmul.mubr.f32.gmra.mrb[0].mxu0 %v2501
    %v2639 = vpop.f32.mrb[0].mxu0
    %v2640 = vadd.f32 0.0, %v2639
    %v2641 = vpop.f32.mrb[0].mxu0
    %v2642 = vadd.f32 0.0, %v2641
    %2643 = vdwg.mxu0
    %v2644 = vadd.f32 %v2461, %v2569
    %v2645 = vadd.f32 %v2465, %v2571
    %v2646 = vadd.f32 %v2469, %v2640
    %v2647 = vadd.f32 %v2473, %v2642
    %v2648 = vxor.u32 %v2644, 2147483648
    %v2649 = vxor.u32 %v2645, 2147483648
    %v2650 = vxor.u32 %v2646, 2147483648
    %v2651 = vmul.f32 %v2648, 1.442695
    %v2652 = vpow.pop %v2651
    %v2653 = vmul.f32 %v2649, 1.442695
    %v2654 = vpow.pop %v2653
    %v2655 = vmul.f32 %v2650, 1.442695
    %v2656 = vpow.pop %v2655
    %v2657 = vadd.f32 %v2652, 1.0
    %v2658 = vadd.f32 %v2654, 1.0
    %v2659 = vadd.f32 %v2656, 1.0
    %v2660 = vrcp.pop %v2657
    %v2661 = vmul.f32 1.0, %v2660
    %v2662 = vrcp.pop %v2658
    %v2663 = vmul.f32 1.0, %v2662
    %v2664 = vrcp.pop %v2659
    %v2665 = vmul.f32 1.0, %v2664
    %v2666 = vtanh.pop %v2647
    %v2667 = vmul.f32 %v2663, %v2499
    %v2668 = vmul.f32 %v2661, %v2666
    %v2669 = vadd.f32 %v2667, %v2668
    %v2670 = vtanh.pop %v2669
    %v2671 = vmul.f32 %v2665, %v2670
    %2672 = vmatprep.subr.mxu0 %v2253
    %2673 = vmatpush1.msra.mxu0 %v2252
    %2674 = vmatprep.subr.mxu0 %v2257
    %2675 = vmatpush1.msra.mxu0 %v2256
    %2676 = vmatprep.subr.mxu0 %v2261
    %2677 = vmatpush1.msra.mxu0 %v2260
    %2678 = vmatprep.subr.mxu0 %v2265
    %2679 = vmatpush1.msra.mxu0 %v2264
    %2680 = vmatprep.subr.mxu0 %v2269
    %2681 = vmatpush1.msra.mxu0 %v2268
    %2682 = vmatprep.subr.mxu0 %v2273
    %2683 = vmatpush1.msra.mxu0 %v2272
    %2684 = vmatprep.subr.mxu0 %v2277
    %2685 = vmatpush1.msra.mxu0 %v2276
    %2686 = vmatprep.subr.mxu0 %v2281
    %2687 = vmatpush1.msra.mxu0 %v2280
    %2688 = vmatprep.subr.mxu0 %v2285
    %2689 = vmatpush1.msra.mxu0 %v2284
    %2690 = vmatprep.subr.mxu0 %v2289
    %2691 = vmatpush1.msra.mxu0 %v2288
    %2692 = vmatprep.subr.mxu0 %v2293
    %2693 = vmatpush1.msra.mxu0 %v2292
    %2694 = vmatprep.subr.mxu0 %v2297
    %2695 = vmatpush1.msra.mxu0 %v2296
    %2696 = vmatprep.subr.mxu0 %v2301
    %2697 = vmatpush1.msra.mxu0 %v2300
    %2698 = vmatprep.subr.mxu0 %v2305
    %2699 = vmatpush1.msra.mxu0 %v2304
    %2700 = vmatprep.subr.mxu0 %v2309
    %2701 = vmatpush1.msra.mxu0 %v2308
    %2702 = vmatprep.subr.mxu0 %v2313
    %2703 = vmatpush1.msra.mxu0 %v2312
    %2704 = vmatprep.subr.mxu0 0.0
    %2705 = vmatpush1.msra.mxu0 0.0
    %2706 = vmatprep.subr.mxu0 0.0
    %2707 = vmatpush1.msra.mxu0 0.0
    %2708 = vmatprep.subr.mxu0 0.0
    %2709 = vmatpush1.msra.mxu0 0.0
    %2710 = vmatprep.subr.mxu0 0.0
    %2711 = vmatpush1.msra.mxu0 0.0
    %2712 = vmatprep.subr.mxu0 0.0
    %2713 = vmatpush1.msra.mxu0 0.0
    %2714 = vmatprep.subr.mxu0 0.0
    %2715 = vmatpush1.msra.mxu0 0.0
    %2716 = vmatprep.subr.mxu0 0.0
    %2717 = vmatpush1.msra.mxu0 0.0
    %2718 = vmatprep.subr.mxu0 0.0
    %2719 = vmatpush1.msra.mxu0 0.0
    %2720 = vmatprep.subr.mxu0 0.0
    %2721 = vmatpush1.msra.mxu0 0.0
    %2722 = vmatprep.subr.mxu0 0.0
    %2723 = vmatpush1.msra.mxu0 0.0
    %2724 = vmatprep.subr.mxu0 0.0
    %2725 = vmatpush1.msra.mxu0 0.0
    %2726 = vmatprep.subr.mxu0 0.0
    %2727 = vmatpush1.msra.mxu0 0.0
    %2728 = vmatprep.subr.mxu0 0.0
    %2729 = vmatpush1.msra.mxu0 0.0
    %2730 = vmatprep.subr.mxu0 0.0
    %2731 = vmatpush1.msra.mxu0 0.0
    %2732 = vmatprep.subr.mxu0 0.0
    %2733 = vmatpush1.msra.mxu0 0.0
    %2734 = vmatprep.subr.mxu0 0.0
    %2735 = vmatpush1.msra.mxu0 0.0
    %2736 = vmatprep.mubr.f32.mxu0 0.0
    %2737 = vmatmul.mubr.f32.gmra.mrb[0].mxu0 %v2671
    %v2738 = vpop.f32.mrb[0].mxu0
    %v2739 = vadd.f32 0.0, %v2738
    %v2740 = vpop.f32.mrb[0].mxu0
    %v2741 = vadd.f32 0.0, %v2740
    %2742 = vdwg.mxu0
    %2743 = vmatprep.subr.mxu0 %v2255
    %2744 = vmatpush1.msra.mxu0 %v2254
    %2745 = vmatprep.subr.mxu0 %v2259
    %2746 = vmatpush1.msra.mxu0 %v2258
    %2747 = vmatprep.subr.mxu0 %v2263
    %2748 = vmatpush1.msra.mxu0 %v2262
    %2749 = vmatprep.subr.mxu0 %v2267
    %2750 = vmatpush1.msra.mxu0 %v2266
    %2751 = vmatprep.subr.mxu0 %v2271
    %2752 = vmatpush1.msra.mxu0 %v2270
    %2753 = vmatprep.subr.mxu0 %v2275
    %2754 = vmatpush1.msra.mxu0 %v2274
    %2755 = vmatprep.subr.mxu0 %v2279
    %2756 = vmatpush1.msra.mxu0 %v2278
    %2757 = vmatprep.subr.mxu0 %v2283
    %2758 = vmatpush1.msra.mxu0 %v2282
    %2759 = vmatprep.subr.mxu0 %v2287
    %2760 = vmatpush1.msra.mxu0 %v2286
    %2761 = vmatprep.subr.mxu0 %v2291
    %2762 = vmatpush1.msra.mxu0 %v2290
    %2763 = vmatprep.subr.mxu0 %v2295
    %2764 = vmatpush1.msra.mxu0 %v2294
    %2765 = vmatprep.subr.mxu0 %v2299
    %2766 = vmatpush1.msra.mxu0 %v2298
    %2767 = vmatprep.subr.mxu0 %v2303
    %2768 = vmatpush1.msra.mxu0 %v2302
    %2769 = vmatprep.subr.mxu0 %v2307
    %2770 = vmatpush1.msra.mxu0 %v2306
    %2771 = vmatprep.subr.mxu0 %v2311
    %2772 = vmatpush1.msra.mxu0 %v2310
    %2773 = vmatprep.subr.mxu0 %v2315
    %2774 = vmatpush1.msra.mxu0 %v2314
    %2775 = vmatprep.subr.mxu0 0.0
    %2776 = vmatpush1.msra.mxu0 0.0
    %2777 = vmatprep.subr.mxu0 0.0
    %2778 = vmatpush1.msra.mxu0 0.0
    %2779 = vmatprep.subr.mxu0 0.0
    %2780 = vmatpush1.msra.mxu0 0.0
    %2781 = vmatprep.subr.mxu0 0.0
    %2782 = vmatpush1.msra.mxu0 0.0
    %2783 = vmatprep.subr.mxu0 0.0
    %2784 = vmatpush1.msra.mxu0 0.0
    %2785 = vmatprep.subr.mxu0 0.0
    %2786 = vmatpush1.msra.mxu0 0.0
    %2787 = vmatprep.subr.mxu0 0.0
    %2788 = vmatpush1.msra.mxu0 0.0
    %2789 = vmatprep.subr.mxu0 0.0
    %2790 = vmatpush1.msra.mxu0 0.0
    %2791 = vmatprep.subr.mxu0 0.0
    %2792 = vmatpush1.msra.mxu0 0.0
    %2793 = vmatprep.subr.mxu0 0.0
    %2794 = vmatpush1.msra.mxu0 0.0
    %2795 = vmatprep.subr.mxu0 0.0
    %2796 = vmatpush1.msra.mxu0 0.0
    %2797 = vmatprep.subr.mxu0 0.0
    %2798 = vmatpush1.msra.mxu0 0.0
    %2799 = vmatprep.subr.mxu0 0.0
    %2800 = vmatpush1.msra.mxu0 0.0
    %2801 = vmatprep.subr.mxu0 0.0
    %2802 = vmatpush1.msra.mxu0 0.0
    %2803 = vmatprep.subr.mxu0 0.0
    %2804 = vmatpush1.msra.mxu0 0.0
    %2805 = vmatprep.subr.mxu0 0.0
    %2806 = vmatpush1.msra.mxu0 0.0
    %2807 = vmatprep.mubr.f32.mxu0 0.0
    %2808 = vmatmul.mubr.f32.gmra.mrb[0].mxu0 %v2671
    %v2809 = vpop.f32.mrb[0].mxu0
    %v2810 = vadd.f32 0.0, %v2809
    %v2811 = vpop.f32.mrb[0].mxu0
    %v2812 = vadd.f32 0.0, %v2811
    %2813 = vdwg.mxu0
    %v2814 = vadd.f32 %v2461, %v2739
    %v2815 = vadd.f32 %v2465, %v2741
    %v2816 = vadd.f32 %v2469, %v2810
    %v2817 = vadd.f32 %v2473, %v2812
    %v2818 = vxor.u32 %v2814, 2147483648
    %v2819 = vxor.u32 %v2815, 2147483648
    %v2820 = vxor.u32 %v2816, 2147483648
    %v2821 = vmul.f32 %v2818, 1.442695
    %v2822 = vpow.pop %v2821
    %v2823 = vmul.f32 %v2819, 1.442695
    %v2824 = vpow.pop %v2823
    %v2825 = vmul.f32 %v2820, 1.442695
    %v2826 = vpow.pop %v2825
    %v2827 = vadd.f32 %v2822, 1.0
    %v2828 = vadd.f32 %v2824, 1.0
    %v2829 = vadd.f32 %v2826, 1.0
    %v2830 = vrcp.pop %v2827
    %v2831 = vmul.f32 1.0, %v2830
    %v2832 = vrcp.pop %v2828
    %v2833 = vmul.f32 1.0, %v2832
    %v2834 = vrcp.pop %v2829
    %v2835 = vmul.f32 1.0, %v2834
    %v2836 = vtanh.pop %v2817
    %v2837 = vmul.f32 %v2833, %v2669
    %v2838 = vmul.f32 %v2831, %v2836
    %v2839 = vadd.f32 %v2837, %v2838
    %v2840 = vtanh.pop %v2839
    %v2841 = vmul.f32 %v2835, %v2840
    %2842 = vmatprep.subr.mxu0 %v2253
    %2843 = vmatpush1.msra.mxu0 %v2252
    %2844 = vmatprep.subr.mxu0 %v2257
    %2845 = vmatpush1.msra.mxu0 %v2256
    %2846 = vmatprep.subr.mxu0 %v2261
    %2847 = vmatpush1.msra.mxu0 %v2260
    %2848 = vmatprep.subr.mxu0 %v2265
    %2849 = vmatpush1.msra.mxu0 %v2264
    %2850 = vmatprep.subr.mxu0 %v2269
    %2851 = vmatpush1.msra.mxu0 %v2268
    %2852 = vmatprep.subr.mxu0 %v2273
    %2853 = vmatpush1.msra.mxu0 %v2272
    %2854 = vmatprep.subr.mxu0 %v2277
    %2855 = vmatpush1.msra.mxu0 %v2276
    %2856 = vmatprep.subr.mxu0 %v2281
    %2857 = vmatpush1.msra.mxu0 %v2280
    %2858 = vmatprep.subr.mxu0 %v2285
    %2859 = vmatpush1.msra.mxu0 %v2284
    %2860 = vmatprep.subr.mxu0 %v2289
    %2861 = vmatpush1.msra.mxu0 %v2288
    %2862 = vmatprep.subr.mxu0 %v2293
    %2863 = vmatpush1.msra.mxu0 %v2292
    %2864 = vmatprep.subr.mxu0 %v2297
    %2865 = vmatpush1.msra.mxu0 %v2296
    %2866 = vmatprep.subr.mxu0 %v2301
    %2867 = vmatpush1.msra.mxu0 %v2300
    %2868 = vmatprep.subr.mxu0 %v2305
    %2869 = vmatpush1.msra.mxu0 %v2304
    %2870 = vmatprep.subr.mxu0 %v2309
    %2871 = vmatpush1.msra.mxu0 %v2308
    %2872 = vmatprep.subr.mxu0 %v2313
    %2873 = vmatpush1.msra.mxu0 %v2312
    %2874 = vmatprep.subr.mxu0 0.0
    %2875 = vmatpush1.msra.mxu0 0.0
    %2876 = vmatprep.subr.mxu0 0.0
    %2877 = vmatpush1.msra.mxu0 0.0
    %2878 = vmatprep.subr.mxu0 0.0
    %2879 = vmatpush1.msra.mxu0 0.0
    %2880 = vmatprep.subr.mxu0 0.0
    %2881 = vmatpush1.msra.mxu0 0.0
    %2882 = vmatprep.subr.mxu0 0.0
    %2883 = vmatpush1.msra.mxu0 0.0
    %2884 = vmatprep.subr.mxu0 0.0
    %2885 = vmatpush1.msra.mxu0 0.0
    %2886 = vmatprep.subr.mxu0 0.0
    %2887 = vmatpush1.msra.mxu0 0.0
    %2888 = vmatprep.subr.mxu0 0.0
    %2889 = vmatpush1.msra.mxu0 0.0
    %2890 = vmatprep.subr.mxu0 0.0
    %2891 = vmatpush1.msra.mxu0 0.0
    %2892 = vmatprep.subr.mxu0 0.0
    %2893 = vmatpush1.msra.mxu0 0.0
    %2894 = vmatprep.subr.mxu0 0.0
    %2895 = vmatpush1.msra.mxu0 0.0
    %2896 = vmatprep.subr.mxu0 0.0
    %2897 = vmatpush1.msra.mxu0 0.0
    %2898 = vmatprep.subr.mxu0 0.0
    %2899 = vmatpush1.msra.mxu0 0.0
    %2900 = vmatprep.subr.mxu0 0.0
    %2901 = vmatpush1.msra.mxu0 0.0
    %2902 = vmatprep.subr.mxu0 0.0
    %2903 = vmatpush1.msra.mxu0 0.0
    %2904 = vmatprep.subr.mxu0 0.0
    %2905 = vmatpush1.msra.mxu0 0.0
    %2906 = vmatprep.mubr.f32.mxu0 0.0
    %2907 = vmatmul.mubr.f32.gmra.mrb[0].mxu0 %v2841
    %v2908 = vpop.f32.mrb[0].mxu0
    %v2909 = vadd.f32 0.0, %v2908
    %v2910 = vpop.f32.mrb[0].mxu0
    %v2911 = vadd.f32 0.0, %v2910
    %2912 = vdwg.mxu0
    %2913 = vmatprep.subr.mxu0 %v2255
    %2914 = vmatpush1.msra.mxu0 %v2254
    %2915 = vmatprep.subr.mxu0 %v2259
    %2916 = vmatpush1.msra.mxu0 %v2258
    %2917 = vmatprep.subr.mxu0 %v2263
    %2918 = vmatpush1.msra.mxu0 %v2262
    %2919 = vmatprep.subr.mxu0 %v2267
    %2920 = vmatpush1.msra.mxu0 %v2266
    %2921 = vmatprep.subr.mxu0 %v2271
    %2922 = vmatpush1.msra.mxu0 %v2270
    %2923 = vmatprep.subr.mxu0 %v2275
    %2924 = vmatpush1.msra.mxu0 %v2274
    %2925 = vmatprep.subr.mxu0 %v2279
    %2926 = vmatpush1.msra.mxu0 %v2278
    %2927 = vmatprep.subr.mxu0 %v2283
    %2928 = vmatpush1.msra.mxu0 %v2282
    %2929 = vmatprep.subr.mxu0 %v2287
    %2930 = vmatpush1.msra.mxu0 %v2286
    %2931 = vmatprep.subr.mxu0 %v2291
    %2932 = vmatpush1.msra.mxu0 %v2290
    %2933 = vmatprep.subr.mxu0 %v2295
    %2934 = vmatpush1.msra.mxu0 %v2294
    %2935 = vmatprep.subr.mxu0 %v2299
    %2936 = vmatpush1.msra.mxu0 %v2298
    %2937 = vmatprep.subr.mxu0 %v2303
    %2938 = vmatpush1.msra.mxu0 %v2302
    %2939 = vmatprep.subr.mxu0 %v2307
    %2940 = vmatpush1.msra.mxu0 %v2306
    %2941 = vmatprep.subr.mxu0 %v2311
    %2942 = vmatpush1.msra.mxu0 %v2310
    %2943 = vmatprep.subr.mxu0 %v2315
    %2944 = vmatpush1.msra.mxu0 %v2314
    %2945 = vmatprep.subr.mxu0 0.0
    %2946 = vmatpush1.msra.mxu0 0.0
    %2947 = vmatprep.subr.mxu0 0.0
    %2948 = vmatpush1.msra.mxu0 0.0
    %2949 = vmatprep.subr.mxu0 0.0
    %2950 = vmatpush1.msra.mxu0 0.0
    %2951 = vmatprep.subr.mxu0 0.0
    %2952 = vmatpush1.msra.mxu0 0.0
    %2953 = vmatprep.subr.mxu0 0.0
    %2954 = vmatpush1.msra.mxu0 0.0
    %2955 = vmatprep.subr.mxu0 0.0
    %2956 = vmatpush1.msra.mxu0 0.0
    %2957 = vmatprep.subr.mxu0 0.0
    %2958 = vmatpush1.msra.mxu0 0.0
    %2959 = vmatprep.subr.mxu0 0.0
    %2960 = vmatpush1.msra.mxu0 0.0
    %2961 = vmatprep.subr.mxu0 0.0
    %2962 = vmatpush1.msra.mxu0 0.0
    %2963 = vmatprep.subr.mxu0 0.0
    %2964 = vmatpush1.msra.mxu0 0.0
    %2965 = vmatprep.subr.mxu0 0.0
    %2966 = vmatpush1.msra.mxu0 0.0
    %2967 = vmatprep.subr.mxu0 0.0
    %2968 = vmatpush1.msra.mxu0 0.0
    %2969 = vmatprep.subr.mxu0 0.0
    %2970 = vmatpush1.msra.mxu0 0.0
    %2971 = vmatprep.subr.mxu0 0.0
    %2972 = vmatpush1.msra.mxu0 0.0
    %2973 = vmatprep.subr.mxu0 0.0
    %2974 = vmatpush1.msra.mxu0 0.0
    %2975 = vmatprep.subr.mxu0 0.0
    %2976 = vmatpush1.msra.mxu0 0.0
    %2977 = vmatprep.mubr.f32.mxu0 0.0
    %2978 = vmatmul.mubr.f32.gmra.mrb[0].mxu0 %v2841
    %v2979 = vpop.f32.mrb[0].mxu0
    %v2980 = vadd.f32 0.0, %v2979
    %v2981 = vpop.f32.mrb[0].mxu0
    %v2982 = vadd.f32 0.0, %v2981
    %2983 = vdwg.mxu0
    %v2984 = vadd.f32 %v2461, %v2909
    %v2985 = vadd.f32 %v2465, %v2911
    %v2986 = vadd.f32 %v2469, %v2980
    %v2987 = vadd.f32 %v2473, %v2982
    %v2988 = vxor.u32 %v2984, 2147483648
    %v2989 = vxor.u32 %v2985, 2147483648
    %v2990 = vxor.u32 %v2986, 2147483648
    %v2991 = vmul.f32 %v2988, 1.442695
    %v2992 = vpow.pop %v2991
    %v2993 = vmul.f32 %v2989, 1.442695
    %v2994 = vpow.pop %v2993
    %v2995 = vmul.f32 %v2990, 1.442695
    %v2996 = vpow.pop %v2995
    %v2997 = vadd.f32 %v2992, 1.0
    %v2998 = vadd.f32 %v2994, 1.0
    %v2999 = vadd.f32 %v2996, 1.0
    %v3000 = vrcp.pop %v2997
    %v3001 = vmul.f32 1.0, %v3000
    %v3002 = vrcp.pop %v2998
    %v3003 = vmul.f32 1.0, %v3002
    %v3004 = vrcp.pop %v2999
    %v3005 = vmul.f32 1.0, %v3004
    %v3006 = vtanh.pop %v2987
    %v3007 = vmul.f32 %v3003, %v2839
    %v3008 = vmul.f32 %v3001, %v3006
    %v3009 = vadd.f32 %v3007, %v3008
    %v3010 = vtanh.pop %v3009
    %v3011 = vmul.f32 %v3005, %v3010
    %3012 = vmatprep.subr.mxu0 %v2253
    %3013 = vmatpush1.msra.mxu0 %v2252
    %3014 = vmatprep.subr.mxu0 %v2257
    %3015 = vmatpush1.msra.mxu0 %v2256
    %3016 = vmatprep.subr.mxu0 %v2261
    %3017 = vmatpush1.msra.mxu0 %v2260
    %3018 = vmatprep.subr.mxu0 %v2265
    %3019 = vmatpush1.msra.mxu0 %v2264
    %3020 = vmatprep.subr.mxu0 %v2269
    %3021 = vmatpush1.msra.mxu0 %v2268
    %3022 = vmatprep.subr.mxu0 %v2273
    %3023 = vmatpush1.msra.mxu0 %v2272
    %3024 = vmatprep.subr.mxu0 %v2277
    %3025 = vmatpush1.msra.mxu0 %v2276
    %3026 = vmatprep.subr.mxu0 %v2281
    %3027 = vmatpush1.msra.mxu0 %v2280
    %3028 = vmatprep.subr.mxu0 %v2285
    %3029 = vmatpush1.msra.mxu0 %v2284
    %3030 = vmatprep.subr.mxu0 %v2289
    %3031 = vmatpush1.msra.mxu0 %v2288
    %3032 = vmatprep.subr.mxu0 %v2293
    %3033 = vmatpush1.msra.mxu0 %v2292
    %3034 = vmatprep.subr.mxu0 %v2297
    %3035 = vmatpush1.msra.mxu0 %v2296
    %3036 = vmatprep.subr.mxu0 %v2301
    %3037 = vmatpush1.msra.mxu0 %v2300
    %3038 = vmatprep.subr.mxu0 %v2305
    %3039 = vmatpush1.msra.mxu0 %v2304
    %3040 = vmatprep.subr.mxu0 %v2309
    %3041 = vmatpush1.msra.mxu0 %v2308
    %3042 = vmatprep.subr.mxu0 %v2313
    %3043 = vmatpush1.msra.mxu0 %v2312
    %3044 = vmatprep.subr.mxu0 0.0
    %3045 = vmatpush1.msra.mxu0 0.0
    %3046 = vmatprep.subr.mxu0 0.0
    %3047 = vmatpush1.msra.mxu0 0.0
    %3048 = vmatprep.subr.mxu0 0.0
    %3049 = vmatpush1.msra.mxu0 0.0
    %3050 = vmatprep.subr.mxu0 0.0
    %3051 = vmatpush1.msra.mxu0 0.0
    %3052 = vmatprep.subr.mxu0 0.0
    %3053 = vmatpush1.msra.mxu0 0.0
    %3054 = vmatprep.subr.mxu0 0.0
    %3055 = vmatpush1.msra.mxu0 0.0
    %3056 = vmatprep.subr.mxu0 0.0
    %3057 = vmatpush1.msra.mxu0 0.0
    %3058 = vmatprep.subr.mxu0 0.0
    %3059 = vmatpush1.msra.mxu0 0.0
    %3060 = vmatprep.subr.mxu0 0.0
    %3061 = vmatpush1.msra.mxu0 0.0
    %3062 = vmatprep.subr.mxu0 0.0
    %3063 = vmatpush1.msra.mxu0 0.0
    %3064 = vmatprep.subr.mxu0 0.0
    %3065 = vmatpush1.msra.mxu0 0.0
    %3066 = vmatprep.subr.mxu0 0.0
    %3067 = vmatpush1.msra.mxu0 0.0
    %3068 = vmatprep.subr.mxu0 0.0
    %3069 = vmatpush1.msra.mxu0 0.0
    %3070 = vmatprep.subr.mxu0 0.0
    %3071 = vmatpush1.msra.mxu0 0.0
    %3072 = vmatprep.subr.mxu0 0.0
    %3073 = vmatpush1.msra.mxu0 0.0
    %3074 = vmatprep.subr.mxu0 0.0
    %3075 = vmatpush1.msra.mxu0 0.0
    %3076 = vmatprep.mubr.f32.mxu0 0.0
    %3077 = vmatmul.mubr.f32.gmra.mrb[0].mxu0 %v3011
    %v3078 = vpop.f32.mrb[0].mxu0
    %v3079 = vadd.f32 0.0, %v3078
    %v3080 = vpop.f32.mrb[0].mxu0
    %v3081 = vadd.f32 0.0, %v3080
    %3082 = vdwg.mxu0
    %3083 = vmatprep.subr.mxu0 %v2255
    %3084 = vmatpush1.msra.mxu0 %v2254
    %3085 = vmatprep.subr.mxu0 %v2259
    %3086 = vmatpush1.msra.mxu0 %v2258
    %3087 = vmatprep.subr.mxu0 %v2263
    %3088 = vmatpush1.msra.mxu0 %v2262
    %3089 = vmatprep.subr.mxu0 %v2267
    %3090 = vmatpush1.msra.mxu0 %v2266
    %3091 = vmatprep.subr.mxu0 %v2271
    %3092 = vmatpush1.msra.mxu0 %v2270
    %3093 = vmatprep.subr.mxu0 %v2275
    %3094 = vmatpush1.msra.mxu0 %v2274
    %3095 = vmatprep.subr.mxu0 %v2279
    %3096 = vmatpush1.msra.mxu0 %v2278
    %3097 = vmatprep.subr.mxu0 %v2283
    %3098 = vmatpush1.msra.mxu0 %v2282
    %3099 = vmatprep.subr.mxu0 %v2287
    %3100 = vmatpush1.msra.mxu0 %v2286
    %3101 = vmatprep.subr.mxu0 %v2291
    %3102 = vmatpush1.msra.mxu0 %v2290
    %3103 = vmatprep.subr.mxu0 %v2295
    %3104 = vmatpush1.msra.mxu0 %v2294
    %3105 = vmatprep.subr.mxu0 %v2299
    %3106 = vmatpush1.msra.mxu0 %v2298
    %3107 = vmatprep.subr.mxu0 %v2303
    %3108 = vmatpush1.msra.mxu0 %v2302
    %3109 = vmatprep.subr.mxu0 %v2307
    %3110 = vmatpush1.msra.mxu0 %v2306
    %3111 = vmatprep.subr.mxu0 %v2311
    %3112 = vmatpush1.msra.mxu0 %v2310
    %3113 = vmatprep.subr.mxu0 %v2315
    %3114 = vmatpush1.msra.mxu0 %v2314
    %3115 = vmatprep.subr.mxu0 0.0
    %3116 = vmatpush1.msra.mxu0 0.0
    %3117 = vmatprep.subr.mxu0 0.0
    %3118 = vmatpush1.msra.mxu0 0.0
    %3119 = vmatprep.subr.mxu0 0.0
    %3120 = vmatpush1.msra.mxu0 0.0
    %3121 = vmatprep.subr.mxu0 0.0
    %3122 = vmatpush1.msra.mxu0 0.0
    %3123 = vmatprep.subr.mxu0 0.0
    %3124 = vmatpush1.msra.mxu0 0.0
    %3125 = vmatprep.subr.mxu0 0.0
    %3126 = vmatpush1.msra.mxu0 0.0
    %3127 = vmatprep.subr.mxu0 0.0
    %3128 = vmatpush1.msra.mxu0 0.0
    %3129 = vmatprep.subr.mxu0 0.0
    %3130 = vmatpush1.msra.mxu0 0.0
    %3131 = vmatprep.subr.mxu0 0.0
    %3132 = vmatpush1.msra.mxu0 0.0
    %3133 = vmatprep.subr.mxu0 0.0
    %3134 = vmatpush1.msra.mxu0 0.0
    %3135 = vmatprep.subr.mxu0 0.0
    %3136 = vmatpush1.msra.mxu0 0.0
    %3137 = vmatprep.subr.mxu0 0.0
    %3138 = vmatpush1.msra.mxu0 0.0
    %3139 = vmatprep.subr.mxu0 0.0
    %3140 = vmatpush1.msra.mxu0 0.0
    %3141 = vmatprep.subr.mxu0 0.0
    %3142 = vmatpush1.msra.mxu0 0.0
    %3143 = vmatprep.subr.mxu0 0.0
    %3144 = vmatpush1.msra.mxu0 0.0
    %3145 = vmatprep.subr.mxu0 0.0
    %3146 = vmatpush1.msra.mxu0 0.0
    %3147 = vmatprep.mubr.f32.mxu0 0.0
    %3148 = vmatmul.mubr.f32.gmra.mrb[0].mxu0 %v3011
    %v3149 = vpop.f32.mrb[0].mxu0
    %v3150 = vadd.f32 0.0, %v3149
    %v3151 = vpop.f32.mrb[0].mxu0
    %v3152 = vadd.f32 0.0, %v3151
    %3153 = vdwg.mxu0
    %v3154 = vadd.f32 %v2461, %v3079
    %v3155 = vadd.f32 %v2465, %v3081
    %v3156 = vadd.f32 %v2469, %v3150
    %v3157 = vadd.f32 %v2473, %v3152
    %v3158 = vxor.u32 %v3154, 2147483648
    %v3159 = vxor.u32 %v3155, 2147483648
    %v3160 = vxor.u32 %v3156, 2147483648
    %v3161 = vmul.f32 %v3158, 1.442695
    %v3162 = vpow.pop %v3161
    %v3163 = vmul.f32 %v3159, 1.442695
    %v3164 = vpow.pop %v3163
    %v3165 = vmul.f32 %v3160, 1.442695
    %v3166 = vpow.pop %v3165
    %v3167 = vadd.f32 %v3162, 1.0
    %v3168 = vadd.f32 %v3164, 1.0
    %v3169 = vadd.f32 %v3166, 1.0
    %v3170 = vrcp.pop %v3167
    %v3171 = vmul.f32 1.0, %v3170
    %v3172 = vrcp.pop %v3168
    %v3173 = vmul.f32 1.0, %v3172
    %v3174 = vrcp.pop %v3169
    %v3175 = vmul.f32 1.0, %v3174
    %v3176 = vtanh.pop %v3157
    %v3177 = vmul.f32 %v3173, %v3009
    %v3178 = vmul.f32 %v3171, %v3176
    %v3179 = vadd.f32 %v3177, %v3178
    %v3180 = vtanh.pop %v3179
    %v3181 = vmul.f32 %v3175, %v3180
    %v3184 = vunpack.c.l.s4 1966171168
    %v3185 = vunpack.c.0.s8 %v3184
    %v3186 = vlaneseq
    %v3187 = vshrl.u32 %v3186, 7
    %v3188 = vsub.s32 %v3185, %v3187
    %v3189 = vrot.slane %v2250, %v3188
    %v3190 = vcombine.high %v3189, %v3189
    %v3192 = vunpack.c.l.s4 1966171168
    %v3193 = vunpack.c.0.s8 %v3192
    %v3194 = vlaneseq
    %v3195 = vshrl.u32 %v3194, 7
    %v3196 = vsub.s32 %v3193, %v3195
    %v3197 = vrot.slane %v3189, %v3196
    %v3199 = vunpack.c.l.s4 1966171168
    %v3200 = vunpack.c.0.s8 %v3199
    %v3201 = vlaneseq
    %v3202 = vshrl.u32 %v3201, 7
    %v3203 = vsub.s32 %v3200, %v3202
    %v3204 = vrot.slane %v3190, %v3203
    %v3209 = vunpack.c.l.s4 1966171168
    %v3210 = vunpack.c.0.s8 %v3209
    %v3211 = vlaneseq
    %v3212 = vshrl.u32 %v3211, 7
    %v3213 = vsub.s32 %v3210, %v3212
    %v3214 = vrot.slane %v2501, %v3213
    %v3215 = vcombine.high %v3214, %v3214
    %v3217 = vunpack.c.l.s4 1966171168
    %v3218 = vunpack.c.0.s8 %v3217
    %v3219 = vlaneseq
    %v3220 = vshrl.u32 %v3219, 7
    %v3221 = vsub.s32 %v3218, %v3220
    %v3222 = vrot.slane %v3214, %v3221
    %v3224 = vunpack.c.l.s4 1966171168
    %v3225 = vunpack.c.0.s8 %v3224
    %v3226 = vlaneseq
    %v3227 = vshrl.u32 %v3226, 7
    %v3228 = vsub.s32 %v3225, %v3227
    %v3229 = vrot.slane %v3215, %v3228
    %v3232 = vunpack.c.l.s4 1966171168
    %v3233 = vunpack.c.0.s8 %v3232
    %v3234 = vlaneseq
    %v3235 = vshrl.u32 %v3234, 7
    %v3236 = vsub.s32 %v3233, %v3235
    %v3237 = vrot.slane %v2671, %v3236
    %v3238 = vcombine.high %v3237, %v3237
    %v3240 = vunpack.c.l.s4 1966171168
    %v3241 = vunpack.c.0.s8 %v3240
    %v3242 = vlaneseq
    %v3243 = vshrl.u32 %v3242, 7
    %v3244 = vsub.s32 %v3241, %v3243
    %v3245 = vrot.slane %v3237, %v3244
    %v3247 = vunpack.c.l.s4 1966171168
    %v3248 = vunpack.c.0.s8 %v3247
    %v3249 = vlaneseq
    %v3250 = vshrl.u32 %v3249, 7
    %v3251 = vsub.s32 %v3248, %v3250
    %v3252 = vrot.slane %v3238, %v3251
    %v3255 = vunpack.c.l.s4 1966171168
    %v3256 = vunpack.c.0.s8 %v3255
    %v3257 = vlaneseq
    %v3258 = vshrl.u32 %v3257, 7
    %v3259 = vsub.s32 %v3256, %v3258
    %v3260 = vrot.slane %v2841, %v3259
    %v3261 = vcombine.high %v3260, %v3260
    %v3263 = vunpack.c.l.s4 1966171168
    %v3264 = vunpack.c.0.s8 %v3263
    %v3265 = vlaneseq
    %v3266 = vshrl.u32 %v3265, 7
    %v3267 = vsub.s32 %v3264, %v3266
    %v3268 = vrot.slane %v3260, %v3267
    %v3270 = vunpack.c.l.s4 1966171168
    %v3271 = vunpack.c.0.s8 %v3270
    %v3272 = vlaneseq
    %v3273 = vshrl.u32 %v3272, 7
    %v3274 = vsub.s32 %v3271, %v3273
    %v3275 = vrot.slane %v3261, %v3274
    %v3278 = vunpack.c.l.s4 1966171168
    %v3279 = vunpack.c.0.s8 %v3278
    %v3280 = vlaneseq
    %v3281 = vshrl.u32 %v3280, 7
    %v3282 = vsub.s32 %v3279, %v3281
    %v3283 = vrot.slane %v3011, %v3282
    %v3284 = vcombine.high %v3283, %v3283
    %v3286 = vunpack.c.l.s4 1966171168
    %v3287 = vunpack.c.0.s8 %v3286
    %v3288 = vlaneseq
    %v3289 = vshrl.u32 %v3288, 7
    %v3290 = vsub.s32 %v3287, %v3289
    %v3291 = vrot.slane %v3283, %v3290
    %v3293 = vunpack.c.l.s4 1966171168
    %v3294 = vunpack.c.0.s8 %v3293
    %v3295 = vlaneseq
    %v3296 = vshrl.u32 %v3295, 7
    %v3297 = vsub.s32 %v3294, %v3296
    %v3298 = vrot.slane %v3284, %v3297
    %v3301 = vunpack.c.l.s4 1966171168
    %v3302 = vunpack.c.0.s8 %v3301
    %v3303 = vlaneseq
    %v3304 = vshrl.u32 %v3303, 7
    %v3305 = vsub.s32 %v3302, %v3304
    %v3306 = vrot.slane %v3181, %v3305
    %v3307 = vcombine.high %v3306, %v3306
    %v3309 = vunpack.c.l.s4 1966171168
    %v3310 = vunpack.c.0.s8 %v3309
    %v3311 = vlaneseq
    %v3312 = vshrl.u32 %v3311, 7
    %v3313 = vsub.s32 %v3310, %v3312
    %v3314 = vrot.slane %v3306, %v3313
    %v3316 = vunpack.c.l.s4 1966171168
    %v3317 = vunpack.c.0.s8 %v3316
    %v3318 = vlaneseq
    %v3319 = vshrl.u32 %v3318, 7
    %v3320 = vsub.s32 %v3317, %v3319
    %v3321 = vrot.slane %v3307, %v3320
    %v3322 = vlaneseq
    %v3323 = vshrl.u32 %v3322, 7
    %v3324 = vsub.s32 0, %v3323
    %v3325 = vrot.slane %v3222, %v3324
    %v3326 = vlaneseq
    %v3327 = vshrl.u32 %v3326, 7
    %v3328 = vsub.s32 0, %v3327
    %v3329 = vrot.slane %v3229, %v3328
    %v3332 = vlaneseq
    %v3333 = vshrl.u32 %v3332, 7
    %v3334 = vsub.s32 0, %v3333
    %v3335 = vrot.slane %v3245, %v3334
    %v3336 = vlaneseq
    %v3337 = vshrl.u32 %v3336, 7
    %v3338 = vsub.s32 0, %v3337
    %v3339 = vrot.slane %v3252, %v3338
    %v3342 = vlaneseq
    %v3343 = vshrl.u32 %v3342, 7
    %v3344 = vsub.s32 0, %v3343
    %v3345 = vrot.slane %v3268, %v3344
    %v3346 = vlaneseq
    %v3347 = vshrl.u32 %v3346, 7
    %v3348 = vsub.s32 0, %v3347
    %v3349 = vrot.slane %v3275, %v3348
    %v3352 = vlaneseq
    %v3353 = vshrl.u32 %v3352, 7
    %v3354 = vsub.s32 0, %v3353
    %v3355 = vrot.slane %v3291, %v3354
    %v3356 = vlaneseq
    %v3357 = vshrl.u32 %v3356, 7
    %v3358 = vsub.s32 0, %v3357
    %v3359 = vrot.slane %v3298, %v3358
    %v3362 = vlaneseq
    %v3363 = vshrl.u32 %v3362, 7
    %v3364 = vsub.s32 0, %v3363
    %v3365 = vrot.slane %v3314, %v3364
    %v3366 = vlaneseq
    %v3367 = vshrl.u32 %v3366, 7
    %v3368 = vsub.s32 0, %v3367
    %v3369 = vrot.slane %v3321, %v3368
    %vm3372 = vcmask 1040384
    %v3373 = vsel %vm3372, %v3197, %v3325
    %v3374 = vsel %vm3372, %v3204, %v3329
    %vm3375 = vcmask 1041408
    %v3376 = vsel %vm3375, %v3373, %v3335
    %v3377 = vsel %vm3375, %v3374, %v3339
    %vm3378 = vcmask 1042432
    %v3379 = vsel %vm3378, %v3376, %v3345
    %v3380 = vsel %vm3378, %v3377, %v3349
    %vm3381 = vcmask 1043456
    %v3382 = vsel %vm3381, %v3379, %v3355
    %v3383 = vsel %vm3381, %v3380, %v3359
    %vm3384 = vcmask 1044480
    %v3385 = vsel %vm3384, %v3382, %v3365
    %v3386 = vsel %vm3384, %v3383, %v3369
    %v3387 = vlaneseq
    %v3388 = vshrl.u32 %v3387, 7
    %v3389 = vsub.s32 4, %v3388
    %v3390 = vrot.slane %v41, %v3389
    %v3391 = vmul.f32 %v3385, %v3390
    %v3392 = vmul.f32 %v3386, %v3390
    %vm3393 = vcmask 1045504
    %v3394 = vsel %vm3393, %v3391, 0.0
    %3395 = vadd.xlane.f32.xlu0 %v3394
    %v3396 = vpop.xlane.xlu0 %3395
    %v3397 = vsel %vm3393, %v3392, 0.0
    %3398 = vadd.xlane.f32.xlu0 %v3397
    %v3399 = vpop.xlane.xlu0 %3398
    %v3401 = vrot.slane %v41, 5
    %s3402 = vtos %v3401
    %v3403 = vstv %s3402
    %v3405 = vadd.f32 %v3396, %v3403
    %v3406 = vadd.f32 %v3399, %v3403
    %v3409 = vlaneseq
    %v3410 = vand.u32 %v3409, 127
    %v3411 = vlaneseq
    %v3412 = vshrl.u32 %v3411, 7
    %v3413 = vsub.s32 %v3410, %v3412
    %v3414 = vrot.slane %v3405, %v3413
    %v3415 = vlaneseq
    %v3416 = vshrl.u32 %v3415, 7
    %v3417 = vsub.s32 %v3410, %v3416
    %v3418 = vrot.slane %v3406, %v3417
    %v3419 = vsel %vm386, %v3418, %v3414
    %vm3421 = vcmask 41984
    %3422 = vst.msk [vmem:[#allocation7] sm:$0x3] %vm3421, %v3419
    // Predicated region
    $region22: #{seq2seq_forward.1} parent=1 // pred_check
      _
    $region23: #{seq2seq_forward.1} parent=1 // pred_check_branch
      %3424 = sbr.rel (0) target = $region25
    $region24: #{seq2seq_forward.1} parent=1 // pred_region
      %s3426 = ssub.s32 32, 32
      %3427 = vsyncadd [#allocation4], %s3426
      %s3429 = sshll.u32 [#allocation7], 4
      %s3430 = int_to_ptr.vmem [resolvable:$true] %s3429
      %3432 = dma.vmem_to_hbm [thread:$0]  %s3430, 32, %s3, [#allocation4]
    $region25: #{seq2seq_forward.1} parent=1 // pred_fallthru
      _
    // Predicated region
    $region26: #{seq2seq_forward.1} parent=1 // pred_check
      _
    $region27: #{seq2seq_forward.1} parent=1 // pred_check_branch
      %3434 = sbr.rel (0) target = $region29
    $region28: #{seq2seq_forward.1} parent=1 // pred_region
      %3435 = dma.done [#allocation4], 32
    $region29: #{seq2seq_forward.1} parent=1 // pred_fallthru
      _
    %3436 = vsyncpa [#allocation3], 1
    %3437 = vsyncpa [#allocation6], 1
    %3438 = vsyncpa [#allocation4], 1

</llo_original>
